<compile_context>
chip_gen: v5e
topology: v5e:2x2
jax: 0.10.0
libtpu: 0.0.40
codegen_flags: <defaults>
</compile_context>

<pallas_src>
import functools

import numpy as np

import jax
import jax.numpy as jnp
from jax import lax
from jax.experimental import pallas as pl
from jax.experimental.pallas import tpu as pltpu


# Static layer geometry (MNIST 28x28 input, required by the 6*6*64 flatten).
K = 5                  # conv kernel size
WPAD = 32              # per-tap padded input width (28 + 1 left pad -> 30 -> 32)
K1 = K * WPAD          # 160: conv_1 GEMM contraction (kernel-row taps in lanes)
OH1, C1 = 13, 32       # conv_1 output: 13 x 13 x 32
OH2, C2 = 6, 64        # conv_2 output: 6 x 6 x 64
L1 = OH1 * C1          # 416 real conv_1 lanes per row (lane = w*32 + c)
L1P = 512              # conv_1 lanes padded to 4 x 128 (lane-dense)
L2 = OH2 * C2          # 384 conv_2 lanes per row (lane = w*64 + c), 3 x 128
FLAT = OH2 * OH2 * C2  # 2304
NH = 128               # linear_1 width
NOUT = 10              # logits
NOUT_PAD = 128         # lane-dense padded logits


# ---------------------------------------------------------------------------
# Fused forward kernel.  Row layout inside a batch tile of size tb:
#   conv_1 LHS / output rows: r*tb + b  with r=0..6 -> even output rows h=2r,
#                                            r=7..12 -> odd output rows h=2(r-7)+1
#   conv_2 / y2 rows:         oh*tb + b
# ---------------------------------------------------------------------------
def _fused_kernel(x_ref, m1_ref, b1_ref, m2_ref, b2_ref,
                  wl1_ref, bl1_ref, wl2_ref, bl2_ref,
                  out_ref, y1e_ref, y1o_ref, y2_ref, *, tb):
    f32, bf16 = jnp.float32, jnp.bfloat16
    ne, no = 7 * tb, 6 * tb            # rows in the even / odd conv_1 blocks

    # ---- conv_1 (1->32, k5, s2, p1): ONE GEMM; batch + kernel-row taps folded
    # into M and K.  Bias added in f32, cast to bf16 once on scratch write.
    y1 = jnp.dot(x_ref[...].astype(bf16), m1_ref[...],
                 preferred_element_type=f32) + b1_ref[...]
    y1 = y1.astype(bf16)
    y1e_ref[...] = y1[0:ne, :]                       # even rows h = 0,2,...,12
    zpad = jnp.zeros((tb, L1P), bf16)
    y1o_ref[0:tb, :] = zpad                          # conv_2 top H-padding rows
    y1o_ref[tb:ne, :] = y1[ne:, :]                   # odd rows h = 1,3,...,11
    y1o_ref[ne:ne + tb, :] = zpad                    # conv_2 bottom H-padding

    # ---- conv_2 (32->64, k5, s2, p1): 5 kernel-row taps, each one GEMM whose
    # LHS is a contiguous (6*tb, 512) bf16 scratch slice (batch folded in M).
    def m2b(i):
        return m2_ref[i * L1P:(i + 1) * L1P, :]

    acc = jnp.dot(y1o_ref[0:no, :], m2b(0), preferred_element_type=f32)
    acc = acc + jnp.dot(y1e_ref[0:no, :], m2b(1), preferred_element_type=f32)
    acc = acc + jnp.dot(y1o_ref[tb:tb + no, :], m2b(2),
                        preferred_element_type=f32)
    acc = acc + jnp.dot(y1e_ref[tb:tb + no, :], m2b(3),
                        preferred_element_type=f32)
    acc = acc + jnp.dot(y1o_ref[2 * tb:2 * tb + no, :], m2b(4),
                        preferred_element_type=f32)
    y2_ref[...] = (acc + b2_ref[...]).astype(bf16)   # (6*tb, 384)

    # ---- linear_1: the flatten is replaced by 6 accumulating GEMMs straight
    # off the y2 scratch (wl1 pre-packed in per-oh (384, 128) blocks).
    h1 = bl1_ref[...]
    for oh in range(OH2):
        h1 = h1 + jnp.dot(y2_ref[oh * tb:(oh + 1) * tb, :],
                          wl1_ref[oh * L2:(oh + 1) * L2, :],
                          preferred_element_type=f32)

    # ---- linear_2: lane-dense 128-wide store; wrapper slices [:, :10].
    out_ref[...] = jnp.dot(h1.astype(bf16), wl2_ref[...],
                           preferred_element_type=f32) + bl2_ref[...]


# Padded-input row indices gathered in the wrapper: 7 even output rows
# (h=2*he -> rows 4*he+i) followed by 6 odd rows (h=2*ho+1 -> rows 4*ho+2+i).
_ROW_IDX = np.array([4 * he + i for he in range(7) for i in range(K)]
                    + [4 * ho + 2 + i for ho in range(6) for i in range(K)],
                    dtype=np.int32)                      # (65,)


def mnist_classifier_forward(packed, x):
    """x: (B, 1, 28, 28) float32 NCHW -> logits (B, 10) float32."""
    B = x.shape[0]
    tb = 16 if B >= 16 else B + (B % 2)     # even batch tile (bf16 row pairs)
    Bp = ((B + tb - 1) // tb) * tb          # pad batch to a multiple of tb
    nt = Bp // tb

    # Input prep (pad -> one gather -> reshape/transpose): pad H/W by the conv
    # padding (W additionally to 32 lanes), gather the 13 output rows x 5 taps,
    # and order rows as (tile, row-block, batch-in-tile) so every kernel slice
    # is contiguous.  bf16 cast happens inside the kernel.
    xp = jnp.pad(x[:, 0], ((0, Bp - B), (1, 1), (1, 3)))     # (Bp, 30, 32)
    xg = jnp.take(xp, jnp.asarray(_ROW_IDX), axis=1)         # (Bp, 65, 32)
    xcat = (xg.reshape(nt, tb, 13, K1)
              .transpose(0, 2, 1, 3)
              .reshape(nt * 13 * tb, K1))                    # (nt*13*tb, 160)

    operands = (xcat, packed["m1"], packed["b1"], packed["m2"], packed["b2"],
                packed["wl1"], packed["bl1"], packed["wl2"], packed["bl2"])

    flops = 2 * Bp * (13 * K1 * L1P + K * OH2 * L1P * L2
                      + OH2 * L2 * NH + NH * NOUT_PAD)
    bytes_accessed = (sum(int(np.prod(a.shape)) * a.dtype.itemsize
                          for a in operands) + Bp * NOUT_PAD * 4)

    in_specs = ([pl.BlockSpec((13 * tb, K1), lambda t: (t, 0))]
                + [pl.BlockSpec(a.shape, lambda t: (0, 0))   # weights: constant
                   for a in operands[1:]])                   # -> DMA'd once

    out = pl.pallas_call(
        functools.partial(_fused_kernel, tb=tb),
        out_shape=jax.ShapeDtypeStruct((Bp, NOUT_PAD), jnp.float32),
        grid=(nt,),
        in_specs=in_specs,
        out_specs=pl.BlockSpec((tb, NOUT_PAD), lambda t: (t, 0)),
        scratch_shapes=[
            pltpu.VMEM((7 * tb, L1P), jnp.bfloat16),   # conv_1 even output rows
            pltpu.VMEM((8 * tb, L1P), jnp.bfloat16),   # conv_1 odd rows + H pad
            pltpu.VMEM((6 * tb, L2), jnp.bfloat16),    # conv_2 output rows
        ],
        compiler_params=pltpu.CompilerParams(
            dimension_semantics=("parallel",)),        # both TCs on v7x
        cost_estimate=pl.CostEstimate(flops=flops, transcendentals=0,
                                      bytes_accessed=bytes_accessed),
    )(*operands)
    return out[:B, :NOUT]


# ---------------------------------------------------------------------------
# Parameters (PyTorch layout) and one-time repack into the kernel layout.
# ---------------------------------------------------------------------------
def init_params(key):
    ks = jax.random.split(key, 8)
    scale = 0.05
    return {
        "conv1_w": scale * jax.random.normal(ks[0], (32, 1, 5, 5), jnp.float32),
        "conv1_b": scale * jax.random.normal(ks[1], (32,), jnp.float32),
        "conv2_w": scale * jax.random.normal(ks[2], (64, 32, 5, 5), jnp.float32),
        "conv2_b": scale * jax.random.normal(ks[3], (64,), jnp.float32),
        "lin1_w": scale * jax.random.normal(ks[4], (128, FLAT), jnp.float32),
        "lin1_b": scale * jax.random.normal(ks[5], (128,), jnp.float32),
        "lin2_w": scale * jax.random.normal(ks[6], (10, 128), jnp.float32),
        "lin2_b": scale * jax.random.normal(ks[7], (10,), jnp.float32),
    }


def pack_params(params):
    """One-time repack of PyTorch-layout weights into the kernel's layout."""
    w1 = np.asarray(params["conv1_w"], np.float32)     # (32, 1, 5, 5)
    b1 = np.asarray(params["conv1_b"], np.float32)
    w2 = np.asarray(params["conv2_w"], np.float32)     # (64, 32, 5, 5)
    b2 = np.asarray(params["conv2_b"], np.float32)
    wl1 = np.asarray(params["lin1_w"], np.float32)     # (128, 2304)
    bl1 = np.asarray(params["lin1_b"], np.float32)
    wl2 = np.asarray(params["lin2_w"], np.float32)     # (10, 128)
    bl2 = np.asarray(params["lin2_b"], np.float32)

    # conv_1 GEMM weight, kernel-row taps folded into K (tap stride 32 lanes):
    #   m1[i*32 + wp, ow*32 + co] = w1[co, 0, i, wp - 2*ow]
    m1 = np.zeros((K1, L1P), np.float32)
    for i in range(K):
        for ow in range(OH1):
            for j in range(K):
                m1[i * WPAD + 2 * ow + j, ow * C1:(ow + 1) * C1] = w1[:, 0, i, j]
    b1t = np.zeros((1, L1P), np.float32)
    b1t[0, :L1] = np.tile(b1, OH1)

    # conv_2 per-tap GEMM weight over lane-padded conv_1 rows (W pad folded in):
    #   m2[i*512 + w*32 + ci, ow*64 + co] = w2[co, ci, i, (w+1) - 2*ow]
    m2 = np.zeros((K * L1P, L2), np.float32)
    for i in range(K):
        for ow in range(OH2):
            for j in range(K):
                w = 2 * ow + j - 1
                if 0 <= w < OH1:
                    m2[i * L1P + w * C1:i * L1P + (w + 1) * C1,
                       ow * C2:(ow + 1) * C2] = w2[:, :, i, j].T
    b2t = np.tile(b2, OH2)[None, :]

    # linear_1: permute K from PyTorch's (c, oh, ow) flatten order to the
    # kernel's per-oh, (ow, c) lane order; pre-transpose to (K, N).
    wl1p = (wl1.reshape(NH, C2, OH2, OH2)
            .transpose(2, 3, 1, 0).reshape(OH2 * L2, NH))

    # linear_2: pre-transpose and zero-pad N from 10 to 128 (lane-dense store;
    # the wrapper's [:, :10] slice relies on cols 10..127 staying exactly zero).
    wl2p = np.zeros((NH, NOUT_PAD), np.float32)
    wl2p[:, :NOUT] = wl2.T
    bl2p = np.zeros((1, NOUT_PAD), np.float32)
    bl2p[0, :NOUT] = bl2

    return {
        "m1": jnp.asarray(m1, jnp.bfloat16),
        "b1": jnp.asarray(b1t, jnp.float32),
        "m2": jnp.asarray(m2, jnp.bfloat16),
        "b2": jnp.asarray(b2t, jnp.float32),
        "wl1": jnp.asarray(wl1p, jnp.bfloat16),
        "bl1": jnp.asarray(bl1[None, :], jnp.float32),
        "wl2": jnp.asarray(wl2p, jnp.bfloat16),
        "bl2": jnp.asarray(bl2p, jnp.float32),
    }


# ---------------------------------------------------------------------------
# Pure-JAX f32 reference mirroring the PyTorch module (for a sanity check).
# ---------------------------------------------------------------------------
def reference_forward(params, x):
    dn = ("NCHW", "OIHW", "NCHW")
    y = lax.conv_general_dilated(x, params["conv1_w"], (2, 2),
                                 ((1, 1), (1, 1)), dimension_numbers=dn)
    y = y + params["conv1_b"][None, :, None, None]
    y = lax.conv_general_dilated(y, params["conv2_w"], (2, 2),
                                 ((1, 1), (1, 1)), dimension_numbers=dn)
    y = y + params["conv2_b"][None, :, None, None]
    y = y.reshape(y.shape[0], -1)
    y = y @ params["lin1_w"].T + params["lin1_b"]
    y = y @ params["lin2_w"].T + params["lin2_b"]
    return y


if __name__ == "__main__":
    key = jax.random.PRNGKey(0)
    pkey, xkey = jax.random.split(key)
    params = init_params(pkey)
    packed = pack_params(params)                    # one-time weight repack

    fwd = jax.jit(mnist_classifier_forward)

    # Small test batch (MNIST spatial size 28 is required by the 6*6*64 flatten).
    x = jax.random.normal(xkey, (2, 1, 28, 28), jnp.float32)
    out = jax.block_until_ready(fwd(packed, x))
    assert out.shape == (2, NOUT), out.shape
    assert out.dtype == jnp.float32
    ref = jax.block_until_ready(reference_forward(params, x))
    err = float(jnp.max(jnp.abs(out - ref)))
    assert err < 5e-2, f"max abs err vs reference (B=2): {err}"

    # Larger batch exercises the 'parallel' batch-tile grid axis (2 tiles of 16;
    # weights stay VMEM-resident across tiles, both TensorCores used on v7x).
    xb = jax.random.normal(xkey, (20, 1, 28, 28), jnp.float32)
    outb = jax.block_until_ready(fwd(packed, xb))
    refb = jax.block_until_ready(reference_forward(params, xb))
    errb = float(jnp.max(jnp.abs(outb - refb)))
    assert outb.shape == (20, NOUT), outb.shape
    assert errb < 5e-2, f"max abs err vs reference (B=20): {errb}"

    print("KERNEL_OK")
</pallas_src>

<mosaic_0001>
module attributes {stable_mosaic.version = 11 : i64} {
  func.func @_fused_kernel(%arg0: i32, %arg1: memref<26x160xf32, #tpu.memory_space<vmem>>, %arg2: memref<160x512xbf16, #tpu.memory_space<vmem>>, %arg3: memref<1x512xf32, #tpu.memory_space<vmem>>, %arg4: memref<2560x384xbf16, #tpu.memory_space<vmem>>, %arg5: memref<1x384xf32, #tpu.memory_space<vmem>>, %arg6: memref<2304x128xbf16, #tpu.memory_space<vmem>>, %arg7: memref<1x128xf32, #tpu.memory_space<vmem>>, %arg8: memref<128x128xbf16, #tpu.memory_space<vmem>>, %arg9: memref<1x128xf32, #tpu.memory_space<vmem>>, %arg10: memref<2x128xf32, #tpu.memory_space<vmem>>, %arg11: memref<14x512xbf16, #tpu.memory_space<vmem>>, %arg12: memref<16x512xbf16, #tpu.memory_space<vmem>>, %arg13: memref<12x384xbf16, #tpu.memory_space<vmem>>) attributes {dimension_semantics = [#tpu.dimension_semantics<parallel>], iteration_bounds = array<i64: 1>, scalar_prefetch = 0 : i64, scratch_operands = 3 : i64, tpu.core_type = #tpu.core_type<tc>, window_params = [{transform_indices = @transform_0, window_bounds = array<i64: 26, 160>}, {pipeline_mode = #tpu.pipeline_mode<synchronous>, transform_indices = @transform_1, window_bounds = array<i64: 160, 512>}, {pipeline_mode = #tpu.pipeline_mode<synchronous>, transform_indices = @transform_2, window_bounds = array<i64: 1, 512>}, {pipeline_mode = #tpu.pipeline_mode<synchronous>, transform_indices = @transform_3, window_bounds = array<i64: 2560, 384>}, {pipeline_mode = #tpu.pipeline_mode<synchronous>, transform_indices = @transform_4, window_bounds = array<i64: 1, 384>}, {pipeline_mode = #tpu.pipeline_mode<synchronous>, transform_indices = @transform_5, window_bounds = array<i64: 2304, 128>}, {pipeline_mode = #tpu.pipeline_mode<synchronous>, transform_indices = @transform_6, window_bounds = array<i64: 1, 128>}, {pipeline_mode = #tpu.pipeline_mode<synchronous>, transform_indices = @transform_7, window_bounds = array<i64: 128, 128>}, {pipeline_mode = #tpu.pipeline_mode<synchronous>, transform_indices = @transform_8, window_bounds = array<i64: 1, 128>}, {transform_indices = @transform_9, window_bounds = array<i64: 2, 128>}]} {
    %c0 = arith.constant 0 : index
    %c0_0 = arith.constant 0 : index
    %0 = vector.load %arg1[%c0, %c0_0] : memref<26x160xf32, #tpu.memory_space<vmem>>, vector<26x160xf32>
    %1 = arith.truncf %0 : vector<26x160xf32> to vector<26x160xbf16>
    %c0_1 = arith.constant 0 : index
    %c0_2 = arith.constant 0 : index
    %2 = vector.load %arg2[%c0_1, %c0_2] : memref<160x512xbf16, #tpu.memory_space<vmem>>, vector<160x512xbf16>
    %cst = arith.constant dense<0.000000e+00> : vector<26x512xf32>
    %3 = tpu.matmul %1, %2, %cst {dimension_numbers = #tpu.dot_dimension_numbers<[1], [0], [0], [1], [0, 0, 1, 1], [], []>} : vector<26x160xbf16>, vector<160x512xbf16>, vector<26x512xf32> -> vector<26x512xf32>
    %c0_3 = arith.constant 0 : index
    %c0_4 = arith.constant 0 : index
    %4 = vector.load %arg3[%c0_3, %c0_4] : memref<1x512xf32, #tpu.memory_space<vmem>>, vector<1x512xf32>
    %5 = vector.broadcast %4 : vector<1x512xf32> to vector<26x512xf32>
    %6 = arith.addf %3, %5 : vector<26x512xf32>
    %7 = arith.truncf %6 : vector<26x512xf32> to vector<26x512xbf16>
    %8 = vector.extract_strided_slice %7 {offsets = [0, 0], sizes = [14, 512], strides = [1, 1]} : vector<26x512xbf16> to vector<14x512xbf16>
    %c0_5 = arith.constant 0 : index
    %c0_6 = arith.constant 0 : index
    %9 = vector.load %arg11[%c0_5, %c0_6] : memref<14x512xbf16, #tpu.memory_space<vmem>>, vector<14x512xbf16>
    tpu.vector_store %arg11[%c0_5, %c0_6], %8 {strides = array<i32>} : memref<14x512xbf16, #tpu.memory_space<vmem>>, vector<14x512xbf16>,
    %cst_7 = arith.constant 0.000000e+00 : bf16
    %10 = vector.broadcast %cst_7 : bf16 to vector<2x512xbf16>
    %c0_8 = arith.constant 0 : index
    %c0_9 = arith.constant 0 : index
    %11 = vector.load %arg12[%c0_8, %c0_9] : memref<16x512xbf16, #tpu.memory_space<vmem>>, vector<2x512xbf16>
    tpu.vector_store %arg12[%c0_8, %c0_9], %10 {strides = array<i32>} : memref<16x512xbf16, #tpu.memory_space<vmem>>, vector<2x512xbf16>,
    %12 = vector.extract_strided_slice %7 {offsets = [14, 0], sizes = [12, 512], strides = [1, 1]} : vector<26x512xbf16> to vector<12x512xbf16>
    %c2 = arith.constant 2 : index
    %c0_10 = arith.constant 0 : index
    %13 = vector.load %arg12[%c2, %c0_10] : memref<16x512xbf16, #tpu.memory_space<vmem>>, vector<12x512xbf16>
    tpu.vector_store %arg12[%c2, %c0_10], %12 {strides = array<i32>} : memref<16x512xbf16, #tpu.memory_space<vmem>>, vector<12x512xbf16>,
    %c14 = arith.constant 14 : index
    %c0_11 = arith.constant 0 : index
    %14 = vector.load %arg12[%c14, %c0_11] : memref<16x512xbf16, #tpu.memory_space<vmem>>, vector<2x512xbf16>
    tpu.vector_store %arg12[%c14, %c0_11], %10 {strides = array<i32>} : memref<16x512xbf16, #tpu.memory_space<vmem>>, vector<2x512xbf16>,
    %c0_12 = arith.constant 0 : index
    %c0_13 = arith.constant 0 : index
    %15 = vector.load %arg12[%c0_12, %c0_13] : memref<16x512xbf16, #tpu.memory_space<vmem>>, vector<12x512xbf16>
    %c0_14 = arith.constant 0 : index
    %c0_15 = arith.constant 0 : index
    %16 = vector.load %arg4[%c0_14, %c0_15] : memref<2560x384xbf16, #tpu.memory_space<vmem>>, vector<512x384xbf16>
    %cst_16 = arith.constant dense<0.000000e+00> : vector<12x384xf32>
    %17 = tpu.matmul %15, %16, %cst_16 {dimension_numbers = #tpu.dot_dimension_numbers<[1], [0], [0], [1], [0, 0, 1, 1], [], []>} : vector<12x512xbf16>, vector<512x384xbf16>, vector<12x384xf32> -> vector<12x384xf32>
    %c0_17 = arith.constant 0 : index
    %c0_18 = arith.constant 0 : index
    %18 = vector.load %arg11[%c0_17, %c0_18] : memref<14x512xbf16, #tpu.memory_space<vmem>>, vector<12x512xbf16>
    %c512 = arith.constant 512 : index
    %c0_19 = arith.constant 0 : index
    %19 = vector.load %arg4[%c512, %c0_19] : memref<2560x384xbf16, #tpu.memory_space<vmem>>, vector<512x384xbf16>
    %cst_20 = arith.constant dense<0.000000e+00> : vector<12x384xf32>
    %20 = tpu.matmul %18, %19, %cst_20 {dimension_numbers = #tpu.dot_dimension_numbers<[1], [0], [0], [1], [0, 0, 1, 1], [], []>} : vector<12x512xbf16>, vector<512x384xbf16>, vector<12x384xf32> -> vector<12x384xf32>
    %21 = arith.addf %17, %20 : vector<12x384xf32>
    %c2_21 = arith.constant 2 : index
    %c0_22 = arith.constant 0 : index
    %22 = vector.load %arg12[%c2_21, %c0_22] : memref<16x512xbf16, #tpu.memory_space<vmem>>, vector<12x512xbf16>
    %c1024 = arith.constant 1024 : index
    %c0_23 = arith.constant 0 : index
    %23 = vector.load %arg4[%c1024, %c0_23] : memref<2560x384xbf16, #tpu.memory_space<vmem>>, vector<512x384xbf16>
    %cst_24 = arith.constant dense<0.000000e+00> : vector<12x384xf32>
    %24 = tpu.matmul %22, %23, %cst_24 {dimension_numbers = #tpu.dot_dimension_numbers<[1], [0], [0], [1], [0, 0, 1, 1], [], []>} : vector<12x512xbf16>, vector<512x384xbf16>, vector<12x384xf32> -> vector<12x384xf32>
    %25 = arith.addf %21, %24 : vector<12x384xf32>
    %c2_25 = arith.constant 2 : index
    %c0_26 = arith.constant 0 : index
    %26 = vector.load %arg11[%c2_25, %c0_26] : memref<14x512xbf16, #tpu.memory_space<vmem>>, vector<12x512xbf16>
    %c1536 = arith.constant 1536 : index
    %c0_27 = arith.constant 0 : index
    %27 = vector.load %arg4[%c1536, %c0_27] : memref<2560x384xbf16, #tpu.memory_space<vmem>>, vector<512x384xbf16>
    %cst_28 = arith.constant dense<0.000000e+00> : vector<12x384xf32>
    %28 = tpu.matmul %26, %27, %cst_28 {dimension_numbers = #tpu.dot_dimension_numbers<[1], [0], [0], [1], [0, 0, 1, 1], [], []>} : vector<12x512xbf16>, vector<512x384xbf16>, vector<12x384xf32> -> vector<12x384xf32>
    %29 = arith.addf %25, %28 : vector<12x384xf32>
    %c4 = arith.constant 4 : index
    %c0_29 = arith.constant 0 : index
    %30 = vector.load %arg12[%c4, %c0_29] : memref<16x512xbf16, #tpu.memory_space<vmem>>, vector<12x512xbf16>
    %c2048 = arith.constant 2048 : index
    %c0_30 = arith.constant 0 : index
    %31 = vector.load %arg4[%c2048, %c0_30] : memref<2560x384xbf16, #tpu.memory_space<vmem>>, vector<512x384xbf16>
    %cst_31 = arith.constant dense<0.000000e+00> : vector<12x384xf32>
    %32 = tpu.matmul %30, %31, %cst_31 {dimension_numbers = #tpu.dot_dimension_numbers<[1], [0], [0], [1], [0, 0, 1, 1], [], []>} : vector<12x512xbf16>, vector<512x384xbf16>, vector<12x384xf32> -> vector<12x384xf32>
    %33 = arith.addf %29, %32 : vector<12x384xf32>
    %c0_32 = arith.constant 0 : index
    %c0_33 = arith.constant 0 : index
    %34 = vector.load %arg5[%c0_32, %c0_33] : memref<1x384xf32, #tpu.memory_space<vmem>>, vector<1x384xf32>
    %35 = vector.broadcast %34 : vector<1x384xf32> to vector<12x384xf32>
    %36 = arith.addf %33, %35 : vector<12x384xf32>
    %37 = arith.truncf %36 : vector<12x384xf32> to vector<12x384xbf16>
    %c0_34 = arith.constant 0 : index
    %c0_35 = arith.constant 0 : index
    %38 = vector.load %arg13[%c0_34, %c0_35] : memref<12x384xbf16, #tpu.memory_space<vmem>>, vector<12x384xbf16>
    tpu.vector_store %arg13[%c0_34, %c0_35], %37 {strides = array<i32>} : memref<12x384xbf16, #tpu.memory_space<vmem>>, vector<12x384xbf16>,
    %c0_36 = arith.constant 0 : index
    %c0_37 = arith.constant 0 : index
    %39 = vector.load %arg7[%c0_36, %c0_37] : memref<1x128xf32, #tpu.memory_space<vmem>>, vector<1x128xf32>
    %c0_38 = arith.constant 0 : index
    %c0_39 = arith.constant 0 : index
    %40 = vector.load %arg13[%c0_38, %c0_39] : memref<12x384xbf16, #tpu.memory_space<vmem>>, vector<2x384xbf16>
    %c0_40 = arith.constant 0 : index
    %c0_41 = arith.constant 0 : index
    %41 = vector.load %arg6[%c0_40, %c0_41] : memref<2304x128xbf16, #tpu.memory_space<vmem>>, vector<384x128xbf16>
    %cst_42 = arith.constant dense<0.000000e+00> : vector<2x128xf32>
    %42 = tpu.matmul %40, %41, %cst_42 {dimension_numbers = #tpu.dot_dimension_numbers<[1], [0], [0], [1], [0, 0, 1, 1], [], []>} : vector<2x384xbf16>, vector<384x128xbf16>, vector<2x128xf32> -> vector<2x128xf32>
    %43 = vector.broadcast %39 : vector<1x128xf32> to vector<2x128xf32>
    %44 = arith.addf %43, %42 : vector<2x128xf32>
    %c2_43 = arith.constant 2 : index
    %c0_44 = arith.constant 0 : index
    %45 = vector.load %arg13[%c2_43, %c0_44] : memref<12x384xbf16, #tpu.memory_space<vmem>>, vector<2x384xbf16>
    %c384 = arith.constant 384 : index
    %c0_45 = arith.constant 0 : index
    %46 = vector.load %arg6[%c384, %c0_45] : memref<2304x128xbf16, #tpu.memory_space<vmem>>, vector<384x128xbf16>
    %cst_46 = arith.constant dense<0.000000e+00> : vector<2x128xf32>
    %47 = tpu.matmul %45, %46, %cst_46 {dimension_numbers = #tpu.dot_dimension_numbers<[1], [0], [0], [1], [0, 0, 1, 1], [], []>} : vector<2x384xbf16>, vector<384x128xbf16>, vector<2x128xf32> -> vector<2x128xf32>
    %48 = arith.addf %44, %47 : vector<2x128xf32>
    %c4_47 = arith.constant 4 : index
    %c0_48 = arith.constant 0 : index
    %49 = vector.load %arg13[%c4_47, %c0_48] : memref<12x384xbf16, #tpu.memory_space<vmem>>, vector<2x384xbf16>
    %c768 = arith.constant 768 : index
    %c0_49 = arith.constant 0 : index
    %50 = vector.load %arg6[%c768, %c0_49] : memref<2304x128xbf16, #tpu.memory_space<vmem>>, vector<384x128xbf16>
    %cst_50 = arith.constant dense<0.000000e+00> : vector<2x128xf32>
    %51 = tpu.matmul %49, %50, %cst_50 {dimension_numbers = #tpu.dot_dimension_numbers<[1], [0], [0], [1], [0, 0, 1, 1], [], []>} : vector<2x384xbf16>, vector<384x128xbf16>, vector<2x128xf32> -> vector<2x128xf32>
    %52 = arith.addf %48, %51 : vector<2x128xf32>
    %c6 = arith.constant 6 : index
    %c0_51 = arith.constant 0 : index
    %53 = vector.load %arg13[%c6, %c0_51] : memref<12x384xbf16, #tpu.memory_space<vmem>>, vector<2x384xbf16>
    %c1152 = arith.constant 1152 : index
    %c0_52 = arith.constant 0 : index
    %54 = vector.load %arg6[%c1152, %c0_52] : memref<2304x128xbf16, #tpu.memory_space<vmem>>, vector<384x128xbf16>
    %cst_53 = arith.constant dense<0.000000e+00> : vector<2x128xf32>
    %55 = tpu.matmul %53, %54, %cst_53 {dimension_numbers = #tpu.dot_dimension_numbers<[1], [0], [0], [1], [0, 0, 1, 1], [], []>} : vector<2x384xbf16>, vector<384x128xbf16>, vector<2x128xf32> -> vector<2x128xf32>
    %56 = arith.addf %52, %55 : vector<2x128xf32>
    %c8 = arith.constant 8 : index
    %c0_54 = arith.constant 0 : index
    %57 = vector.load %arg13[%c8, %c0_54] : memref<12x384xbf16, #tpu.memory_space<vmem>>, vector<2x384xbf16>
    %c1536_55 = arith.constant 1536 : index
    %c0_56 = arith.constant 0 : index
    %58 = vector.load %arg6[%c1536_55, %c0_56] : memref<2304x128xbf16, #tpu.memory_space<vmem>>, vector<384x128xbf16>
    %cst_57 = arith.constant dense<0.000000e+00> : vector<2x128xf32>
    %59 = tpu.matmul %57, %58, %cst_57 {dimension_numbers = #tpu.dot_dimension_numbers<[1], [0], [0], [1], [0, 0, 1, 1], [], []>} : vector<2x384xbf16>, vector<384x128xbf16>, vector<2x128xf32> -> vector<2x128xf32>
    %60 = arith.addf %56, %59 : vector<2x128xf32>
    %c10 = arith.constant 10 : index
    %c0_58 = arith.constant 0 : index
    %61 = vector.load %arg13[%c10, %c0_58] : memref<12x384xbf16, #tpu.memory_space<vmem>>, vector<2x384xbf16>
    %c1920 = arith.constant 1920 : index
    %c0_59 = arith.constant 0 : index
    %62 = vector.load %arg6[%c1920, %c0_59] : memref<2304x128xbf16, #tpu.memory_space<vmem>>, vector<384x128xbf16>
    %cst_60 = arith.constant dense<0.000000e+00> : vector<2x128xf32>
    %63 = tpu.matmul %61, %62, %cst_60 {dimension_numbers = #tpu.dot_dimension_numbers<[1], [0], [0], [1], [0, 0, 1, 1], [], []>} : vector<2x384xbf16>, vector<384x128xbf16>, vector<2x128xf32> -> vector<2x128xf32>
    %64 = arith.addf %60, %63 : vector<2x128xf32>
    %65 = arith.truncf %64 : vector<2x128xf32> to vector<2x128xbf16>
    %c0_61 = arith.constant 0 : index
    %c0_62 = arith.constant 0 : index
    %66 = vector.load %arg8[%c0_61, %c0_62] : memref<128x128xbf16, #tpu.memory_space<vmem>>, vector<128x128xbf16>
    %cst_63 = arith.constant dense<0.000000e+00> : vector<2x128xf32>
    %67 = tpu.matmul %65, %66, %cst_63 {dimension_numbers = #tpu.dot_dimension_numbers<[1], [0], [0], [1], [0, 0, 1, 1], [], []>} : vector<2x128xbf16>, vector<128x128xbf16>, vector<2x128xf32> -> vector<2x128xf32>
    %c0_64 = arith.constant 0 : index
    %c0_65 = arith.constant 0 : index
    %68 = vector.load %arg9[%c0_64, %c0_65] : memref<1x128xf32, #tpu.memory_space<vmem>>, vector<1x128xf32>
    %69 = vector.broadcast %68 : vector<1x128xf32> to vector<2x128xf32>
    %70 = arith.addf %67, %69 : vector<2x128xf32>
    %c0_66 = arith.constant 0 : index
    %c0_67 = arith.constant 0 : index
    %71 = vector.load %arg10[%c0_66, %c0_67] : memref<2x128xf32, #tpu.memory_space<vmem>>, vector<2x128xf32>
    tpu.vector_store %arg10[%c0_66, %c0_67], %70 {strides = array<i32>} : memref<2x128xf32, #tpu.memory_space<vmem>>, vector<2x128xf32>,
    return
  }
  func.func @transform_0(%arg0: i32) -> (i32, i32) {
    %c0_i32 = arith.constant 0 : i32
    %c0_i32_0 = arith.constant 0 : i32
    return %arg0, %c0_i32 : i32, i32
  }
  func.func @transform_1(%arg0: i32) -> (i32, i32) {
    %c0_i32 = arith.constant 0 : i32
    %c0_i32_0 = arith.constant 0 : i32
    %c0_i32_1 = arith.constant 0 : i32
    return %c0_i32, %c0_i32_0 : i32, i32
  }
  func.func @transform_2(%arg0: i32) -> (i32, i32) {
    %c0_i32 = arith.constant 0 : i32
    %c0_i32_0 = arith.constant 0 : i32
    %c0_i32_1 = arith.constant 0 : i32
    return %c0_i32, %c0_i32_0 : i32, i32
  }
  func.func @transform_3(%arg0: i32) -> (i32, i32) {
    %c0_i32 = arith.constant 0 : i32
    %c0_i32_0 = arith.constant 0 : i32
    %c0_i32_1 = arith.constant 0 : i32
    return %c0_i32, %c0_i32_0 : i32, i32
  }
  func.func @transform_4(%arg0: i32) -> (i32, i32) {
    %c0_i32 = arith.constant 0 : i32
    %c0_i32_0 = arith.constant 0 : i32
    %c0_i32_1 = arith.constant 0 : i32
    return %c0_i32, %c0_i32_0 : i32, i32
  }
  func.func @transform_5(%arg0: i32) -> (i32, i32) {
    %c0_i32 = arith.constant 0 : i32
    %c0_i32_0 = arith.constant 0 : i32
    %c0_i32_1 = arith.constant 0 : i32
    return %c0_i32, %c0_i32_0 : i32, i32
  }
  func.func @transform_6(%arg0: i32) -> (i32, i32) {
    %c0_i32 = arith.constant 0 : i32
    %c0_i32_0 = arith.constant 0 : i32
    %c0_i32_1 = arith.constant 0 : i32
    return %c0_i32, %c0_i32_0 : i32, i32
  }
  func.func @transform_7(%arg0: i32) -> (i32, i32) {
    %c0_i32 = arith.constant 0 : i32
    %c0_i32_0 = arith.constant 0 : i32
    %c0_i32_1 = arith.constant 0 : i32
    return %c0_i32, %c0_i32_0 : i32, i32
  }
  func.func @transform_8(%arg0: i32) -> (i32, i32) {
    %c0_i32 = arith.constant 0 : i32
    %c0_i32_0 = arith.constant 0 : i32
    %c0_i32_1 = arith.constant 0 : i32
    return %c0_i32, %c0_i32_0 : i32, i32
  }
  func.func @transform_9(%arg0: i32) -> (i32, i32) {
    %c0_i32 = arith.constant 0 : i32
    %c0_i32_0 = arith.constant 0 : i32
    return %arg0, %c0_i32 : i32, i32
  }
}

</mosaic_0001>

<llo_original>
// kernel: mnist_classifier_forward.1
$region0: #{mnist_classifier_forward.1}
  #allocation0 [shape = 'u32[]', space=smem, size = 0x4, offset = 0x4, fixed_abs, tag = 'smem constant byte address 0x4 - core index']
  #allocation1 [shape = 'u32[72,128]{1,0:T(1,128)}', space=vmem, size = 0x9000, scoped, tag = 'internal scratch']
  #allocation2 [shape = 'bf16[14,512]{1,0:T(8,128)(2,1)}', space=vmem, size = 0x4000, scoped, tag = 'scratch operand']
  #allocation3 [shape = 'bf16[16,512]{1,0:T(8,128)(2,1)}', space=vmem, size = 0x4000, scoped, tag = 'scratch operand']
  #allocation4 [shape = 'bf16[12,384]{1,0:T(8,128)(2,1)}', space=vmem, size = 0x3000, scoped, tag = 'scratch operand']
  %s0 = inlined_call_operand.vmem [shape: f32[26,160], index: 0, kind: input, shape index: {}]
  %s1 = inlined_call_operand.hbm [shape: bf16[160,512], index: 1, kind: input, shape index: {}]
  %s2 = inlined_call_operand.hbm [shape: f32[1,512], index: 2, kind: input, shape index: {}]
  %s3 = inlined_call_operand.hbm [shape: bf16[2560,384], index: 3, kind: input, shape index: {}]
  %s4 = inlined_call_operand.hbm [shape: f32[1,384], index: 4, kind: input, shape index: {}]
  %s5 = inlined_call_operand.hbm [shape: bf16[2304,128], index: 5, kind: input, shape index: {}]
  %s6 = inlined_call_operand.hbm [shape: f32[1,128], index: 6, kind: input, shape index: {}]
  %s7 = inlined_call_operand.hbm [shape: bf16[128,128], index: 7, kind: input, shape index: {}]
  %s8 = inlined_call_operand.hbm [shape: f32[1,128], index: 8, kind: input, shape index: {}]
  %s9 = inlined_call_operand.hbm [shape: f32[2,128], index: 9, kind: output, shape index: {}]
  %s10 = sld [smem:[#allocation0]]
  $region78: #{mnist_classifier_forward.1} parent=0
    _
  %s12 = ssub.s32 1, %s10
  %s13 = scalar_select 0, %s12, %s10
  $region1: #{mnist_classifier_forward.1} parent=0
    #allocation5 [shape = 'u8[163840]{0}', space=vmem, size = 0x28000, scoped, tag = 'input window, operand 1, single buffered']
    #allocation6 [shape = 's32[1]{0}', space=sflag, size = 0x4, scoped, tag = 'scoped memory for mnist_classifier_forward.1']
    #allocation7 [shape = 's32[1]{0}', space=sflag, size = 0x4, scoped, tag = 'scoped memory for mnist_classifier_forward.1']
    #allocation8 [shape = 'u8[2048]{0}', space=vmem, size = 0x800, scoped, tag = 'input window, operand 2, single buffered']
    #allocation9 [shape = 's32[1]{0}', space=sflag, size = 0x4, scoped, tag = 'scoped memory for mnist_classifier_forward.1']
    #allocation10 [shape = 'u8[1966080]{0}', space=vmem, size = 0x1e0000, scoped, tag = 'input window, operand 3, single buffered']
    #allocation11 [shape = 'u8[1536]{0}', space=vmem, size = 0x800, scoped, tag = 'input window, operand 4, single buffered']
    #allocation12 [shape = 's32[1]{0}', space=sflag, size = 0x4, scoped, tag = 'scoped memory for mnist_classifier_forward.1']
    #allocation13 [shape = 'u8[589824]{0}', space=vmem, size = 0x90000, scoped, tag = 'input window, operand 5, single buffered']
    #allocation14 [shape = 'u8[512]{0}', space=vmem, size = 0x400, scoped, tag = 'input window, operand 6, single buffered']
    #allocation15 [shape = 's32[1]{0}', space=sflag, size = 0x4, scoped, tag = 'scoped memory for mnist_classifier_forward.1']
    #allocation16 [shape = 'u8[32768]{0}', space=vmem, size = 0x8000, scoped, tag = 'input window, operand 7, single buffered']
    #allocation17 [shape = 'u8[512]{0}', space=vmem, size = 0x400, scoped, tag = 'input window, operand 8, single buffered']
    #allocation18 [shape = 's32[1]{0}', space=sflag, size = 0x4, scoped, tag = 'scoped memory for mnist_classifier_forward.1']
    #allocation19 [shape = 'u8[1024]{0}', space=vmem, size = 0x400, scoped, tag = 'output window, operand 0, single buffered']
    %14 = vsyncpa [#allocation6], 0
    %15 = vsyncpa [#allocation9], 0
    %16 = vsyncpa [#allocation12], 0
    %17 = vsyncpa [#allocation15], 0
    %18 = vsyncpa [#allocation18], 0
    %19 = vsyncpa [#allocation7], 0
    // Predicated region
    $region2: #{mnist_classifier_forward.1} parent=1 // pred_check
      _
    $region3: #{mnist_classifier_forward.1} parent=1 // pred_check_branch
      %21 = sbr.rel (0) target = $region5
    $region4: #{mnist_classifier_forward.1} parent=1 // pred_region
      _
    $region5: #{mnist_classifier_forward.1} parent=1 // pred_fallthru
      _
    // Predicated region
    $region6: #{mnist_classifier_forward.1} parent=1 // pred_check
      _
    $region7: #{mnist_classifier_forward.1} parent=1 // pred_check_branch
      %23 = sbr.rel (0) target = $region9
    $region8: #{mnist_classifier_forward.1} parent=1 // pred_region
      %25 = vsyncadd [#allocation6], 0
      %s26 = sshll.u32 %s1, 4
      %s27 = int_to_ptr.hbm [resolvable:$true] %s26
      %s28 = sshll.u32 [#allocation5], 4
      %s29 = int_to_ptr.vmem [resolvable:$true] %s28
      %34 = dma.hbm_to_vmem [thread:$0]  %s27, 5120, %s29, [#allocation6], 256, 256, 16
    $region9: #{mnist_classifier_forward.1} parent=1 // pred_fallthru
      _
    // Predicated region
    $region10: #{mnist_classifier_forward.1} parent=1 // pred_check
      _
    $region11: #{mnist_classifier_forward.1} parent=1 // pred_check_branch
      %36 = sbr.rel (0) target = $region13
    $region12: #{mnist_classifier_forward.1} parent=1 // pred_region
      %38 = vsyncadd [#allocation9], 0
      %s40 = sshll.u32 %s2, 4
      %s41 = int_to_ptr.hbm [resolvable:$true] %s40
      %s42 = sshll.u32 [#allocation8], 4
      %s43 = int_to_ptr.vmem [resolvable:$true] %s42
      %45 = dma.hbm_to_vmem [thread:$0]  %s41, 64, %s43, [#allocation9]
    $region13: #{mnist_classifier_forward.1} parent=1 // pred_fallthru
      _
    // Predicated region
    $region14: #{mnist_classifier_forward.1} parent=1 // pred_check
      _
    $region15: #{mnist_classifier_forward.1} parent=1 // pred_check_branch
      %47 = sbr.rel (0) target = $region17
    $region16: #{mnist_classifier_forward.1} parent=1 // pred_region
      %49 = vsyncadd [#allocation9], 0
      %s50 = sshll.u32 %s3, 4
      %s51 = int_to_ptr.hbm [resolvable:$true] %s50
      %s52 = sshll.u32 [#allocation10], 4
      %s53 = int_to_ptr.vmem [resolvable:$true] %s52
      %58 = dma.hbm_to_vmem [thread:$0]  %s51, 61440, %s53, [#allocation9], 192, 192, 12
    $region17: #{mnist_classifier_forward.1} parent=1 // pred_fallthru
      _
    // Predicated region
    $region18: #{mnist_classifier_forward.1} parent=1 // pred_check
      _
    $region19: #{mnist_classifier_forward.1} parent=1 // pred_check_branch
      %60 = sbr.rel (0) target = $region21
    $region20: #{mnist_classifier_forward.1} parent=1 // pred_region
      %62 = vsyncadd [#allocation12], 0
      %s64 = sshll.u32 %s4, 4
      %s65 = int_to_ptr.hbm [resolvable:$true] %s64
      %s66 = sshll.u32 [#allocation11], 4
      %s67 = int_to_ptr.vmem [resolvable:$true] %s66
      %69 = dma.hbm_to_vmem [thread:$0]  %s65, 48, %s67, [#allocation12]
    $region21: #{mnist_classifier_forward.1} parent=1 // pred_fallthru
      _
    // Predicated region
    $region22: #{mnist_classifier_forward.1} parent=1 // pred_check
      _
    $region23: #{mnist_classifier_forward.1} parent=1 // pred_check_branch
      %71 = sbr.rel (0) target = $region25
    $region24: #{mnist_classifier_forward.1} parent=1 // pred_region
      %73 = vsyncadd [#allocation12], 0
      %s74 = sshll.u32 %s5, 4
      %s75 = int_to_ptr.hbm [resolvable:$true] %s74
      %s76 = sshll.u32 [#allocation13], 4
      %s77 = int_to_ptr.vmem [resolvable:$true] %s76
      %82 = dma.hbm_to_vmem [thread:$0]  %s75, 18432, %s77, [#allocation12], 64, 64, 4
    $region25: #{mnist_classifier_forward.1} parent=1 // pred_fallthru
      _
    // Predicated region
    $region26: #{mnist_classifier_forward.1} parent=1 // pred_check
      _
    $region27: #{mnist_classifier_forward.1} parent=1 // pred_check_branch
      %84 = sbr.rel (0) target = $region29
    $region28: #{mnist_classifier_forward.1} parent=1 // pred_region
      %86 = vsyncadd [#allocation15], 0
      %s88 = sshll.u32 %s6, 4
      %s89 = int_to_ptr.hbm [resolvable:$true] %s88
      %s90 = sshll.u32 [#allocation14], 4
      %s91 = int_to_ptr.vmem [resolvable:$true] %s90
      %93 = dma.hbm_to_vmem [thread:$0]  %s89, 16, %s91, [#allocation15]
    $region29: #{mnist_classifier_forward.1} parent=1 // pred_fallthru
      _
    // Predicated region
    $region30: #{mnist_classifier_forward.1} parent=1 // pred_check
      _
    $region31: #{mnist_classifier_forward.1} parent=1 // pred_check_branch
      %95 = sbr.rel (0) target = $region33
    $region32: #{mnist_classifier_forward.1} parent=1 // pred_region
      %97 = vsyncadd [#allocation15], 0
      %s98 = sshll.u32 %s7, 4
      %s99 = int_to_ptr.hbm [resolvable:$true] %s98
      %s100 = sshll.u32 [#allocation16], 4
      %s101 = int_to_ptr.vmem [resolvable:$true] %s100
      %106 = dma.hbm_to_vmem [thread:$0]  %s99, 1024, %s101, [#allocation15], 64, 64, 4
    $region33: #{mnist_classifier_forward.1} parent=1 // pred_fallthru
      _
    // Predicated region
    $region34: #{mnist_classifier_forward.1} parent=1 // pred_check
      _
    $region35: #{mnist_classifier_forward.1} parent=1 // pred_check_branch
      %108 = sbr.rel (0) target = $region37
    $region36: #{mnist_classifier_forward.1} parent=1 // pred_region
      %110 = vsyncadd [#allocation18], 0
      %s112 = sshll.u32 %s8, 4
      %s113 = int_to_ptr.hbm [resolvable:$true] %s112
      %s114 = sshll.u32 [#allocation17], 4
      %s115 = int_to_ptr.vmem [resolvable:$true] %s114
      %117 = dma.hbm_to_vmem [thread:$0]  %s113, 16, %s115, [#allocation18]
    $region37: #{mnist_classifier_forward.1} parent=1 // pred_fallthru
      _
    // Predicated region
    $region38: #{mnist_classifier_forward.1} parent=1 // pred_check
      _
    $region39: #{mnist_classifier_forward.1} parent=1 // pred_check_branch
      %119 = sbr.rel (0) target = $region41
    $region40: #{mnist_classifier_forward.1} parent=1 // pred_region
      %121 = dma.done [#allocation6], 5120
    $region41: #{mnist_classifier_forward.1} parent=1 // pred_fallthru
      _
    // Predicated region
    $region42: #{mnist_classifier_forward.1} parent=1 // pred_check
      _
    $region43: #{mnist_classifier_forward.1} parent=1 // pred_check_branch
      %123 = sbr.rel (0) target = $region45
    $region44: #{mnist_classifier_forward.1} parent=1 // pred_region
      %125 = dma.done [#allocation9], 64
    $region45: #{mnist_classifier_forward.1} parent=1 // pred_fallthru
      _
    // Predicated region
    $region46: #{mnist_classifier_forward.1} parent=1 // pred_check
      _
    $region47: #{mnist_classifier_forward.1} parent=1 // pred_check_branch
      %127 = sbr.rel (0) target = $region49
    $region48: #{mnist_classifier_forward.1} parent=1 // pred_region
      %129 = dma.done [#allocation9], 61440
    $region49: #{mnist_classifier_forward.1} parent=1 // pred_fallthru
      _
    // Predicated region
    $region50: #{mnist_classifier_forward.1} parent=1 // pred_check
      _
    $region51: #{mnist_classifier_forward.1} parent=1 // pred_check_branch
      %131 = sbr.rel (0) target = $region53
    $region52: #{mnist_classifier_forward.1} parent=1 // pred_region
      %133 = dma.done [#allocation12], 48
    $region53: #{mnist_classifier_forward.1} parent=1 // pred_fallthru
      _
    // Predicated region
    $region54: #{mnist_classifier_forward.1} parent=1 // pred_check
      _
    $region55: #{mnist_classifier_forward.1} parent=1 // pred_check_branch
      %135 = sbr.rel (0) target = $region57
    $region56: #{mnist_classifier_forward.1} parent=1 // pred_region
      %137 = dma.done [#allocation12], 18432
    $region57: #{mnist_classifier_forward.1} parent=1 // pred_fallthru
      _
    // Predicated region
    $region58: #{mnist_classifier_forward.1} parent=1 // pred_check
      _
    $region59: #{mnist_classifier_forward.1} parent=1 // pred_check_branch
      %139 = sbr.rel (0) target = $region61
    $region60: #{mnist_classifier_forward.1} parent=1 // pred_region
      %141 = dma.done [#allocation15], 16
    $region61: #{mnist_classifier_forward.1} parent=1 // pred_fallthru
      _
    // Predicated region
    $region62: #{mnist_classifier_forward.1} parent=1 // pred_check
      _
    $region63: #{mnist_classifier_forward.1} parent=1 // pred_check_branch
      %143 = sbr.rel (0) target = $region65
    $region64: #{mnist_classifier_forward.1} parent=1 // pred_region
      %145 = dma.done [#allocation15], 1024
    $region65: #{mnist_classifier_forward.1} parent=1 // pred_fallthru
      _
    // Predicated region
    $region66: #{mnist_classifier_forward.1} parent=1 // pred_check
      _
    $region67: #{mnist_classifier_forward.1} parent=1 // pred_check_branch
      %147 = sbr.rel (0) target = $region69
    $region68: #{mnist_classifier_forward.1} parent=1 // pred_region
      %149 = dma.done [#allocation18], 16
    $region69: #{mnist_classifier_forward.1} parent=1 // pred_fallthru
      _
    %v151 = vld [vmem:[%s0] sm:$0xff]
    %v152 = vld [vmem:[%s0 + $0x8] sm:$0xff]
    %v153 = vld [vmem:[%s0 + $0x10] sm:$0xff]
    %v154 = vld [vmem:[%s0 + $0x18] sm:$0xff]
    %v155 = vld [vmem:[%s0 + $0x20] sm:$0xff]
    %v156 = vld [vmem:[%s0 + $0x28] sm:$0xff]
    %v157 = vld [vmem:[%s0 + $0x30] sm:$0x3]
    %v158 = vld [vmem:[%s0 + $0x38] sm:$0x3]
    %v159 = vpack.c.bf16 %v153, %v151
    %v160 = vpack.c.bf16 %v154, %v152
    %v161 = vpack.c.bf16 %v157, %v155
    %v162 = vpack.c.bf16 %v158, %v156
    %v163 = vld [vmem:[#allocation5] sm:$0xff]
    %v164 = vld [vmem:[#allocation5 + $0x8] sm:$0xff]
    %v165 = vld [vmem:[#allocation5 + $0x10] sm:$0xff]
    %v166 = vld [vmem:[#allocation5 + $0x18] sm:$0xff]
    %v167 = vld [vmem:[#allocation5 + $0x20] sm:$0xff]
    %v168 = vld [vmem:[#allocation5 + $0x28] sm:$0xff]
    %v169 = vld [vmem:[#allocation5 + $0x30] sm:$0xff]
    %v170 = vld [vmem:[#allocation5 + $0x38] sm:$0xff]
    %v171 = vld [vmem:[#allocation5 + $0x40] sm:$0xff]
    %v172 = vld [vmem:[#allocation5 + $0x48] sm:$0xff]
    %v173 = vld [vmem:[#allocation5 + $0x50] sm:$0xff]
    %v174 = vld [vmem:[#allocation5 + $0x58] sm:$0xff]
    %v175 = vld [vmem:[#allocation5 + $0x60] sm:$0xff]
    %v176 = vld [vmem:[#allocation5 + $0x68] sm:$0xff]
    %v177 = vld [vmem:[#allocation5 + $0x70] sm:$0xff]
    %v178 = vld [vmem:[#allocation5 + $0x78] sm:$0xff]
    %v179 = vld [vmem:[#allocation5 + $0x80] sm:$0xff]
    %v180 = vld [vmem:[#allocation5 + $0x88] sm:$0xff]
    %v181 = vld [vmem:[#allocation5 + $0x90] sm:$0xff]
    %v182 = vld [vmem:[#allocation5 + $0x98] sm:$0xff]
    %v183 = vld [vmem:[#allocation5 + $0xa0] sm:$0xff]
    %v184 = vld [vmem:[#allocation5 + $0xa8] sm:$0xff]
    %v185 = vld [vmem:[#allocation5 + $0xb0] sm:$0xff]
    %v186 = vld [vmem:[#allocation5 + $0xb8] sm:$0xff]
    %v187 = vld [vmem:[#allocation5 + $0xc0] sm:$0xff]
    %v188 = vld [vmem:[#allocation5 + $0xc8] sm:$0xff]
    %v189 = vld [vmem:[#allocation5 + $0xd0] sm:$0xff]
    %v190 = vld [vmem:[#allocation5 + $0xd8] sm:$0xff]
    %v191 = vld [vmem:[#allocation5 + $0xe0] sm:$0xff]
    %v192 = vld [vmem:[#allocation5 + $0xe8] sm:$0xff]
    %v193 = vld [vmem:[#allocation5 + $0xf0] sm:$0xff]
    %v194 = vld [vmem:[#allocation5 + $0xf8] sm:$0xff]
    %v195 = vld [vmem:[#allocation5 + $0x100] sm:$0xff]
    %v196 = vld [vmem:[#allocation5 + $0x108] sm:$0xff]
    %v197 = vld [vmem:[#allocation5 + $0x110] sm:$0xff]
    %v198 = vld [vmem:[#allocation5 + $0x118] sm:$0xff]
    %v199 = vld [vmem:[#allocation5 + $0x120] sm:$0xff]
    %v200 = vld [vmem:[#allocation5 + $0x128] sm:$0xff]
    %v201 = vld [vmem:[#allocation5 + $0x130] sm:$0xff]
    %v202 = vld [vmem:[#allocation5 + $0x138] sm:$0xff]
    %v203 = vld [vmem:[#allocation8] sm:$0xf]
    %v205 = vperm.slane %v203, 0
    %v206 = vperm.slane %v203, 1
    %v207 = vperm.slane %v203, 2
    %v208 = vperm.slane %v203, 3
    %v253 = vunpack.c.l.b16 %v163
    %v254 = vunpack.c.h.b16 %v163
    %v255 = vunpack.c.l.b16 %v164
    %v256 = vunpack.c.h.b16 %v164
    %v257 = vunpack.c.l.b16 %v165
    %v258 = vunpack.c.h.b16 %v165
    %v259 = vunpack.c.l.b16 %v166
    %v260 = vunpack.c.h.b16 %v166
    %v261 = vunpack.c.l.b16 %v167
    %v262 = vunpack.c.h.b16 %v167
    %v263 = vunpack.c.l.b16 %v168
    %v264 = vunpack.c.h.b16 %v168
    %v265 = vunpack.c.l.b16 %v169
    %v266 = vunpack.c.h.b16 %v169
    %v267 = vunpack.c.l.b16 %v170
    %v268 = vunpack.c.h.b16 %v170
    %v269 = vunpack.c.l.b16 %v171
    %v270 = vunpack.c.h.b16 %v171
    %v271 = vunpack.c.l.b16 %v172
    %v272 = vunpack.c.h.b16 %v172
    %v273 = vunpack.c.l.b16 %v173
    %v274 = vunpack.c.h.b16 %v173
    %v275 = vunpack.c.l.b16 %v174
    %v276 = vunpack.c.h.b16 %v174
    %v277 = vunpack.c.l.b16 %v175
    %v278 = vunpack.c.h.b16 %v175
    %v279 = vunpack.c.l.b16 %v176
    %v280 = vunpack.c.h.b16 %v176
    %v281 = vunpack.c.l.b16 %v177
    %v282 = vunpack.c.h.b16 %v177
    %v283 = vunpack.c.l.b16 %v178
    %v284 = vunpack.c.h.b16 %v178
    %v285 = vunpack.c.l.b16 %v179
    %v286 = vunpack.c.h.b16 %v179
    %v287 = vunpack.c.l.b16 %v180
    %v288 = vunpack.c.h.b16 %v180
    %v289 = vunpack.c.l.b16 %v181
    %v290 = vunpack.c.h.b16 %v181
    %v291 = vunpack.c.l.b16 %v182
    %v292 = vunpack.c.h.b16 %v182
    %v293 = vunpack.c.l.b16 %v183
    %v294 = vunpack.c.h.b16 %v183
    %v295 = vunpack.c.l.b16 %v184
    %v296 = vunpack.c.h.b16 %v184
    %v297 = vunpack.c.l.b16 %v185
    %v298 = vunpack.c.h.b16 %v185
    %v299 = vunpack.c.l.b16 %v186
    %v300 = vunpack.c.h.b16 %v186
    %v301 = vunpack.c.l.b16 %v187
    %v302 = vunpack.c.h.b16 %v187
    %v303 = vunpack.c.l.b16 %v188
    %v304 = vunpack.c.h.b16 %v188
    %v305 = vunpack.c.l.b16 %v189
    %v306 = vunpack.c.h.b16 %v189
    %v307 = vunpack.c.l.b16 %v190
    %v308 = vunpack.c.h.b16 %v190
    %v309 = vunpack.c.l.b16 %v191
    %v310 = vunpack.c.h.b16 %v191
    %v311 = vunpack.c.l.b16 %v192
    %v312 = vunpack.c.h.b16 %v192
    %v313 = vunpack.c.l.b16 %v193
    %v314 = vunpack.c.h.b16 %v193
    %v315 = vunpack.c.l.b16 %v194
    %v316 = vunpack.c.h.b16 %v194
    %v317 = vunpack.c.l.b16 %v195
    %v318 = vunpack.c.h.b16 %v195
    %v319 = vunpack.c.l.b16 %v196
    %v320 = vunpack.c.h.b16 %v196
    %v321 = vunpack.c.l.b16 %v197
    %v322 = vunpack.c.h.b16 %v197
    %v323 = vunpack.c.l.b16 %v198
    %v324 = vunpack.c.h.b16 %v198
    %v325 = vunpack.c.l.b16 %v199
    %v326 = vunpack.c.h.b16 %v199
    %v327 = vunpack.c.l.b16 %v200
    %v328 = vunpack.c.h.b16 %v200
    %v329 = vunpack.c.l.b16 %v201
    %v330 = vunpack.c.h.b16 %v201
    %v331 = vunpack.c.l.b16 %v202
    %v332 = vunpack.c.h.b16 %v202
    %v333 = vpack.c.b16 %v257, %v253
    %v334 = vpack.c.b16 %v258, %v254
    %v335 = vpack.c.b16 %v259, %v255
    %v336 = vpack.c.b16 %v260, %v256
    %v337 = vpack.c.b16 %v265, %v261
    %v338 = vpack.c.b16 %v266, %v262
    %v339 = vpack.c.b16 %v267, %v263
    %v340 = vpack.c.b16 %v268, %v264
    %v341 = vpack.c.b16 %v273, %v269
    %v342 = vpack.c.b16 %v274, %v270
    %v343 = vpack.c.b16 %v275, %v271
    %v344 = vpack.c.b16 %v276, %v272
    %v345 = vpack.c.b16 %v281, %v277
    %v346 = vpack.c.b16 %v282, %v278
    %v347 = vpack.c.b16 %v283, %v279
    %v348 = vpack.c.b16 %v284, %v280
    %v349 = vpack.c.b16 %v289, %v285
    %v350 = vpack.c.b16 %v290, %v286
    %v351 = vpack.c.b16 %v291, %v287
    %v352 = vpack.c.b16 %v292, %v288
    %v353 = vpack.c.b16 %v297, %v293
    %v354 = vpack.c.b16 %v298, %v294
    %v355 = vpack.c.b16 %v299, %v295
    %v356 = vpack.c.b16 %v300, %v296
    %v357 = vpack.c.b16 %v305, %v301
    %v358 = vpack.c.b16 %v306, %v302
    %v359 = vpack.c.b16 %v307, %v303
    %v360 = vpack.c.b16 %v308, %v304
    %v361 = vpack.c.b16 %v313, %v309
    %v362 = vpack.c.b16 %v314, %v310
    %v363 = vpack.c.b16 %v315, %v311
    %v364 = vpack.c.b16 %v316, %v312
    %v365 = vpack.c.b16 %v321, %v317
    %v366 = vpack.c.b16 %v322, %v318
    %v367 = vpack.c.b16 %v323, %v319
    %v368 = vpack.c.b16 %v324, %v320
    %v369 = vpack.c.b16 %v329, %v325
    %v370 = vpack.c.b16 %v330, %v326
    %v371 = vpack.c.b16 %v331, %v327
    %v372 = vpack.c.b16 %v332, %v328
    %vm413 = vcmask 261120
    %v415 = vsel %vm413, %v160, 0
    %v418 = vsel %vm413, %v162, 0
    %420 = vmatpush.bf16.msra.mxu0 %v361
    %421 = vmatpush.bf16.msra.mxu0 %v357
    %422 = vmatpush.bf16.msra.mxu0 %v353
    %423 = vmatpush.bf16.msra.mxu0 %v349
    %424 = vmatpush.bf16.msra.mxu0 %v345
    %425 = vmatpush.bf16.msra.mxu0 %v341
    %426 = vmatpush.bf16.msra.mxu0 %v337
    %427 = vmatpush.bf16.msra.mxu0 %v333
    %428 = vmatmul.bf16.gmra.mxu0 %v159
    %v429 = vpop.f32.mrf.mxu0
    %v430 = vadd.f32 %v205, %v429
    %v431 = vpop.f32.mrf.mxu0
    %v432 = vadd.f32 %v205, %v431
    %433 = vmatmul.bf16.gmra.mxu0 %v161
    %v434 = vpop.f32.mrf.mxu0
    %v435 = vadd.f32 %v205, %v434
    %v436 = vpop.f32.mrf.mxu0
    %v437 = vadd.f32 %v205, %v436
    %438 = vdwg.mxu0
    %439 = vmatpush.bf16.msra.mxu0 0
    %440 = vmatpush.bf16.msra.mxu0 0
    %441 = vmatpush.bf16.msra.mxu0 0
    %442 = vmatpush.bf16.msra.mxu0 0
    %443 = vmatpush.bf16.msra.mxu0 0
    %444 = vmatpush.bf16.msra.mxu0 0
    %445 = vmatpush.bf16.msra.mxu0 %v369
    %446 = vmatpush.bf16.msra.mxu0 %v365
    %447 = vmatmul.bf16.gmra.mxu0 %v415
    %v448 = vpop.f32.mrf.mxu0
    %v449 = vadd.f32 %v430, %v448
    %v450 = vpop.f32.mrf.mxu0
    %v451 = vadd.f32 %v432, %v450
    %452 = vmatmul.bf16.gmra.mxu0 %v418
    %v453 = vpop.f32.mrf.mxu0
    %v454 = vadd.f32 %v435, %v453
    %v455 = vpop.f32.mrf.mxu0
    %v456 = vadd.f32 %v437, %v455
    %457 = vdwg.mxu0
    %458 = vmatpush.bf16.msra.mxu0 %v362
    %459 = vmatpush.bf16.msra.mxu0 %v358
    %460 = vmatpush.bf16.msra.mxu0 %v354
    %461 = vmatpush.bf16.msra.mxu0 %v350
    %462 = vmatpush.bf16.msra.mxu0 %v346
    %463 = vmatpush.bf16.msra.mxu0 %v342
    %464 = vmatpush.bf16.msra.mxu0 %v338
    %465 = vmatpush.bf16.msra.mxu0 %v334
    %466 = vmatmul.bf16.gmra.mxu0 %v159
    %v467 = vpop.f32.mrf.mxu0
    %v468 = vadd.f32 %v206, %v467
    %v469 = vpop.f32.mrf.mxu0
    %v470 = vadd.f32 %v206, %v469
    %471 = vmatmul.bf16.gmra.mxu0 %v161
    %v472 = vpop.f32.mrf.mxu0
    %v473 = vadd.f32 %v206, %v472
    %v474 = vpop.f32.mrf.mxu0
    %v475 = vadd.f32 %v206, %v474
    %476 = vdwg.mxu0
    %477 = vmatpush.bf16.msra.mxu0 0
    %478 = vmatpush.bf16.msra.mxu0 0
    %479 = vmatpush.bf16.msra.mxu0 0
    %480 = vmatpush.bf16.msra.mxu0 0
    %481 = vmatpush.bf16.msra.mxu0 0
    %482 = vmatpush.bf16.msra.mxu0 0
    %483 = vmatpush.bf16.msra.mxu0 %v370
    %484 = vmatpush.bf16.msra.mxu0 %v366
    %485 = vmatmul.bf16.gmra.mxu0 %v415
    %v486 = vpop.f32.mrf.mxu0
    %v487 = vadd.f32 %v468, %v486
    %v488 = vpop.f32.mrf.mxu0
    %v489 = vadd.f32 %v470, %v488
    %490 = vmatmul.bf16.gmra.mxu0 %v418
    %v491 = vpop.f32.mrf.mxu0
    %v492 = vadd.f32 %v473, %v491
    %v493 = vpop.f32.mrf.mxu0
    %v494 = vadd.f32 %v475, %v493
    %495 = vdwg.mxu0
    %496 = vmatpush.bf16.msra.mxu0 %v363
    %497 = vmatpush.bf16.msra.mxu0 %v359
    %498 = vmatpush.bf16.msra.mxu0 %v355
    %499 = vmatpush.bf16.msra.mxu0 %v351
    %500 = vmatpush.bf16.msra.mxu0 %v347
    %501 = vmatpush.bf16.msra.mxu0 %v343
    %502 = vmatpush.bf16.msra.mxu0 %v339
    %503 = vmatpush.bf16.msra.mxu0 %v335
    %504 = vmatmul.bf16.gmra.mxu0 %v159
    %v505 = vpop.f32.mrf.mxu0
    %v506 = vadd.f32 %v207, %v505
    %v507 = vpop.f32.mrf.mxu0
    %v508 = vadd.f32 %v207, %v507
    %509 = vmatmul.bf16.gmra.mxu0 %v161
    %v510 = vpop.f32.mrf.mxu0
    %v511 = vadd.f32 %v207, %v510
    %v512 = vpop.f32.mrf.mxu0
    %v513 = vadd.f32 %v207, %v512
    %514 = vdwg.mxu0
    %515 = vmatpush.bf16.msra.mxu0 0
    %516 = vmatpush.bf16.msra.mxu0 0
    %517 = vmatpush.bf16.msra.mxu0 0
    %518 = vmatpush.bf16.msra.mxu0 0
    %519 = vmatpush.bf16.msra.mxu0 0
    %520 = vmatpush.bf16.msra.mxu0 0
    %521 = vmatpush.bf16.msra.mxu0 %v371
    %522 = vmatpush.bf16.msra.mxu0 %v367
    %523 = vmatmul.bf16.gmra.mxu0 %v415
    %v524 = vpop.f32.mrf.mxu0
    %v525 = vadd.f32 %v506, %v524
    %v526 = vpop.f32.mrf.mxu0
    %v527 = vadd.f32 %v508, %v526
    %528 = vmatmul.bf16.gmra.mxu0 %v418
    %v529 = vpop.f32.mrf.mxu0
    %v530 = vadd.f32 %v511, %v529
    %v531 = vpop.f32.mrf.mxu0
    %v532 = vadd.f32 %v513, %v531
    %533 = vdwg.mxu0
    %534 = vmatpush.bf16.msra.mxu0 %v364
    %535 = vmatpush.bf16.msra.mxu0 %v360
    %536 = vmatpush.bf16.msra.mxu0 %v356
    %537 = vmatpush.bf16.msra.mxu0 %v352
    %538 = vmatpush.bf16.msra.mxu0 %v348
    %539 = vmatpush.bf16.msra.mxu0 %v344
    %540 = vmatpush.bf16.msra.mxu0 %v340
    %541 = vmatpush.bf16.msra.mxu0 %v336
    %542 = vmatmul.bf16.gmra.mxu0 %v159
    %v543 = vpop.f32.mrf.mxu0
    %v544 = vadd.f32 %v208, %v543
    %v545 = vpop.f32.mrf.mxu0
    %v546 = vadd.f32 %v208, %v545
    %547 = vmatmul.bf16.gmra.mxu0 %v161
    %v548 = vpop.f32.mrf.mxu0
    %v549 = vadd.f32 %v208, %v548
    %v550 = vpop.f32.mrf.mxu0
    %v551 = vadd.f32 %v208, %v550
    %552 = vdwg.mxu0
    %553 = vmatpush.bf16.msra.mxu0 0
    %554 = vmatpush.bf16.msra.mxu0 0
    %555 = vmatpush.bf16.msra.mxu0 0
    %556 = vmatpush.bf16.msra.mxu0 0
    %557 = vmatpush.bf16.msra.mxu0 0
    %558 = vmatpush.bf16.msra.mxu0 0
    %559 = vmatpush.bf16.msra.mxu0 %v372
    %560 = vmatpush.bf16.msra.mxu0 %v368
    %561 = vmatmul.bf16.gmra.mxu0 %v415
    %v562 = vpop.f32.mrf.mxu0
    %v563 = vadd.f32 %v544, %v562
    %v564 = vpop.f32.mrf.mxu0
    %v565 = vadd.f32 %v546, %v564
    %566 = vmatmul.bf16.gmra.mxu0 %v418
    %v567 = vpop.f32.mrf.mxu0
    %v568 = vadd.f32 %v549, %v567
    %v569 = vpop.f32.mrf.mxu0
    %v570 = vadd.f32 %v551, %v569
    %571 = vdwg.mxu0
    %v572 = vpack.c.bf16 %v487, %v449
    %v573 = vpack.c.bf16 %v563, %v525
    %v574 = vpack.c.bf16 %v489, %v451
    %v575 = vpack.c.bf16 %v565, %v527
    %v576 = vpack.c.bf16 %v492, %v454
    %v577 = vpack.c.bf16 %v568, %v530
    %v578 = vpack.c.bf16 %v494, %v456
    %v579 = vpack.c.bf16 %v570, %v532
    %580 = vst [vmem:[#allocation2] sm:$0xff] %v572
    %581 = vst [vmem:[#allocation2 + $0x8] sm:$0xff] %v573
    %582 = vst [vmem:[#allocation2 + $0x10] sm:$0x77] %v574
    %583 = vst [vmem:[#allocation2 + $0x18] sm:$0x77] %v575
    %584 = vst [vmem:[#allocation3] sm:$0x11] 0
    %585 = vst [vmem:[#allocation3 + $0x8] sm:$0x11] 0
    %vm592 = vcmask 1041408
    %vm593 = vcmask 1045508
    %vm594 = vmor %vm592, %vm593
    %v595 = vrot.slane %v574, 6
    %v596 = vrot.slane %v595, 4
    %v597 = vrot.slane %v576, 6
    %v598 = vsel %vm594, %v596, %v597
    %v599 = vrot.slane %v575, 6
    %v600 = vrot.slane %v599, 4
    %v601 = vrot.slane %v577, 6
    %v602 = vsel %vm594, %v600, %v601
    %v603 = vrot.slane %v597, 4
    %v604 = vrot.slane %v578, 6
    %v605 = vsel %vm594, %v603, %v604
    %v606 = vrot.slane %v601, 4
    %v607 = vrot.slane %v579, 6
    %v608 = vsel %vm594, %v606, %v607
    %613 = vst [vmem:[#allocation3] sm:$0xee] %v598
    %614 = vst [vmem:[#allocation3 + $0x8] sm:$0xee] %v602
    %615 = vst [vmem:[#allocation3 + $0x10] sm:$0x77] %v605
    %616 = vst [vmem:[#allocation3 + $0x18] sm:$0x77] %v608
    %617 = vst [vmem:[#allocation3 + $0x10] sm:$0x88] 0
    %618 = vst [vmem:[#allocation3 + $0x18] sm:$0x88] 0
    %v619 = vld [vmem:[#allocation3] sm:$0xff]
    %v620 = vld [vmem:[#allocation3 + $0x8] sm:$0xff]
    %v621 = vld [vmem:[#allocation3 + $0x10] sm:$0x33]
    %v622 = vld [vmem:[#allocation3 + $0x18] sm:$0x33]
    %v623 = vld [vmem:[#allocation10] sm:$0xff]
    %v624 = vld [vmem:[#allocation10 + $0x8] sm:$0xf]
    %v625 = vld [vmem:[#allocation10 + $0xc] sm:$0xff]
    %v626 = vld [vmem:[#allocation10 + $0x14] sm:$0xf]
    %v627 = vld [vmem:[#allocation10 + $0x18] sm:$0xff]
    %v628 = vld [vmem:[#allocation10 + $0x20] sm:$0xf]
    %v629 = vld [vmem:[#allocation10 + $0x24] sm:$0xff]
    %v630 = vld [vmem:[#allocation10 + $0x2c] sm:$0xf]
    %v631 = vld [vmem:[#allocation10 + $0x30] sm:$0xff]
    %v632 = vld [vmem:[#allocation10 + $0x38] sm:$0xf]
    %v633 = vld [vmem:[#allocation10 + $0x3c] sm:$0xff]
    %v634 = vld [vmem:[#allocation10 + $0x44] sm:$0xf]
    %v635 = vld [vmem:[#allocation10 + $0x48] sm:$0xff]
    %v636 = vld [vmem:[#allocation10 + $0x50] sm:$0xf]
    %v637 = vld [vmem:[#allocation10 + $0x54] sm:$0xff]
    %v638 = vld [vmem:[#allocation10 + $0x5c] sm:$0xf]
    %v639 = vld [vmem:[#allocation10 + $0x60] sm:$0xff]
    %v640 = vld [vmem:[#allocation10 + $0x68] sm:$0xf]
    %v641 = vld [vmem:[#allocation10 + $0x6c] sm:$0xff]
    %v642 = vld [vmem:[#allocation10 + $0x74] sm:$0xf]
    %v643 = vld [vmem:[#allocation10 + $0x78] sm:$0xff]
    %v644 = vld [vmem:[#allocation10 + $0x80] sm:$0xf]
    %v645 = vld [vmem:[#allocation10 + $0x84] sm:$0xff]
    %v646 = vld [vmem:[#allocation10 + $0x8c] sm:$0xf]
    %v647 = vld [vmem:[#allocation10 + $0x90] sm:$0xff]
    %v648 = vld [vmem:[#allocation10 + $0x98] sm:$0xf]
    %v649 = vld [vmem:[#allocation10 + $0x9c] sm:$0xff]
    %v650 = vld [vmem:[#allocation10 + $0xa4] sm:$0xf]
    %v651 = vld [vmem:[#allocation10 + $0xa8] sm:$0xff]
    %v652 = vld [vmem:[#allocation10 + $0xb0] sm:$0xf]
    %v653 = vld [vmem:[#allocation10 + $0xb4] sm:$0xff]
    %v654 = vld [vmem:[#allocation10 + $0xbc] sm:$0xf]
    %v655 = vld [vmem:[#allocation10 + $0xc0] sm:$0xff]
    %v656 = vld [vmem:[#allocation10 + $0xc8] sm:$0xf]
    %v657 = vld [vmem:[#allocation10 + $0xcc] sm:$0xff]
    %v658 = vld [vmem:[#allocation10 + $0xd4] sm:$0xf]
    %v659 = vld [vmem:[#allocation10 + $0xd8] sm:$0xff]
    %v660 = vld [vmem:[#allocation10 + $0xe0] sm:$0xf]
    %v661 = vld [vmem:[#allocation10 + $0xe4] sm:$0xff]
    %v662 = vld [vmem:[#allocation10 + $0xec] sm:$0xf]
    %v663 = vld [vmem:[#allocation10 + $0xf0] sm:$0xff]
    %v664 = vld [vmem:[#allocation10 + $0xf8] sm:$0xf]
    %v665 = vld [vmem:[#allocation10 + $0xfc] sm:$0xff]
    %v666 = vld [vmem:[#allocation10 + $0x104] sm:$0xf]
    %v667 = vld [vmem:[#allocation10 + $0x108] sm:$0xff]
    %v668 = vld [vmem:[#allocation10 + $0x110] sm:$0xf]
    %v669 = vld [vmem:[#allocation10 + $0x114] sm:$0xff]
    %v670 = vld [vmem:[#allocation10 + $0x11c] sm:$0xf]
    %v671 = vld [vmem:[#allocation10 + $0x120] sm:$0xff]
    %v672 = vld [vmem:[#allocation10 + $0x128] sm:$0xf]
    %v673 = vld [vmem:[#allocation10 + $0x12c] sm:$0xff]
    %v674 = vld [vmem:[#allocation10 + $0x134] sm:$0xf]
    %v675 = vld [vmem:[#allocation10 + $0x138] sm:$0xff]
    %v676 = vld [vmem:[#allocation10 + $0x140] sm:$0xf]
    %v677 = vld [vmem:[#allocation10 + $0x144] sm:$0xff]
    %v678 = vld [vmem:[#allocation10 + $0x14c] sm:$0xf]
    %v679 = vld [vmem:[#allocation10 + $0x150] sm:$0xff]
    %v680 = vld [vmem:[#allocation10 + $0x158] sm:$0xf]
    %v681 = vld [vmem:[#allocation10 + $0x15c] sm:$0xff]
    %v682 = vld [vmem:[#allocation10 + $0x164] sm:$0xf]
    %v683 = vld [vmem:[#allocation10 + $0x168] sm:$0xff]
    %v684 = vld [vmem:[#allocation10 + $0x170] sm:$0xf]
    %v685 = vld [vmem:[#allocation10 + $0x174] sm:$0xff]
    %v686 = vld [vmem:[#allocation10 + $0x17c] sm:$0xf]
    %v687 = vld [vmem:[#allocation10 + $0x180] sm:$0xff]
    %v688 = vld [vmem:[#allocation10 + $0x188] sm:$0xf]
    %v689 = vld [vmem:[#allocation10 + $0x18c] sm:$0xff]
    %v690 = vld [vmem:[#allocation10 + $0x194] sm:$0xf]
    %v691 = vld [vmem:[#allocation10 + $0x198] sm:$0xff]
    %v692 = vld [vmem:[#allocation10 + $0x1a0] sm:$0xf]
    %v693 = vld [vmem:[#allocation10 + $0x1a4] sm:$0xff]
    %v694 = vld [vmem:[#allocation10 + $0x1ac] sm:$0xf]
    %v695 = vld [vmem:[#allocation10 + $0x1b0] sm:$0xff]
    %v696 = vld [vmem:[#allocation10 + $0x1b8] sm:$0xf]
    %v697 = vld [vmem:[#allocation10 + $0x1bc] sm:$0xff]
    %v698 = vld [vmem:[#allocation10 + $0x1c4] sm:$0xf]
    %v699 = vld [vmem:[#allocation10 + $0x1c8] sm:$0xff]
    %v700 = vld [vmem:[#allocation10 + $0x1d0] sm:$0xf]
    %v701 = vld [vmem:[#allocation10 + $0x1d4] sm:$0xff]
    %v702 = vld [vmem:[#allocation10 + $0x1dc] sm:$0xf]
    %v703 = vld [vmem:[#allocation10 + $0x1e0] sm:$0xff]
    %v704 = vld [vmem:[#allocation10 + $0x1e8] sm:$0xf]
    %v705 = vld [vmem:[#allocation10 + $0x1ec] sm:$0xff]
    %v706 = vld [vmem:[#allocation10 + $0x1f4] sm:$0xf]
    %v707 = vld [vmem:[#allocation10 + $0x1f8] sm:$0xff]
    %v708 = vld [vmem:[#allocation10 + $0x200] sm:$0xf]
    %v709 = vld [vmem:[#allocation10 + $0x204] sm:$0xff]
    %v710 = vld [vmem:[#allocation10 + $0x20c] sm:$0xf]
    %v711 = vld [vmem:[#allocation10 + $0x210] sm:$0xff]
    %v712 = vld [vmem:[#allocation10 + $0x218] sm:$0xf]
    %v713 = vld [vmem:[#allocation10 + $0x21c] sm:$0xff]
    %v714 = vld [vmem:[#allocation10 + $0x224] sm:$0xf]
    %v715 = vld [vmem:[#allocation10 + $0x228] sm:$0xff]
    %v716 = vld [vmem:[#allocation10 + $0x230] sm:$0xf]
    %v717 = vld [vmem:[#allocation10 + $0x234] sm:$0xff]
    %v718 = vld [vmem:[#allocation10 + $0x23c] sm:$0xf]
    %v719 = vld [vmem:[#allocation10 + $0x240] sm:$0xff]
    %v720 = vld [vmem:[#allocation10 + $0x248] sm:$0xf]
    %v721 = vld [vmem:[#allocation10 + $0x24c] sm:$0xff]
    %v722 = vld [vmem:[#allocation10 + $0x254] sm:$0xf]
    %v723 = vld [vmem:[#allocation10 + $0x258] sm:$0xff]
    %v724 = vld [vmem:[#allocation10 + $0x260] sm:$0xf]
    %v725 = vld [vmem:[#allocation10 + $0x264] sm:$0xff]
    %v726 = vld [vmem:[#allocation10 + $0x26c] sm:$0xf]
    %v727 = vld [vmem:[#allocation10 + $0x270] sm:$0xff]
    %v728 = vld [vmem:[#allocation10 + $0x278] sm:$0xf]
    %v729 = vld [vmem:[#allocation10 + $0x27c] sm:$0xff]
    %v730 = vld [vmem:[#allocation10 + $0x284] sm:$0xf]
    %v731 = vld [vmem:[#allocation10 + $0x288] sm:$0xff]
    %v732 = vld [vmem:[#allocation10 + $0x290] sm:$0xf]
    %v733 = vld [vmem:[#allocation10 + $0x294] sm:$0xff]
    %v734 = vld [vmem:[#allocation10 + $0x29c] sm:$0xf]
    %v735 = vld [vmem:[#allocation10 + $0x2a0] sm:$0xff]
    %v736 = vld [vmem:[#allocation10 + $0x2a8] sm:$0xf]
    %v737 = vld [vmem:[#allocation10 + $0x2ac] sm:$0xff]
    %v738 = vld [vmem:[#allocation10 + $0x2b4] sm:$0xf]
    %v739 = vld [vmem:[#allocation10 + $0x2b8] sm:$0xff]
    %v740 = vld [vmem:[#allocation10 + $0x2c0] sm:$0xf]
    %v741 = vld [vmem:[#allocation10 + $0x2c4] sm:$0xff]
    %v742 = vld [vmem:[#allocation10 + $0x2cc] sm:$0xf]
    %v743 = vld [vmem:[#allocation10 + $0x2d0] sm:$0xff]
    %v744 = vld [vmem:[#allocation10 + $0x2d8] sm:$0xf]
    %v745 = vld [vmem:[#allocation10 + $0x2dc] sm:$0xff]
    %v746 = vld [vmem:[#allocation10 + $0x2e4] sm:$0xf]
    %v747 = vld [vmem:[#allocation10 + $0x2e8] sm:$0xff]
    %v748 = vld [vmem:[#allocation10 + $0x2f0] sm:$0xf]
    %v749 = vld [vmem:[#allocation10 + $0x2f4] sm:$0xff]
    %v750 = vld [vmem:[#allocation10 + $0x2fc] sm:$0xf]
    %v751 = vld [vmem:[#allocation2] sm:$0xff]
    %v752 = vld [vmem:[#allocation2 + $0x8] sm:$0xff]
    %v753 = vld [vmem:[#allocation2 + $0x10] sm:$0x33]
    %v754 = vld [vmem:[#allocation2 + $0x18] sm:$0x33]
    %v755 = vld [vmem:[#allocation10 + $0x300] sm:$0xff]
    %v756 = vld [vmem:[#allocation10 + $0x308] sm:$0xf]
    %v757 = vld [vmem:[#allocation10 + $0x30c] sm:$0xff]
    %v758 = vld [vmem:[#allocation10 + $0x314] sm:$0xf]
    %v759 = vld [vmem:[#allocation10 + $0x318] sm:$0xff]
    %v760 = vld [vmem:[#allocation10 + $0x320] sm:$0xf]
    %v761 = vld [vmem:[#allocation10 + $0x324] sm:$0xff]
    %v762 = vld [vmem:[#allocation10 + $0x32c] sm:$0xf]
    %v763 = vld [vmem:[#allocation10 + $0x330] sm:$0xff]
    %v764 = vld [vmem:[#allocation10 + $0x338] sm:$0xf]
    %v765 = vld [vmem:[#allocation10 + $0x33c] sm:$0xff]
    %v766 = vld [vmem:[#allocation10 + $0x344] sm:$0xf]
    %v767 = vld [vmem:[#allocation10 + $0x348] sm:$0xff]
    %v768 = vld [vmem:[#allocation10 + $0x350] sm:$0xf]
    %v769 = vld [vmem:[#allocation10 + $0x354] sm:$0xff]
    %v770 = vld [vmem:[#allocation10 + $0x35c] sm:$0xf]
    %v771 = vld [vmem:[#allocation10 + $0x360] sm:$0xff]
    %v772 = vld [vmem:[#allocation10 + $0x368] sm:$0xf]
    %v773 = vld [vmem:[#allocation10 + $0x36c] sm:$0xff]
    %v774 = vld [vmem:[#allocation10 + $0x374] sm:$0xf]
    %v775 = vld [vmem:[#allocation10 + $0x378] sm:$0xff]
    %v776 = vld [vmem:[#allocation10 + $0x380] sm:$0xf]
    %v777 = vld [vmem:[#allocation10 + $0x384] sm:$0xff]
    %v778 = vld [vmem:[#allocation10 + $0x38c] sm:$0xf]
    %v779 = vld [vmem:[#allocation10 + $0x390] sm:$0xff]
    %v780 = vld [vmem:[#allocation10 + $0x398] sm:$0xf]
    %v781 = vld [vmem:[#allocation10 + $0x39c] sm:$0xff]
    %v782 = vld [vmem:[#allocation10 + $0x3a4] sm:$0xf]
    %v783 = vld [vmem:[#allocation10 + $0x3a8] sm:$0xff]
    %v784 = vld [vmem:[#allocation10 + $0x3b0] sm:$0xf]
    %v785 = vld [vmem:[#allocation10 + $0x3b4] sm:$0xff]
    %v786 = vld [vmem:[#allocation10 + $0x3bc] sm:$0xf]
    %v787 = vld [vmem:[#allocation10 + $0x3c0] sm:$0xff]
    %v788 = vld [vmem:[#allocation10 + $0x3c8] sm:$0xf]
    %v789 = vld [vmem:[#allocation10 + $0x3cc] sm:$0xff]
    %v790 = vld [vmem:[#allocation10 + $0x3d4] sm:$0xf]
    %v791 = vld [vmem:[#allocation10 + $0x3d8] sm:$0xff]
    %v792 = vld [vmem:[#allocation10 + $0x3e0] sm:$0xf]
    %v793 = vld [vmem:[#allocation10 + $0x3e4] sm:$0xff]
    %v794 = vld [vmem:[#allocation10 + $0x3ec] sm:$0xf]
    %v795 = vld [vmem:[#allocation10 + $0x3f0] sm:$0xff]
    %v796 = vld [vmem:[#allocation10 + $0x3f8] sm:$0xf]
    %v797 = vld [vmem:[#allocation10 + $0x3fc] sm:$0xff]
    %v798 = vld [vmem:[#allocation10 + $0x404] sm:$0xf]
    %v799 = vld [vmem:[#allocation10 + $0x408] sm:$0xff]
    %v800 = vld [vmem:[#allocation10 + $0x410] sm:$0xf]
    %v801 = vld [vmem:[#allocation10 + $0x414] sm:$0xff]
    %v802 = vld [vmem:[#allocation10 + $0x41c] sm:$0xf]
    %v803 = vld [vmem:[#allocation10 + $0x420] sm:$0xff]
    %v804 = vld [vmem:[#allocation10 + $0x428] sm:$0xf]
    %v805 = vld [vmem:[#allocation10 + $0x42c] sm:$0xff]
    %v806 = vld [vmem:[#allocation10 + $0x434] sm:$0xf]
    %v807 = vld [vmem:[#allocation10 + $0x438] sm:$0xff]
    %v808 = vld [vmem:[#allocation10 + $0x440] sm:$0xf]
    %v809 = vld [vmem:[#allocation10 + $0x444] sm:$0xff]
    %v810 = vld [vmem:[#allocation10 + $0x44c] sm:$0xf]
    %v811 = vld [vmem:[#allocation10 + $0x450] sm:$0xff]
    %v812 = vld [vmem:[#allocation10 + $0x458] sm:$0xf]
    %v813 = vld [vmem:[#allocation10 + $0x45c] sm:$0xff]
    %v814 = vld [vmem:[#allocation10 + $0x464] sm:$0xf]
    %v815 = vld [vmem:[#allocation10 + $0x468] sm:$0xff]
    %v816 = vld [vmem:[#allocation10 + $0x470] sm:$0xf]
    %v817 = vld [vmem:[#allocation10 + $0x474] sm:$0xff]
    %v818 = vld [vmem:[#allocation10 + $0x47c] sm:$0xf]
    %v819 = vld [vmem:[#allocation10 + $0x480] sm:$0xff]
    %v820 = vld [vmem:[#allocation10 + $0x488] sm:$0xf]
    %v821 = vld [vmem:[#allocation10 + $0x48c] sm:$0xff]
    %v822 = vld [vmem:[#allocation10 + $0x494] sm:$0xf]
    %v823 = vld [vmem:[#allocation10 + $0x498] sm:$0xff]
    %v824 = vld [vmem:[#allocation10 + $0x4a0] sm:$0xf]
    %v825 = vld [vmem:[#allocation10 + $0x4a4] sm:$0xff]
    %v826 = vld [vmem:[#allocation10 + $0x4ac] sm:$0xf]
    %v827 = vld [vmem:[#allocation10 + $0x4b0] sm:$0xff]
    %v828 = vld [vmem:[#allocation10 + $0x4b8] sm:$0xf]
    %v829 = vld [vmem:[#allocation10 + $0x4bc] sm:$0xff]
    %v830 = vld [vmem:[#allocation10 + $0x4c4] sm:$0xf]
    %v831 = vld [vmem:[#allocation10 + $0x4c8] sm:$0xff]
    %v832 = vld [vmem:[#allocation10 + $0x4d0] sm:$0xf]
    %v833 = vld [vmem:[#allocation10 + $0x4d4] sm:$0xff]
    %v834 = vld [vmem:[#allocation10 + $0x4dc] sm:$0xf]
    %v835 = vld [vmem:[#allocation10 + $0x4e0] sm:$0xff]
    %v836 = vld [vmem:[#allocation10 + $0x4e8] sm:$0xf]
    %v837 = vld [vmem:[#allocation10 + $0x4ec] sm:$0xff]
    %v838 = vld [vmem:[#allocation10 + $0x4f4] sm:$0xf]
    %v839 = vld [vmem:[#allocation10 + $0x4f8] sm:$0xff]
    %v840 = vld [vmem:[#allocation10 + $0x500] sm:$0xf]
    %v841 = vld [vmem:[#allocation10 + $0x504] sm:$0xff]
    %v842 = vld [vmem:[#allocation10 + $0x50c] sm:$0xf]
    %v843 = vld [vmem:[#allocation10 + $0x510] sm:$0xff]
    %v844 = vld [vmem:[#allocation10 + $0x518] sm:$0xf]
    %v845 = vld [vmem:[#allocation10 + $0x51c] sm:$0xff]
    %v846 = vld [vmem:[#allocation10 + $0x524] sm:$0xf]
    %v847 = vld [vmem:[#allocation10 + $0x528] sm:$0xff]
    %v848 = vld [vmem:[#allocation10 + $0x530] sm:$0xf]
    %v849 = vld [vmem:[#allocation10 + $0x534] sm:$0xff]
    %v850 = vld [vmem:[#allocation10 + $0x53c] sm:$0xf]
    %v851 = vld [vmem:[#allocation10 + $0x540] sm:$0xff]
    %v852 = vld [vmem:[#allocation10 + $0x548] sm:$0xf]
    %v853 = vld [vmem:[#allocation10 + $0x54c] sm:$0xff]
    %v854 = vld [vmem:[#allocation10 + $0x554] sm:$0xf]
    %v855 = vld [vmem:[#allocation10 + $0x558] sm:$0xff]
    %v856 = vld [vmem:[#allocation10 + $0x560] sm:$0xf]
    %v857 = vld [vmem:[#allocation10 + $0x564] sm:$0xff]
    %v858 = vld [vmem:[#allocation10 + $0x56c] sm:$0xf]
    %v859 = vld [vmem:[#allocation10 + $0x570] sm:$0xff]
    %v860 = vld [vmem:[#allocation10 + $0x578] sm:$0xf]
    %v861 = vld [vmem:[#allocation10 + $0x57c] sm:$0xff]
    %v862 = vld [vmem:[#allocation10 + $0x584] sm:$0xf]
    %v863 = vld [vmem:[#allocation10 + $0x588] sm:$0xff]
    %v864 = vld [vmem:[#allocation10 + $0x590] sm:$0xf]
    %v865 = vld [vmem:[#allocation10 + $0x594] sm:$0xff]
    %v866 = vld [vmem:[#allocation10 + $0x59c] sm:$0xf]
    %v867 = vld [vmem:[#allocation10 + $0x5a0] sm:$0xff]
    %v868 = vld [vmem:[#allocation10 + $0x5a8] sm:$0xf]
    %v869 = vld [vmem:[#allocation10 + $0x5ac] sm:$0xff]
    %v870 = vld [vmem:[#allocation10 + $0x5b4] sm:$0xf]
    %v871 = vld [vmem:[#allocation10 + $0x5b8] sm:$0xff]
    %v872 = vld [vmem:[#allocation10 + $0x5c0] sm:$0xf]
    %v873 = vld [vmem:[#allocation10 + $0x5c4] sm:$0xff]
    %v874 = vld [vmem:[#allocation10 + $0x5cc] sm:$0xf]
    %v875 = vld [vmem:[#allocation10 + $0x5d0] sm:$0xff]
    %v876 = vld [vmem:[#allocation10 + $0x5d8] sm:$0xf]
    %v877 = vld [vmem:[#allocation10 + $0x5dc] sm:$0xff]
    %v878 = vld [vmem:[#allocation10 + $0x5e4] sm:$0xf]
    %v879 = vld [vmem:[#allocation10 + $0x5e8] sm:$0xff]
    %v880 = vld [vmem:[#allocation10 + $0x5f0] sm:$0xf]
    %v881 = vld [vmem:[#allocation10 + $0x5f4] sm:$0xff]
    %v882 = vld [vmem:[#allocation10 + $0x5fc] sm:$0xf]
    %v887 = vunpack.c.l.b16 %v751
    %v888 = vunpack.c.h.b16 %v751
    %v889 = vunpack.c.l.b16 %v752
    %v890 = vunpack.c.h.b16 %v752
    %v891 = vunpack.c.l.b16 %v753
    %v892 = vunpack.c.h.b16 %v753
    %v893 = vunpack.c.l.b16 %v754
    %v894 = vunpack.c.h.b16 %v754
    %v895 = vpack.c.b16 %v891, %v887
    %v896 = vpack.c.b16 %v892, %v888
    %v897 = vpack.c.b16 %v893, %v889
    %v898 = vpack.c.b16 %v894, %v890
    %v1031 = vunpack.c.l.b16 %v755
    %v1032 = vunpack.c.h.b16 %v755
    %v1033 = vunpack.c.l.b16 %v756
    %v1034 = vunpack.c.l.b16 %v757
    %v1035 = vunpack.c.h.b16 %v757
    %v1036 = vunpack.c.l.b16 %v758
    %v1037 = vunpack.c.l.b16 %v759
    %v1038 = vunpack.c.h.b16 %v759
    %v1039 = vunpack.c.l.b16 %v760
    %v1040 = vunpack.c.l.b16 %v761
    %v1041 = vunpack.c.h.b16 %v761
    %v1042 = vunpack.c.l.b16 %v762
    %v1043 = vunpack.c.l.b16 %v763
    %v1044 = vunpack.c.h.b16 %v763
    %v1045 = vunpack.c.l.b16 %v764
    %v1046 = vunpack.c.l.b16 %v765
    %v1047 = vunpack.c.h.b16 %v765
    %v1048 = vunpack.c.l.b16 %v766
    %v1049 = vunpack.c.l.b16 %v767
    %v1050 = vunpack.c.h.b16 %v767
    %v1051 = vunpack.c.l.b16 %v768
    %v1052 = vunpack.c.l.b16 %v769
    %v1053 = vunpack.c.h.b16 %v769
    %v1054 = vunpack.c.l.b16 %v770
    %v1055 = vunpack.c.l.b16 %v771
    %v1056 = vunpack.c.h.b16 %v771
    %v1057 = vunpack.c.l.b16 %v772
    %v1058 = vunpack.c.l.b16 %v773
    %v1059 = vunpack.c.h.b16 %v773
    %v1060 = vunpack.c.l.b16 %v774
    %v1061 = vunpack.c.l.b16 %v775
    %v1062 = vunpack.c.h.b16 %v775
    %v1063 = vunpack.c.l.b16 %v776
    %v1064 = vunpack.c.l.b16 %v777
    %v1065 = vunpack.c.h.b16 %v777
    %v1066 = vunpack.c.l.b16 %v778
    %v1067 = vunpack.c.l.b16 %v779
    %v1068 = vunpack.c.h.b16 %v779
    %v1069 = vunpack.c.l.b16 %v780
    %v1070 = vunpack.c.l.b16 %v781
    %v1071 = vunpack.c.h.b16 %v781
    %v1072 = vunpack.c.l.b16 %v782
    %v1073 = vunpack.c.l.b16 %v783
    %v1074 = vunpack.c.h.b16 %v783
    %v1075 = vunpack.c.l.b16 %v784
    %v1076 = vunpack.c.l.b16 %v785
    %v1077 = vunpack.c.h.b16 %v785
    %v1078 = vunpack.c.l.b16 %v786
    %v1079 = vunpack.c.l.b16 %v787
    %v1080 = vunpack.c.h.b16 %v787
    %v1081 = vunpack.c.l.b16 %v788
    %v1082 = vunpack.c.l.b16 %v789
    %v1083 = vunpack.c.h.b16 %v789
    %v1084 = vunpack.c.l.b16 %v790
    %v1085 = vunpack.c.l.b16 %v791
    %v1086 = vunpack.c.h.b16 %v791
    %v1087 = vunpack.c.l.b16 %v792
    %v1088 = vunpack.c.l.b16 %v793
    %v1089 = vunpack.c.h.b16 %v793
    %v1090 = vunpack.c.l.b16 %v794
    %v1091 = vunpack.c.l.b16 %v795
    %v1092 = vunpack.c.h.b16 %v795
    %v1093 = vunpack.c.l.b16 %v796
    %v1094 = vunpack.c.l.b16 %v797
    %v1095 = vunpack.c.h.b16 %v797
    %v1096 = vunpack.c.l.b16 %v798
    %v1097 = vunpack.c.l.b16 %v799
    %v1098 = vunpack.c.h.b16 %v799
    %v1099 = vunpack.c.l.b16 %v800
    %v1100 = vunpack.c.l.b16 %v801
    %v1101 = vunpack.c.h.b16 %v801
    %v1102 = vunpack.c.l.b16 %v802
    %v1103 = vunpack.c.l.b16 %v803
    %v1104 = vunpack.c.h.b16 %v803
    %v1105 = vunpack.c.l.b16 %v804
    %v1106 = vunpack.c.l.b16 %v805
    %v1107 = vunpack.c.h.b16 %v805
    %v1108 = vunpack.c.l.b16 %v806
    %v1109 = vunpack.c.l.b16 %v807
    %v1110 = vunpack.c.h.b16 %v807
    %v1111 = vunpack.c.l.b16 %v808
    %v1112 = vunpack.c.l.b16 %v809
    %v1113 = vunpack.c.h.b16 %v809
    %v1114 = vunpack.c.l.b16 %v810
    %v1115 = vunpack.c.l.b16 %v811
    %v1116 = vunpack.c.h.b16 %v811
    %v1117 = vunpack.c.l.b16 %v812
    %v1118 = vunpack.c.l.b16 %v813
    %v1119 = vunpack.c.h.b16 %v813
    %v1120 = vunpack.c.l.b16 %v814
    %v1121 = vunpack.c.l.b16 %v815
    %v1122 = vunpack.c.h.b16 %v815
    %v1123 = vunpack.c.l.b16 %v816
    %v1124 = vunpack.c.l.b16 %v817
    %v1125 = vunpack.c.h.b16 %v817
    %v1126 = vunpack.c.l.b16 %v818
    %v1127 = vunpack.c.l.b16 %v819
    %v1128 = vunpack.c.h.b16 %v819
    %v1129 = vunpack.c.l.b16 %v820
    %v1130 = vunpack.c.l.b16 %v821
    %v1131 = vunpack.c.h.b16 %v821
    %v1132 = vunpack.c.l.b16 %v822
    %v1133 = vunpack.c.l.b16 %v823
    %v1134 = vunpack.c.h.b16 %v823
    %v1135 = vunpack.c.l.b16 %v824
    %v1136 = vunpack.c.l.b16 %v825
    %v1137 = vunpack.c.h.b16 %v825
    %v1138 = vunpack.c.l.b16 %v826
    %v1139 = vunpack.c.l.b16 %v827
    %v1140 = vunpack.c.h.b16 %v827
    %v1141 = vunpack.c.l.b16 %v828
    %v1142 = vunpack.c.l.b16 %v829
    %v1143 = vunpack.c.h.b16 %v829
    %v1144 = vunpack.c.l.b16 %v830
    %v1145 = vunpack.c.l.b16 %v831
    %v1146 = vunpack.c.h.b16 %v831
    %v1147 = vunpack.c.l.b16 %v832
    %v1148 = vunpack.c.l.b16 %v833
    %v1149 = vunpack.c.h.b16 %v833
    %v1150 = vunpack.c.l.b16 %v834
    %v1151 = vunpack.c.l.b16 %v835
    %v1152 = vunpack.c.h.b16 %v835
    %v1153 = vunpack.c.l.b16 %v836
    %v1154 = vunpack.c.l.b16 %v837
    %v1155 = vunpack.c.h.b16 %v837
    %v1156 = vunpack.c.l.b16 %v838
    %v1157 = vunpack.c.l.b16 %v839
    %v1158 = vunpack.c.h.b16 %v839
    %v1159 = vunpack.c.l.b16 %v840
    %v1160 = vunpack.c.l.b16 %v841
    %v1161 = vunpack.c.h.b16 %v841
    %v1162 = vunpack.c.l.b16 %v842
    %v1163 = vunpack.c.l.b16 %v843
    %v1164 = vunpack.c.h.b16 %v843
    %v1165 = vunpack.c.l.b16 %v844
    %v1166 = vunpack.c.l.b16 %v845
    %v1167 = vunpack.c.h.b16 %v845
    %v1168 = vunpack.c.l.b16 %v846
    %v1169 = vunpack.c.l.b16 %v847
    %v1170 = vunpack.c.h.b16 %v847
    %v1171 = vunpack.c.l.b16 %v848
    %v1172 = vunpack.c.l.b16 %v849
    %v1173 = vunpack.c.h.b16 %v849
    %v1174 = vunpack.c.l.b16 %v850
    %v1175 = vunpack.c.l.b16 %v851
    %v1176 = vunpack.c.h.b16 %v851
    %v1177 = vunpack.c.l.b16 %v852
    %v1178 = vunpack.c.l.b16 %v853
    %v1179 = vunpack.c.h.b16 %v853
    %v1180 = vunpack.c.l.b16 %v854
    %v1181 = vunpack.c.l.b16 %v855
    %v1182 = vunpack.c.h.b16 %v855
    %v1183 = vunpack.c.l.b16 %v856
    %v1184 = vunpack.c.l.b16 %v857
    %v1185 = vunpack.c.h.b16 %v857
    %v1186 = vunpack.c.l.b16 %v858
    %v1187 = vunpack.c.l.b16 %v859
    %v1188 = vunpack.c.h.b16 %v859
    %v1189 = vunpack.c.l.b16 %v860
    %v1190 = vunpack.c.l.b16 %v861
    %v1191 = vunpack.c.h.b16 %v861
    %v1192 = vunpack.c.l.b16 %v862
    %v1193 = vunpack.c.l.b16 %v863
    %v1194 = vunpack.c.h.b16 %v863
    %v1195 = vunpack.c.l.b16 %v864
    %v1196 = vunpack.c.l.b16 %v865
    %v1197 = vunpack.c.h.b16 %v865
    %v1198 = vunpack.c.l.b16 %v866
    %v1199 = vunpack.c.l.b16 %v867
    %v1200 = vunpack.c.h.b16 %v867
    %v1201 = vunpack.c.l.b16 %v868
    %v1202 = vunpack.c.l.b16 %v869
    %v1203 = vunpack.c.h.b16 %v869
    %v1204 = vunpack.c.l.b16 %v870
    %v1205 = vunpack.c.l.b16 %v871
    %v1206 = vunpack.c.h.b16 %v871
    %v1207 = vunpack.c.l.b16 %v872
    %v1208 = vunpack.c.l.b16 %v873
    %v1209 = vunpack.c.h.b16 %v873
    %v1210 = vunpack.c.l.b16 %v874
    %v1211 = vunpack.c.l.b16 %v875
    %v1212 = vunpack.c.h.b16 %v875
    %v1213 = vunpack.c.l.b16 %v876
    %v1214 = vunpack.c.l.b16 %v877
    %v1215 = vunpack.c.h.b16 %v877
    %v1216 = vunpack.c.l.b16 %v878
    %v1217 = vunpack.c.l.b16 %v879
    %v1218 = vunpack.c.h.b16 %v879
    %v1219 = vunpack.c.l.b16 %v880
    %v1220 = vunpack.c.l.b16 %v881
    %v1221 = vunpack.c.h.b16 %v881
    %v1222 = vunpack.c.l.b16 %v882
    %v1223 = vpack.c.b16 %v1034, %v1031
    %v1224 = vpack.c.b16 %v1035, %v1032
    %v1225 = vpack.c.b16 %v1036, %v1033
    %v1226 = vpack.c.b16 %v1040, %v1037
    %v1227 = vpack.c.b16 %v1041, %v1038
    %v1228 = vpack.c.b16 %v1042, %v1039
    %v1229 = vpack.c.b16 %v1046, %v1043
    %v1230 = vpack.c.b16 %v1047, %v1044
    %v1231 = vpack.c.b16 %v1048, %v1045
    %v1232 = vpack.c.b16 %v1052, %v1049
    %v1233 = vpack.c.b16 %v1053, %v1050
    %v1234 = vpack.c.b16 %v1054, %v1051
    %v1235 = vpack.c.b16 %v1058, %v1055
    %v1236 = vpack.c.b16 %v1059, %v1056
    %v1237 = vpack.c.b16 %v1060, %v1057
    %v1238 = vpack.c.b16 %v1064, %v1061
    %v1239 = vpack.c.b16 %v1065, %v1062
    %v1240 = vpack.c.b16 %v1066, %v1063
    %v1241 = vpack.c.b16 %v1070, %v1067
    %v1242 = vpack.c.b16 %v1071, %v1068
    %v1243 = vpack.c.b16 %v1072, %v1069
    %v1244 = vpack.c.b16 %v1076, %v1073
    %v1245 = vpack.c.b16 %v1077, %v1074
    %v1246 = vpack.c.b16 %v1078, %v1075
    %v1247 = vpack.c.b16 %v1082, %v1079
    %v1248 = vpack.c.b16 %v1083, %v1080
    %v1249 = vpack.c.b16 %v1084, %v1081
    %v1250 = vpack.c.b16 %v1088, %v1085
    %v1251 = vpack.c.b16 %v1089, %v1086
    %v1252 = vpack.c.b16 %v1090, %v1087
    %v1253 = vpack.c.b16 %v1094, %v1091
    %v1254 = vpack.c.b16 %v1095, %v1092
    %v1255 = vpack.c.b16 %v1096, %v1093
    %v1256 = vpack.c.b16 %v1100, %v1097
    %v1257 = vpack.c.b16 %v1101, %v1098
    %v1258 = vpack.c.b16 %v1102, %v1099
    %v1259 = vpack.c.b16 %v1106, %v1103
    %v1260 = vpack.c.b16 %v1107, %v1104
    %v1261 = vpack.c.b16 %v1108, %v1105
    %v1262 = vpack.c.b16 %v1112, %v1109
    %v1263 = vpack.c.b16 %v1113, %v1110
    %v1264 = vpack.c.b16 %v1114, %v1111
    %v1265 = vpack.c.b16 %v1118, %v1115
    %v1266 = vpack.c.b16 %v1119, %v1116
    %v1267 = vpack.c.b16 %v1120, %v1117
    %v1268 = vpack.c.b16 %v1124, %v1121
    %v1269 = vpack.c.b16 %v1125, %v1122
    %v1270 = vpack.c.b16 %v1126, %v1123
    %v1271 = vpack.c.b16 %v1130, %v1127
    %v1272 = vpack.c.b16 %v1131, %v1128
    %v1273 = vpack.c.b16 %v1132, %v1129
    %v1274 = vpack.c.b16 %v1136, %v1133
    %v1275 = vpack.c.b16 %v1137, %v1134
    %v1276 = vpack.c.b16 %v1138, %v1135
    %v1277 = vpack.c.b16 %v1142, %v1139
    %v1278 = vpack.c.b16 %v1143, %v1140
    %v1279 = vpack.c.b16 %v1144, %v1141
    %v1280 = vpack.c.b16 %v1148, %v1145
    %v1281 = vpack.c.b16 %v1149, %v1146
    %v1282 = vpack.c.b16 %v1150, %v1147
    %v1283 = vpack.c.b16 %v1154, %v1151
    %v1284 = vpack.c.b16 %v1155, %v1152
    %v1285 = vpack.c.b16 %v1156, %v1153
    %v1286 = vpack.c.b16 %v1160, %v1157
    %v1287 = vpack.c.b16 %v1161, %v1158
    %v1288 = vpack.c.b16 %v1162, %v1159
    %v1289 = vpack.c.b16 %v1166, %v1163
    %v1290 = vpack.c.b16 %v1167, %v1164
    %v1291 = vpack.c.b16 %v1168, %v1165
    %v1292 = vpack.c.b16 %v1172, %v1169
    %v1293 = vpack.c.b16 %v1173, %v1170
    %v1294 = vpack.c.b16 %v1174, %v1171
    %v1295 = vpack.c.b16 %v1178, %v1175
    %v1296 = vpack.c.b16 %v1179, %v1176
    %v1297 = vpack.c.b16 %v1180, %v1177
    %v1298 = vpack.c.b16 %v1184, %v1181
    %v1299 = vpack.c.b16 %v1185, %v1182
    %v1300 = vpack.c.b16 %v1186, %v1183
    %v1301 = vpack.c.b16 %v1190, %v1187
    %v1302 = vpack.c.b16 %v1191, %v1188
    %v1303 = vpack.c.b16 %v1192, %v1189
    %v1304 = vpack.c.b16 %v1196, %v1193
    %v1305 = vpack.c.b16 %v1197, %v1194
    %v1306 = vpack.c.b16 %v1198, %v1195
    %v1307 = vpack.c.b16 %v1202, %v1199
    %v1308 = vpack.c.b16 %v1203, %v1200
    %v1309 = vpack.c.b16 %v1204, %v1201
    %v1310 = vpack.c.b16 %v1208, %v1205
    %v1311 = vpack.c.b16 %v1209, %v1206
    %v1312 = vpack.c.b16 %v1210, %v1207
    %v1313 = vpack.c.b16 %v1214, %v1211
    %v1314 = vpack.c.b16 %v1215, %v1212
    %v1315 = vpack.c.b16 %v1216, %v1213
    %v1316 = vpack.c.b16 %v1220, %v1217
    %v1317 = vpack.c.b16 %v1221, %v1218
    %v1318 = vpack.c.b16 %v1222, %v1219
    %1415 = vmatpush.bf16.msra.mxu0 %v1244
    %1416 = vmatpush.bf16.msra.mxu0 %v1241
    %1417 = vmatpush.bf16.msra.mxu0 %v1238
    %1418 = vmatpush.bf16.msra.mxu0 %v1235
    %1419 = vmatpush.bf16.msra.mxu0 %v1232
    %1420 = vmatpush.bf16.msra.mxu0 %v1229
    %1421 = vmatpush.bf16.msra.mxu0 %v1226
    %1422 = vmatpush.bf16.msra.mxu0 %v1223
    %1423 = vmatmul.bf16.gmra.mxu0 %v895
    %v1424 = vpop.f32.mrf.mxu0
    %v1425 = vadd.f32 0.0, %v1424
    %v1426 = vpop.f32.mrf.mxu0
    %v1427 = vadd.f32 0.0, %v1426
    %1428 = vdwg.mxu0
    %1429 = vmatpush.bf16.msra.mxu0 %v1268
    %1430 = vmatpush.bf16.msra.mxu0 %v1265
    %1431 = vmatpush.bf16.msra.mxu0 %v1262
    %1432 = vmatpush.bf16.msra.mxu0 %v1259
    %1433 = vmatpush.bf16.msra.mxu0 %v1256
    %1434 = vmatpush.bf16.msra.mxu0 %v1253
    %1435 = vmatpush.bf16.msra.mxu0 %v1250
    %1436 = vmatpush.bf16.msra.mxu0 %v1247
    %1437 = vmatmul.bf16.gmra.mxu0 %v896
    %v1438 = vpop.f32.mrf.mxu0
    %v1439 = vadd.f32 %v1425, %v1438
    %v1440 = vpop.f32.mrf.mxu0
    %v1441 = vadd.f32 %v1427, %v1440
    %1442 = vdwg.mxu0
    %1443 = vmatpush.bf16.msra.mxu0 %v1292
    %1444 = vmatpush.bf16.msra.mxu0 %v1289
    %1445 = vmatpush.bf16.msra.mxu0 %v1286
    %1446 = vmatpush.bf16.msra.mxu0 %v1283
    %1447 = vmatpush.bf16.msra.mxu0 %v1280
    %1448 = vmatpush.bf16.msra.mxu0 %v1277
    %1449 = vmatpush.bf16.msra.mxu0 %v1274
    %1450 = vmatpush.bf16.msra.mxu0 %v1271
    %1451 = vmatmul.bf16.gmra.mxu0 %v897
    %v1452 = vpop.f32.mrf.mxu0
    %v1453 = vadd.f32 %v1439, %v1452
    %v1454 = vpop.f32.mrf.mxu0
    %v1455 = vadd.f32 %v1441, %v1454
    %1456 = vdwg.mxu0
    %1457 = vmatpush.bf16.msra.mxu0 %v1316
    %1458 = vmatpush.bf16.msra.mxu0 %v1313
    %1459 = vmatpush.bf16.msra.mxu0 %v1310
    %1460 = vmatpush.bf16.msra.mxu0 %v1307
    %1461 = vmatpush.bf16.msra.mxu0 %v1304
    %1462 = vmatpush.bf16.msra.mxu0 %v1301
    %1463 = vmatpush.bf16.msra.mxu0 %v1298
    %1464 = vmatpush.bf16.msra.mxu0 %v1295
    %1465 = vmatmul.bf16.gmra.mxu0 %v898
    %v1466 = vpop.f32.mrf.mxu0
    %v1467 = vadd.f32 %v1453, %v1466
    %v1468 = vpop.f32.mrf.mxu0
    %v1469 = vadd.f32 %v1455, %v1468
    %1470 = vdwg.mxu0
    %1471 = vmatpush.bf16.msra.mxu0 %v1245
    %1472 = vmatpush.bf16.msra.mxu0 %v1242
    %1473 = vmatpush.bf16.msra.mxu0 %v1239
    %1474 = vmatpush.bf16.msra.mxu0 %v1236
    %1475 = vmatpush.bf16.msra.mxu0 %v1233
    %1476 = vmatpush.bf16.msra.mxu0 %v1230
    %1477 = vmatpush.bf16.msra.mxu0 %v1227
    %1478 = vmatpush.bf16.msra.mxu0 %v1224
    %1479 = vmatmul.bf16.gmra.mxu0 %v895
    %v1480 = vpop.f32.mrf.mxu0
    %v1481 = vadd.f32 0.0, %v1480
    %v1482 = vpop.f32.mrf.mxu0
    %v1483 = vadd.f32 0.0, %v1482
    %1484 = vdwg.mxu0
    %1485 = vmatpush.bf16.msra.mxu0 %v1269
    %1486 = vmatpush.bf16.msra.mxu0 %v1266
    %1487 = vmatpush.bf16.msra.mxu0 %v1263
    %1488 = vmatpush.bf16.msra.mxu0 %v1260
    %1489 = vmatpush.bf16.msra.mxu0 %v1257
    %1490 = vmatpush.bf16.msra.mxu0 %v1254
    %1491 = vmatpush.bf16.msra.mxu0 %v1251
    %1492 = vmatpush.bf16.msra.mxu0 %v1248
    %1493 = vmatmul.bf16.gmra.mxu0 %v896
    %v1494 = vpop.f32.mrf.mxu0
    %v1495 = vadd.f32 %v1481, %v1494
    %v1496 = vpop.f32.mrf.mxu0
    %v1497 = vadd.f32 %v1483, %v1496
    %1498 = vdwg.mxu0
    %1499 = vmatpush.bf16.msra.mxu0 %v1293
    %1500 = vmatpush.bf16.msra.mxu0 %v1290
    %1501 = vmatpush.bf16.msra.mxu0 %v1287
    %1502 = vmatpush.bf16.msra.mxu0 %v1284
    %1503 = vmatpush.bf16.msra.mxu0 %v1281
    %1504 = vmatpush.bf16.msra.mxu0 %v1278
    %1505 = vmatpush.bf16.msra.mxu0 %v1275
    %1506 = vmatpush.bf16.msra.mxu0 %v1272
    %1507 = vmatmul.bf16.gmra.mxu0 %v897
    %v1508 = vpop.f32.mrf.mxu0
    %v1509 = vadd.f32 %v1495, %v1508
    %v1510 = vpop.f32.mrf.mxu0
    %v1511 = vadd.f32 %v1497, %v1510
    %1512 = vdwg.mxu0
    %1513 = vmatpush.bf16.msra.mxu0 %v1317
    %1514 = vmatpush.bf16.msra.mxu0 %v1314
    %1515 = vmatpush.bf16.msra.mxu0 %v1311
    %1516 = vmatpush.bf16.msra.mxu0 %v1308
    %1517 = vmatpush.bf16.msra.mxu0 %v1305
    %1518 = vmatpush.bf16.msra.mxu0 %v1302
    %1519 = vmatpush.bf16.msra.mxu0 %v1299
    %1520 = vmatpush.bf16.msra.mxu0 %v1296
    %1521 = vmatmul.bf16.gmra.mxu0 %v898
    %v1522 = vpop.f32.mrf.mxu0
    %v1523 = vadd.f32 %v1509, %v1522
    %v1524 = vpop.f32.mrf.mxu0
    %v1525 = vadd.f32 %v1511, %v1524
    %1526 = vdwg.mxu0
    %1527 = vmatpush.bf16.msra.mxu0 %v1246
    %1528 = vmatpush.bf16.msra.mxu0 %v1243
    %1529 = vmatpush.bf16.msra.mxu0 %v1240
    %1530 = vmatpush.bf16.msra.mxu0 %v1237
    %1531 = vmatpush.bf16.msra.mxu0 %v1234
    %1532 = vmatpush.bf16.msra.mxu0 %v1231
    %1533 = vmatpush.bf16.msra.mxu0 %v1228
    %1534 = vmatpush.bf16.msra.mxu0 %v1225
    %1535 = vmatmul.bf16.gmra.mxu0 %v895
    %v1536 = vpop.f32.mrf.mxu0
    %v1537 = vadd.f32 0.0, %v1536
    %v1538 = vpop.f32.mrf.mxu0
    %v1539 = vadd.f32 0.0, %v1538
    %1540 = vdwg.mxu0
    %1541 = vmatpush.bf16.msra.mxu0 %v1270
    %1542 = vmatpush.bf16.msra.mxu0 %v1267
    %1543 = vmatpush.bf16.msra.mxu0 %v1264
    %1544 = vmatpush.bf16.msra.mxu0 %v1261
    %1545 = vmatpush.bf16.msra.mxu0 %v1258
    %1546 = vmatpush.bf16.msra.mxu0 %v1255
    %1547 = vmatpush.bf16.msra.mxu0 %v1252
    %1548 = vmatpush.bf16.msra.mxu0 %v1249
    %1549 = vmatmul.bf16.gmra.mxu0 %v896
    %v1550 = vpop.f32.mrf.mxu0
    %v1551 = vadd.f32 %v1537, %v1550
    %v1552 = vpop.f32.mrf.mxu0
    %v1553 = vadd.f32 %v1539, %v1552
    %1554 = vdwg.mxu0
    %1555 = vmatpush.bf16.msra.mxu0 %v1294
    %1556 = vmatpush.bf16.msra.mxu0 %v1291
    %1557 = vmatpush.bf16.msra.mxu0 %v1288
    %1558 = vmatpush.bf16.msra.mxu0 %v1285
    %1559 = vmatpush.bf16.msra.mxu0 %v1282
    %1560 = vmatpush.bf16.msra.mxu0 %v1279
    %1561 = vmatpush.bf16.msra.mxu0 %v1276
    %1562 = vmatpush.bf16.msra.mxu0 %v1273
    %1563 = vmatmul.bf16.gmra.mxu0 %v897
    %v1564 = vpop.f32.mrf.mxu0
    %v1565 = vadd.f32 %v1551, %v1564
    %v1566 = vpop.f32.mrf.mxu0
    %v1567 = vadd.f32 %v1553, %v1566
    %1568 = vdwg.mxu0
    %1569 = vmatpush.bf16.msra.mxu0 %v1318
    %1570 = vmatpush.bf16.msra.mxu0 %v1315
    %1571 = vmatpush.bf16.msra.mxu0 %v1312
    %1572 = vmatpush.bf16.msra.mxu0 %v1309
    %1573 = vmatpush.bf16.msra.mxu0 %v1306
    %1574 = vmatpush.bf16.msra.mxu0 %v1303
    %1575 = vmatpush.bf16.msra.mxu0 %v1300
    %1576 = vmatpush.bf16.msra.mxu0 %v1297
    %1577 = vmatmul.bf16.gmra.mxu0 %v898
    %v1578 = vpop.f32.mrf.mxu0
    %v1579 = vadd.f32 %v1565, %v1578
    %v1580 = vpop.f32.mrf.mxu0
    %v1581 = vadd.f32 %v1567, %v1580
    %1582 = vdwg.mxu0
    %v1587 = vunpack.c.l.b16 %v619
    %v1588 = vunpack.c.h.b16 %v619
    %v1589 = vunpack.c.l.b16 %v620
    %v1590 = vunpack.c.h.b16 %v620
    %v1591 = vunpack.c.l.b16 %v621
    %v1592 = vunpack.c.h.b16 %v621
    %v1593 = vunpack.c.l.b16 %v622
    %v1594 = vunpack.c.h.b16 %v622
    %v1595 = vpack.c.b16 %v1591, %v1587
    %v1596 = vpack.c.b16 %v1592, %v1588
    %v1597 = vpack.c.b16 %v1593, %v1589
    %v1598 = vpack.c.b16 %v1594, %v1590
    %v1731 = vunpack.c.l.b16 %v623
    %v1732 = vunpack.c.h.b16 %v623
    %v1733 = vunpack.c.l.b16 %v624
    %v1734 = vunpack.c.l.b16 %v625
    %v1735 = vunpack.c.h.b16 %v625
    %v1736 = vunpack.c.l.b16 %v626
    %v1737 = vunpack.c.l.b16 %v627
    %v1738 = vunpack.c.h.b16 %v627
    %v1739 = vunpack.c.l.b16 %v628
    %v1740 = vunpack.c.l.b16 %v629
    %v1741 = vunpack.c.h.b16 %v629
    %v1742 = vunpack.c.l.b16 %v630
    %v1743 = vunpack.c.l.b16 %v631
    %v1744 = vunpack.c.h.b16 %v631
    %v1745 = vunpack.c.l.b16 %v632
    %v1746 = vunpack.c.l.b16 %v633
    %v1747 = vunpack.c.h.b16 %v633
    %v1748 = vunpack.c.l.b16 %v634
    %v1749 = vunpack.c.l.b16 %v635
    %v1750 = vunpack.c.h.b16 %v635
    %v1751 = vunpack.c.l.b16 %v636
    %v1752 = vunpack.c.l.b16 %v637
    %v1753 = vunpack.c.h.b16 %v637
    %v1754 = vunpack.c.l.b16 %v638
    %v1755 = vunpack.c.l.b16 %v639
    %v1756 = vunpack.c.h.b16 %v639
    %v1757 = vunpack.c.l.b16 %v640
    %v1758 = vunpack.c.l.b16 %v641
    %v1759 = vunpack.c.h.b16 %v641
    %v1760 = vunpack.c.l.b16 %v642
    %v1761 = vunpack.c.l.b16 %v643
    %v1762 = vunpack.c.h.b16 %v643
    %v1763 = vunpack.c.l.b16 %v644
    %v1764 = vunpack.c.l.b16 %v645
    %v1765 = vunpack.c.h.b16 %v645
    %v1766 = vunpack.c.l.b16 %v646
    %v1767 = vunpack.c.l.b16 %v647
    %v1768 = vunpack.c.h.b16 %v647
    %v1769 = vunpack.c.l.b16 %v648
    %v1770 = vunpack.c.l.b16 %v649
    %v1771 = vunpack.c.h.b16 %v649
    %v1772 = vunpack.c.l.b16 %v650
    %v1773 = vunpack.c.l.b16 %v651
    %v1774 = vunpack.c.h.b16 %v651
    %v1775 = vunpack.c.l.b16 %v652
    %v1776 = vunpack.c.l.b16 %v653
    %v1777 = vunpack.c.h.b16 %v653
    %v1778 = vunpack.c.l.b16 %v654
    %v1779 = vunpack.c.l.b16 %v655
    %v1780 = vunpack.c.h.b16 %v655
    %v1781 = vunpack.c.l.b16 %v656
    %v1782 = vunpack.c.l.b16 %v657
    %v1783 = vunpack.c.h.b16 %v657
    %v1784 = vunpack.c.l.b16 %v658
    %v1785 = vunpack.c.l.b16 %v659
    %v1786 = vunpack.c.h.b16 %v659
    %v1787 = vunpack.c.l.b16 %v660
    %v1788 = vunpack.c.l.b16 %v661
    %v1789 = vunpack.c.h.b16 %v661
    %v1790 = vunpack.c.l.b16 %v662
    %v1791 = vunpack.c.l.b16 %v663
    %v1792 = vunpack.c.h.b16 %v663
    %v1793 = vunpack.c.l.b16 %v664
    %v1794 = vunpack.c.l.b16 %v665
    %v1795 = vunpack.c.h.b16 %v665
    %v1796 = vunpack.c.l.b16 %v666
    %v1797 = vunpack.c.l.b16 %v667
    %v1798 = vunpack.c.h.b16 %v667
    %v1799 = vunpack.c.l.b16 %v668
    %v1800 = vunpack.c.l.b16 %v669
    %v1801 = vunpack.c.h.b16 %v669
    %v1802 = vunpack.c.l.b16 %v670
    %v1803 = vunpack.c.l.b16 %v671
    %v1804 = vunpack.c.h.b16 %v671
    %v1805 = vunpack.c.l.b16 %v672
    %v1806 = vunpack.c.l.b16 %v673
    %v1807 = vunpack.c.h.b16 %v673
    %v1808 = vunpack.c.l.b16 %v674
    %v1809 = vunpack.c.l.b16 %v675
    %v1810 = vunpack.c.h.b16 %v675
    %v1811 = vunpack.c.l.b16 %v676
    %v1812 = vunpack.c.l.b16 %v677
    %v1813 = vunpack.c.h.b16 %v677
    %v1814 = vunpack.c.l.b16 %v678
    %v1815 = vunpack.c.l.b16 %v679
    %v1816 = vunpack.c.h.b16 %v679
    %v1817 = vunpack.c.l.b16 %v680
    %v1818 = vunpack.c.l.b16 %v681
    %v1819 = vunpack.c.h.b16 %v681
    %v1820 = vunpack.c.l.b16 %v682
    %v1821 = vunpack.c.l.b16 %v683
    %v1822 = vunpack.c.h.b16 %v683
    %v1823 = vunpack.c.l.b16 %v684
    %v1824 = vunpack.c.l.b16 %v685
    %v1825 = vunpack.c.h.b16 %v685
    %v1826 = vunpack.c.l.b16 %v686
    %v1827 = vunpack.c.l.b16 %v687
    %v1828 = vunpack.c.h.b16 %v687
    %v1829 = vunpack.c.l.b16 %v688
    %v1830 = vunpack.c.l.b16 %v689
    %v1831 = vunpack.c.h.b16 %v689
    %v1832 = vunpack.c.l.b16 %v690
    %v1833 = vunpack.c.l.b16 %v691
    %v1834 = vunpack.c.h.b16 %v691
    %v1835 = vunpack.c.l.b16 %v692
    %v1836 = vunpack.c.l.b16 %v693
    %v1837 = vunpack.c.h.b16 %v693
    %v1838 = vunpack.c.l.b16 %v694
    %v1839 = vunpack.c.l.b16 %v695
    %v1840 = vunpack.c.h.b16 %v695
    %v1841 = vunpack.c.l.b16 %v696
    %v1842 = vunpack.c.l.b16 %v697
    %v1843 = vunpack.c.h.b16 %v697
    %v1844 = vunpack.c.l.b16 %v698
    %v1845 = vunpack.c.l.b16 %v699
    %v1846 = vunpack.c.h.b16 %v699
    %v1847 = vunpack.c.l.b16 %v700
    %v1848 = vunpack.c.l.b16 %v701
    %v1849 = vunpack.c.h.b16 %v701
    %v1850 = vunpack.c.l.b16 %v702
    %v1851 = vunpack.c.l.b16 %v703
    %v1852 = vunpack.c.h.b16 %v703
    %v1853 = vunpack.c.l.b16 %v704
    %v1854 = vunpack.c.l.b16 %v705
    %v1855 = vunpack.c.h.b16 %v705
    %v1856 = vunpack.c.l.b16 %v706
    %v1857 = vunpack.c.l.b16 %v707
    %v1858 = vunpack.c.h.b16 %v707
    %v1859 = vunpack.c.l.b16 %v708
    %v1860 = vunpack.c.l.b16 %v709
    %v1861 = vunpack.c.h.b16 %v709
    %v1862 = vunpack.c.l.b16 %v710
    %v1863 = vunpack.c.l.b16 %v711
    %v1864 = vunpack.c.h.b16 %v711
    %v1865 = vunpack.c.l.b16 %v712
    %v1866 = vunpack.c.l.b16 %v713
    %v1867 = vunpack.c.h.b16 %v713
    %v1868 = vunpack.c.l.b16 %v714
    %v1869 = vunpack.c.l.b16 %v715
    %v1870 = vunpack.c.h.b16 %v715
    %v1871 = vunpack.c.l.b16 %v716
    %v1872 = vunpack.c.l.b16 %v717
    %v1873 = vunpack.c.h.b16 %v717
    %v1874 = vunpack.c.l.b16 %v718
    %v1875 = vunpack.c.l.b16 %v719
    %v1876 = vunpack.c.h.b16 %v719
    %v1877 = vunpack.c.l.b16 %v720
    %v1878 = vunpack.c.l.b16 %v721
    %v1879 = vunpack.c.h.b16 %v721
    %v1880 = vunpack.c.l.b16 %v722
    %v1881 = vunpack.c.l.b16 %v723
    %v1882 = vunpack.c.h.b16 %v723
    %v1883 = vunpack.c.l.b16 %v724
    %v1884 = vunpack.c.l.b16 %v725
    %v1885 = vunpack.c.h.b16 %v725
    %v1886 = vunpack.c.l.b16 %v726
    %v1887 = vunpack.c.l.b16 %v727
    %v1888 = vunpack.c.h.b16 %v727
    %v1889 = vunpack.c.l.b16 %v728
    %v1890 = vunpack.c.l.b16 %v729
    %v1891 = vunpack.c.h.b16 %v729
    %v1892 = vunpack.c.l.b16 %v730
    %v1893 = vunpack.c.l.b16 %v731
    %v1894 = vunpack.c.h.b16 %v731
    %v1895 = vunpack.c.l.b16 %v732
    %v1896 = vunpack.c.l.b16 %v733
    %v1897 = vunpack.c.h.b16 %v733
    %v1898 = vunpack.c.l.b16 %v734
    %v1899 = vunpack.c.l.b16 %v735
    %v1900 = vunpack.c.h.b16 %v735
    %v1901 = vunpack.c.l.b16 %v736
    %v1902 = vunpack.c.l.b16 %v737
    %v1903 = vunpack.c.h.b16 %v737
    %v1904 = vunpack.c.l.b16 %v738
    %v1905 = vunpack.c.l.b16 %v739
    %v1906 = vunpack.c.h.b16 %v739
    %v1907 = vunpack.c.l.b16 %v740
    %v1908 = vunpack.c.l.b16 %v741
    %v1909 = vunpack.c.h.b16 %v741
    %v1910 = vunpack.c.l.b16 %v742
    %v1911 = vunpack.c.l.b16 %v743
    %v1912 = vunpack.c.h.b16 %v743
    %v1913 = vunpack.c.l.b16 %v744
    %v1914 = vunpack.c.l.b16 %v745
    %v1915 = vunpack.c.h.b16 %v745
    %v1916 = vunpack.c.l.b16 %v746
    %v1917 = vunpack.c.l.b16 %v747
    %v1918 = vunpack.c.h.b16 %v747
    %v1919 = vunpack.c.l.b16 %v748
    %v1920 = vunpack.c.l.b16 %v749
    %v1921 = vunpack.c.h.b16 %v749
    %v1922 = vunpack.c.l.b16 %v750
    %v1923 = vpack.c.b16 %v1734, %v1731
    %v1924 = vpack.c.b16 %v1735, %v1732
    %v1925 = vpack.c.b16 %v1736, %v1733
    %v1926 = vpack.c.b16 %v1740, %v1737
    %v1927 = vpack.c.b16 %v1741, %v1738
    %v1928 = vpack.c.b16 %v1742, %v1739
    %v1929 = vpack.c.b16 %v1746, %v1743
    %v1930 = vpack.c.b16 %v1747, %v1744
    %v1931 = vpack.c.b16 %v1748, %v1745
    %v1932 = vpack.c.b16 %v1752, %v1749
    %v1933 = vpack.c.b16 %v1753, %v1750
    %v1934 = vpack.c.b16 %v1754, %v1751
    %v1935 = vpack.c.b16 %v1758, %v1755
    %v1936 = vpack.c.b16 %v1759, %v1756
    %v1937 = vpack.c.b16 %v1760, %v1757
    %v1938 = vpack.c.b16 %v1764, %v1761
    %v1939 = vpack.c.b16 %v1765, %v1762
    %v1940 = vpack.c.b16 %v1766, %v1763
    %v1941 = vpack.c.b16 %v1770, %v1767
    %v1942 = vpack.c.b16 %v1771, %v1768
    %v1943 = vpack.c.b16 %v1772, %v1769
    %v1944 = vpack.c.b16 %v1776, %v1773
    %v1945 = vpack.c.b16 %v1777, %v1774
    %v1946 = vpack.c.b16 %v1778, %v1775
    %v1947 = vpack.c.b16 %v1782, %v1779
    %v1948 = vpack.c.b16 %v1783, %v1780
    %v1949 = vpack.c.b16 %v1784, %v1781
    %v1950 = vpack.c.b16 %v1788, %v1785
    %v1951 = vpack.c.b16 %v1789, %v1786
    %v1952 = vpack.c.b16 %v1790, %v1787
    %v1953 = vpack.c.b16 %v1794, %v1791
    %v1954 = vpack.c.b16 %v1795, %v1792
    %v1955 = vpack.c.b16 %v1796, %v1793
    %v1956 = vpack.c.b16 %v1800, %v1797
    %v1957 = vpack.c.b16 %v1801, %v1798
    %v1958 = vpack.c.b16 %v1802, %v1799
    %v1959 = vpack.c.b16 %v1806, %v1803
    %v1960 = vpack.c.b16 %v1807, %v1804
    %v1961 = vpack.c.b16 %v1808, %v1805
    %v1962 = vpack.c.b16 %v1812, %v1809
    %v1963 = vpack.c.b16 %v1813, %v1810
    %v1964 = vpack.c.b16 %v1814, %v1811
    %v1965 = vpack.c.b16 %v1818, %v1815
    %v1966 = vpack.c.b16 %v1819, %v1816
    %v1967 = vpack.c.b16 %v1820, %v1817
    %v1968 = vpack.c.b16 %v1824, %v1821
    %v1969 = vpack.c.b16 %v1825, %v1822
    %v1970 = vpack.c.b16 %v1826, %v1823
    %v1971 = vpack.c.b16 %v1830, %v1827
    %v1972 = vpack.c.b16 %v1831, %v1828
    %v1973 = vpack.c.b16 %v1832, %v1829
    %v1974 = vpack.c.b16 %v1836, %v1833
    %v1975 = vpack.c.b16 %v1837, %v1834
    %v1976 = vpack.c.b16 %v1838, %v1835
    %v1977 = vpack.c.b16 %v1842, %v1839
    %v1978 = vpack.c.b16 %v1843, %v1840
    %v1979 = vpack.c.b16 %v1844, %v1841
    %v1980 = vpack.c.b16 %v1848, %v1845
    %v1981 = vpack.c.b16 %v1849, %v1846
    %v1982 = vpack.c.b16 %v1850, %v1847
    %v1983 = vpack.c.b16 %v1854, %v1851
    %v1984 = vpack.c.b16 %v1855, %v1852
    %v1985 = vpack.c.b16 %v1856, %v1853
    %v1986 = vpack.c.b16 %v1860, %v1857
    %v1987 = vpack.c.b16 %v1861, %v1858
    %v1988 = vpack.c.b16 %v1862, %v1859
    %v1989 = vpack.c.b16 %v1866, %v1863
    %v1990 = vpack.c.b16 %v1867, %v1864
    %v1991 = vpack.c.b16 %v1868, %v1865
    %v1992 = vpack.c.b16 %v1872, %v1869
    %v1993 = vpack.c.b16 %v1873, %v1870
    %v1994 = vpack.c.b16 %v1874, %v1871
    %v1995 = vpack.c.b16 %v1878, %v1875
    %v1996 = vpack.c.b16 %v1879, %v1876
    %v1997 = vpack.c.b16 %v1880, %v1877
    %v1998 = vpack.c.b16 %v1884, %v1881
    %v1999 = vpack.c.b16 %v1885, %v1882
    %v2000 = vpack.c.b16 %v1886, %v1883
    %v2001 = vpack.c.b16 %v1890, %v1887
    %v2002 = vpack.c.b16 %v1891, %v1888
    %v2003 = vpack.c.b16 %v1892, %v1889
    %v2004 = vpack.c.b16 %v1896, %v1893
    %v2005 = vpack.c.b16 %v1897, %v1894
    %v2006 = vpack.c.b16 %v1898, %v1895
    %v2007 = vpack.c.b16 %v1902, %v1899
    %v2008 = vpack.c.b16 %v1903, %v1900
    %v2009 = vpack.c.b16 %v1904, %v1901
    %v2010 = vpack.c.b16 %v1908, %v1905
    %v2011 = vpack.c.b16 %v1909, %v1906
    %v2012 = vpack.c.b16 %v1910, %v1907
    %v2013 = vpack.c.b16 %v1914, %v1911
    %v2014 = vpack.c.b16 %v1915, %v1912
    %v2015 = vpack.c.b16 %v1916, %v1913
    %v2016 = vpack.c.b16 %v1920, %v1917
    %v2017 = vpack.c.b16 %v1921, %v1918
    %v2018 = vpack.c.b16 %v1922, %v1919
    %2115 = vmatpush.bf16.msra.mxu0 %v1944
    %2116 = vmatpush.bf16.msra.mxu0 %v1941
    %2117 = vmatpush.bf16.msra.mxu0 %v1938
    %2118 = vmatpush.bf16.msra.mxu0 %v1935
    %2119 = vmatpush.bf16.msra.mxu0 %v1932
    %2120 = vmatpush.bf16.msra.mxu0 %v1929
    %2121 = vmatpush.bf16.msra.mxu0 %v1926
    %2122 = vmatpush.bf16.msra.mxu0 %v1923
    %2123 = vmatmul.bf16.gmra.mxu0 %v1595
    %v2124 = vpop.f32.mrf.mxu0
    %v2125 = vadd.f32 %v1467, %v2124
    %v2126 = vpop.f32.mrf.mxu0
    %v2127 = vadd.f32 %v1469, %v2126
    %2128 = vdwg.mxu0
    %2129 = vmatpush.bf16.msra.mxu0 %v1968
    %2130 = vmatpush.bf16.msra.mxu0 %v1965
    %2131 = vmatpush.bf16.msra.mxu0 %v1962
    %2132 = vmatpush.bf16.msra.mxu0 %v1959
    %2133 = vmatpush.bf16.msra.mxu0 %v1956
    %2134 = vmatpush.bf16.msra.mxu0 %v1953
    %2135 = vmatpush.bf16.msra.mxu0 %v1950
    %2136 = vmatpush.bf16.msra.mxu0 %v1947
    %2137 = vmatmul.bf16.gmra.mxu0 %v1596
    %v2138 = vpop.f32.mrf.mxu0
    %v2139 = vadd.f32 %v2125, %v2138
    %v2140 = vpop.f32.mrf.mxu0
    %v2141 = vadd.f32 %v2127, %v2140
    %2142 = vdwg.mxu0
    %2143 = vmatpush.bf16.msra.mxu0 %v1992
    %2144 = vmatpush.bf16.msra.mxu0 %v1989
    %2145 = vmatpush.bf16.msra.mxu0 %v1986
    %2146 = vmatpush.bf16.msra.mxu0 %v1983
    %2147 = vmatpush.bf16.msra.mxu0 %v1980
    %2148 = vmatpush.bf16.msra.mxu0 %v1977
    %2149 = vmatpush.bf16.msra.mxu0 %v1974
    %2150 = vmatpush.bf16.msra.mxu0 %v1971
    %2151 = vmatmul.bf16.gmra.mxu0 %v1597
    %v2152 = vpop.f32.mrf.mxu0
    %v2153 = vadd.f32 %v2139, %v2152
    %v2154 = vpop.f32.mrf.mxu0
    %v2155 = vadd.f32 %v2141, %v2154
    %2156 = vdwg.mxu0
    %2157 = vmatpush.bf16.msra.mxu0 %v2016
    %2158 = vmatpush.bf16.msra.mxu0 %v2013
    %2159 = vmatpush.bf16.msra.mxu0 %v2010
    %2160 = vmatpush.bf16.msra.mxu0 %v2007
    %2161 = vmatpush.bf16.msra.mxu0 %v2004
    %2162 = vmatpush.bf16.msra.mxu0 %v2001
    %2163 = vmatpush.bf16.msra.mxu0 %v1998
    %2164 = vmatpush.bf16.msra.mxu0 %v1995
    %2165 = vmatmul.bf16.gmra.mxu0 %v1598
    %v2166 = vpop.f32.mrf.mxu0
    %v2167 = vadd.f32 %v2153, %v2166
    %v2168 = vpop.f32.mrf.mxu0
    %v2169 = vadd.f32 %v2155, %v2168
    %2170 = vdwg.mxu0
    %2171 = vmatpush.bf16.msra.mxu0 %v1945
    %2172 = vmatpush.bf16.msra.mxu0 %v1942
    %2173 = vmatpush.bf16.msra.mxu0 %v1939
    %2174 = vmatpush.bf16.msra.mxu0 %v1936
    %2175 = vmatpush.bf16.msra.mxu0 %v1933
    %2176 = vmatpush.bf16.msra.mxu0 %v1930
    %2177 = vmatpush.bf16.msra.mxu0 %v1927
    %2178 = vmatpush.bf16.msra.mxu0 %v1924
    %2179 = vmatmul.bf16.gmra.mxu0 %v1595
    %v2180 = vpop.f32.mrf.mxu0
    %v2181 = vadd.f32 %v1523, %v2180
    %v2182 = vpop.f32.mrf.mxu0
    %v2183 = vadd.f32 %v1525, %v2182
    %2184 = vdwg.mxu0
    %2185 = vmatpush.bf16.msra.mxu0 %v1969
    %2186 = vmatpush.bf16.msra.mxu0 %v1966
    %2187 = vmatpush.bf16.msra.mxu0 %v1963
    %2188 = vmatpush.bf16.msra.mxu0 %v1960
    %2189 = vmatpush.bf16.msra.mxu0 %v1957
    %2190 = vmatpush.bf16.msra.mxu0 %v1954
    %2191 = vmatpush.bf16.msra.mxu0 %v1951
    %2192 = vmatpush.bf16.msra.mxu0 %v1948
    %2193 = vmatmul.bf16.gmra.mxu0 %v1596
    %v2194 = vpop.f32.mrf.mxu0
    %v2195 = vadd.f32 %v2181, %v2194
    %v2196 = vpop.f32.mrf.mxu0
    %v2197 = vadd.f32 %v2183, %v2196
    %2198 = vdwg.mxu0
    %2199 = vmatpush.bf16.msra.mxu0 %v1993
    %2200 = vmatpush.bf16.msra.mxu0 %v1990
    %2201 = vmatpush.bf16.msra.mxu0 %v1987
    %2202 = vmatpush.bf16.msra.mxu0 %v1984
    %2203 = vmatpush.bf16.msra.mxu0 %v1981
    %2204 = vmatpush.bf16.msra.mxu0 %v1978
    %2205 = vmatpush.bf16.msra.mxu0 %v1975
    %2206 = vmatpush.bf16.msra.mxu0 %v1972
    %2207 = vmatmul.bf16.gmra.mxu0 %v1597
    %v2208 = vpop.f32.mrf.mxu0
    %v2209 = vadd.f32 %v2195, %v2208
    %v2210 = vpop.f32.mrf.mxu0
    %v2211 = vadd.f32 %v2197, %v2210
    %2212 = vdwg.mxu0
    %2213 = vmatpush.bf16.msra.mxu0 %v2017
    %2214 = vmatpush.bf16.msra.mxu0 %v2014
    %2215 = vmatpush.bf16.msra.mxu0 %v2011
    %2216 = vmatpush.bf16.msra.mxu0 %v2008
    %2217 = vmatpush.bf16.msra.mxu0 %v2005
    %2218 = vmatpush.bf16.msra.mxu0 %v2002
    %2219 = vmatpush.bf16.msra.mxu0 %v1999
    %2220 = vmatpush.bf16.msra.mxu0 %v1996
    %2221 = vmatmul.bf16.gmra.mxu0 %v1598
    %v2222 = vpop.f32.mrf.mxu0
    %v2223 = vadd.f32 %v2209, %v2222
    %v2224 = vpop.f32.mrf.mxu0
    %v2225 = vadd.f32 %v2211, %v2224
    %2226 = vdwg.mxu0
    %2227 = vmatpush.bf16.msra.mxu0 %v1946
    %2228 = vmatpush.bf16.msra.mxu0 %v1943
    %2229 = vmatpush.bf16.msra.mxu0 %v1940
    %2230 = vmatpush.bf16.msra.mxu0 %v1937
    %2231 = vmatpush.bf16.msra.mxu0 %v1934
    %2232 = vmatpush.bf16.msra.mxu0 %v1931
    %2233 = vmatpush.bf16.msra.mxu0 %v1928
    %2234 = vmatpush.bf16.msra.mxu0 %v1925
    %2235 = vmatmul.bf16.gmra.mxu0 %v1595
    %v2236 = vpop.f32.mrf.mxu0
    %v2237 = vadd.f32 %v1579, %v2236
    %v2238 = vpop.f32.mrf.mxu0
    %v2239 = vadd.f32 %v1581, %v2238
    %2240 = vdwg.mxu0
    %2241 = vmatpush.bf16.msra.mxu0 %v1970
    %2242 = vmatpush.bf16.msra.mxu0 %v1967
    %2243 = vmatpush.bf16.msra.mxu0 %v1964
    %2244 = vmatpush.bf16.msra.mxu0 %v1961
    %2245 = vmatpush.bf16.msra.mxu0 %v1958
    %2246 = vmatpush.bf16.msra.mxu0 %v1955
    %2247 = vmatpush.bf16.msra.mxu0 %v1952
    %2248 = vmatpush.bf16.msra.mxu0 %v1949
    %2249 = vmatmul.bf16.gmra.mxu0 %v1596
    %v2250 = vpop.f32.mrf.mxu0
    %v2251 = vadd.f32 %v2237, %v2250
    %v2252 = vpop.f32.mrf.mxu0
    %v2253 = vadd.f32 %v2239, %v2252
    %2254 = vdwg.mxu0
    %2255 = vmatpush.bf16.msra.mxu0 %v1994
    %2256 = vmatpush.bf16.msra.mxu0 %v1991
    %2257 = vmatpush.bf16.msra.mxu0 %v1988
    %2258 = vmatpush.bf16.msra.mxu0 %v1985
    %2259 = vmatpush.bf16.msra.mxu0 %v1982
    %2260 = vmatpush.bf16.msra.mxu0 %v1979
    %2261 = vmatpush.bf16.msra.mxu0 %v1976
    %2262 = vmatpush.bf16.msra.mxu0 %v1973
    %2263 = vmatmul.bf16.gmra.mxu0 %v1597
    %v2264 = vpop.f32.mrf.mxu0
    %v2265 = vadd.f32 %v2251, %v2264
    %v2266 = vpop.f32.mrf.mxu0
    %v2267 = vadd.f32 %v2253, %v2266
    %2268 = vdwg.mxu0
    %2269 = vmatpush.bf16.msra.mxu0 %v2018
    %2270 = vmatpush.bf16.msra.mxu0 %v2015
    %2271 = vmatpush.bf16.msra.mxu0 %v2012
    %2272 = vmatpush.bf16.msra.mxu0 %v2009
    %2273 = vmatpush.bf16.msra.mxu0 %v2006
    %2274 = vmatpush.bf16.msra.mxu0 %v2003
    %2275 = vmatpush.bf16.msra.mxu0 %v2000
    %2276 = vmatpush.bf16.msra.mxu0 %v1997
    %2277 = vmatmul.bf16.gmra.mxu0 %v1598
    %v2278 = vpop.f32.mrf.mxu0
    %v2279 = vadd.f32 %v2265, %v2278
    %v2280 = vpop.f32.mrf.mxu0
    %v2281 = vadd.f32 %v2267, %v2280
    %2282 = vdwg.mxu0
    %v2283 = vld [vmem:[#allocation3] sm:$0xee]
    %v2284 = vld [vmem:[#allocation3 + $0x8] sm:$0xee]
    %v2285 = vld [vmem:[#allocation3 + $0x10] sm:$0x77]
    %v2286 = vld [vmem:[#allocation3 + $0x18] sm:$0x77]
    %v2287 = vld [vmem:[#allocation10 + $0x600] sm:$0xff]
    %v2288 = vld [vmem:[#allocation10 + $0x608] sm:$0xf]
    %v2289 = vld [vmem:[#allocation10 + $0x60c] sm:$0xff]
    %v2290 = vld [vmem:[#allocation10 + $0x614] sm:$0xf]
    %v2291 = vld [vmem:[#allocation10 + $0x618] sm:$0xff]
    %v2292 = vld [vmem:[#allocation10 + $0x620] sm:$0xf]
    %v2293 = vld [vmem:[#allocation10 + $0x624] sm:$0xff]
    %v2294 = vld [vmem:[#allocation10 + $0x62c] sm:$0xf]
    %v2295 = vld [vmem:[#allocation10 + $0x630] sm:$0xff]
    %v2296 = vld [vmem:[#allocation10 + $0x638] sm:$0xf]
    %v2297 = vld [vmem:[#allocation10 + $0x63c] sm:$0xff]
    %v2298 = vld [vmem:[#allocation10 + $0x644] sm:$0xf]
    %v2299 = vld [vmem:[#allocation10 + $0x648] sm:$0xff]
    %v2300 = vld [vmem:[#allocation10 + $0x650] sm:$0xf]
    %v2301 = vld [vmem:[#allocation10 + $0x654] sm:$0xff]
    %v2302 = vld [vmem:[#allocation10 + $0x65c] sm:$0xf]
    %v2303 = vld [vmem:[#allocation10 + $0x660] sm:$0xff]
    %v2304 = vld [vmem:[#allocation10 + $0x668] sm:$0xf]
    %v2305 = vld [vmem:[#allocation10 + $0x66c] sm:$0xff]
    %v2306 = vld [vmem:[#allocation10 + $0x674] sm:$0xf]
    %v2307 = vld [vmem:[#allocation10 + $0x678] sm:$0xff]
    %v2308 = vld [vmem:[#allocation10 + $0x680] sm:$0xf]
    %v2309 = vld [vmem:[#allocation10 + $0x684] sm:$0xff]
    %v2310 = vld [vmem:[#allocation10 + $0x68c] sm:$0xf]
    %v2311 = vld [vmem:[#allocation10 + $0x690] sm:$0xff]
    %v2312 = vld [vmem:[#allocation10 + $0x698] sm:$0xf]
    %v2313 = vld [vmem:[#allocation10 + $0x69c] sm:$0xff]
    %v2314 = vld [vmem:[#allocation10 + $0x6a4] sm:$0xf]
    %v2315 = vld [vmem:[#allocation10 + $0x6a8] sm:$0xff]
    %v2316 = vld [vmem:[#allocation10 + $0x6b0] sm:$0xf]
    %v2317 = vld [vmem:[#allocation10 + $0x6b4] sm:$0xff]
    %v2318 = vld [vmem:[#allocation10 + $0x6bc] sm:$0xf]
    %v2319 = vld [vmem:[#allocation10 + $0x6c0] sm:$0xff]
    %v2320 = vld [vmem:[#allocation10 + $0x6c8] sm:$0xf]
    %v2321 = vld [vmem:[#allocation10 + $0x6cc] sm:$0xff]
    %v2322 = vld [vmem:[#allocation10 + $0x6d4] sm:$0xf]
    %v2323 = vld [vmem:[#allocation10 + $0x6d8] sm:$0xff]
    %v2324 = vld [vmem:[#allocation10 + $0x6e0] sm:$0xf]
    %v2325 = vld [vmem:[#allocation10 + $0x6e4] sm:$0xff]
    %v2326 = vld [vmem:[#allocation10 + $0x6ec] sm:$0xf]
    %v2327 = vld [vmem:[#allocation10 + $0x6f0] sm:$0xff]
    %v2328 = vld [vmem:[#allocation10 + $0x6f8] sm:$0xf]
    %v2329 = vld [vmem:[#allocation10 + $0x6fc] sm:$0xff]
    %v2330 = vld [vmem:[#allocation10 + $0x704] sm:$0xf]
    %v2331 = vld [vmem:[#allocation10 + $0x708] sm:$0xff]
    %v2332 = vld [vmem:[#allocation10 + $0x710] sm:$0xf]
    %v2333 = vld [vmem:[#allocation10 + $0x714] sm:$0xff]
    %v2334 = vld [vmem:[#allocation10 + $0x71c] sm:$0xf]
    %v2335 = vld [vmem:[#allocation10 + $0x720] sm:$0xff]
    %v2336 = vld [vmem:[#allocation10 + $0x728] sm:$0xf]
    %v2337 = vld [vmem:[#allocation10 + $0x72c] sm:$0xff]
    %v2338 = vld [vmem:[#allocation10 + $0x734] sm:$0xf]
    %v2339 = vld [vmem:[#allocation10 + $0x738] sm:$0xff]
    %v2340 = vld [vmem:[#allocation10 + $0x740] sm:$0xf]
    %v2341 = vld [vmem:[#allocation10 + $0x744] sm:$0xff]
    %v2342 = vld [vmem:[#allocation10 + $0x74c] sm:$0xf]
    %v2343 = vld [vmem:[#allocation10 + $0x750] sm:$0xff]
    %v2344 = vld [vmem:[#allocation10 + $0x758] sm:$0xf]
    %v2345 = vld [vmem:[#allocation10 + $0x75c] sm:$0xff]
    %v2346 = vld [vmem:[#allocation10 + $0x764] sm:$0xf]
    %v2347 = vld [vmem:[#allocation10 + $0x768] sm:$0xff]
    %v2348 = vld [vmem:[#allocation10 + $0x770] sm:$0xf]
    %v2349 = vld [vmem:[#allocation10 + $0x774] sm:$0xff]
    %v2350 = vld [vmem:[#allocation10 + $0x77c] sm:$0xf]
    %v2351 = vld [vmem:[#allocation10 + $0x780] sm:$0xff]
    %v2352 = vld [vmem:[#allocation10 + $0x788] sm:$0xf]
    %v2353 = vld [vmem:[#allocation10 + $0x78c] sm:$0xff]
    %v2354 = vld [vmem:[#allocation10 + $0x794] sm:$0xf]
    %v2355 = vld [vmem:[#allocation10 + $0x798] sm:$0xff]
    %v2356 = vld [vmem:[#allocation10 + $0x7a0] sm:$0xf]
    %v2357 = vld [vmem:[#allocation10 + $0x7a4] sm:$0xff]
    %v2358 = vld [vmem:[#allocation10 + $0x7ac] sm:$0xf]
    %v2359 = vld [vmem:[#allocation10 + $0x7b0] sm:$0xff]
    %v2360 = vld [vmem:[#allocation10 + $0x7b8] sm:$0xf]
    %v2361 = vld [vmem:[#allocation10 + $0x7bc] sm:$0xff]
    %v2362 = vld [vmem:[#allocation10 + $0x7c4] sm:$0xf]
    %v2363 = vld [vmem:[#allocation10 + $0x7c8] sm:$0xff]
    %v2364 = vld [vmem:[#allocation10 + $0x7d0] sm:$0xf]
    %v2365 = vld [vmem:[#allocation10 + $0x7d4] sm:$0xff]
    %v2366 = vld [vmem:[#allocation10 + $0x7dc] sm:$0xf]
    %v2367 = vld [vmem:[#allocation10 + $0x7e0] sm:$0xff]
    %v2368 = vld [vmem:[#allocation10 + $0x7e8] sm:$0xf]
    %v2369 = vld [vmem:[#allocation10 + $0x7ec] sm:$0xff]
    %v2370 = vld [vmem:[#allocation10 + $0x7f4] sm:$0xf]
    %v2371 = vld [vmem:[#allocation10 + $0x7f8] sm:$0xff]
    %v2372 = vld [vmem:[#allocation10 + $0x800] sm:$0xf]
    %v2373 = vld [vmem:[#allocation10 + $0x804] sm:$0xff]
    %v2374 = vld [vmem:[#allocation10 + $0x80c] sm:$0xf]
    %v2375 = vld [vmem:[#allocation10 + $0x810] sm:$0xff]
    %v2376 = vld [vmem:[#allocation10 + $0x818] sm:$0xf]
    %v2377 = vld [vmem:[#allocation10 + $0x81c] sm:$0xff]
    %v2378 = vld [vmem:[#allocation10 + $0x824] sm:$0xf]
    %v2379 = vld [vmem:[#allocation10 + $0x828] sm:$0xff]
    %v2380 = vld [vmem:[#allocation10 + $0x830] sm:$0xf]
    %v2381 = vld [vmem:[#allocation10 + $0x834] sm:$0xff]
    %v2382 = vld [vmem:[#allocation10 + $0x83c] sm:$0xf]
    %v2383 = vld [vmem:[#allocation10 + $0x840] sm:$0xff]
    %v2384 = vld [vmem:[#allocation10 + $0x848] sm:$0xf]
    %v2385 = vld [vmem:[#allocation10 + $0x84c] sm:$0xff]
    %v2386 = vld [vmem:[#allocation10 + $0x854] sm:$0xf]
    %v2387 = vld [vmem:[#allocation10 + $0x858] sm:$0xff]
    %v2388 = vld [vmem:[#allocation10 + $0x860] sm:$0xf]
    %v2389 = vld [vmem:[#allocation10 + $0x864] sm:$0xff]
    %v2390 = vld [vmem:[#allocation10 + $0x86c] sm:$0xf]
    %v2391 = vld [vmem:[#allocation10 + $0x870] sm:$0xff]
    %v2392 = vld [vmem:[#allocation10 + $0x878] sm:$0xf]
    %v2393 = vld [vmem:[#allocation10 + $0x87c] sm:$0xff]
    %v2394 = vld [vmem:[#allocation10 + $0x884] sm:$0xf]
    %v2395 = vld [vmem:[#allocation10 + $0x888] sm:$0xff]
    %v2396 = vld [vmem:[#allocation10 + $0x890] sm:$0xf]
    %v2397 = vld [vmem:[#allocation10 + $0x894] sm:$0xff]
    %v2398 = vld [vmem:[#allocation10 + $0x89c] sm:$0xf]
    %v2399 = vld [vmem:[#allocation10 + $0x8a0] sm:$0xff]
    %v2400 = vld [vmem:[#allocation10 + $0x8a8] sm:$0xf]
    %v2401 = vld [vmem:[#allocation10 + $0x8ac] sm:$0xff]
    %v2402 = vld [vmem:[#allocation10 + $0x8b4] sm:$0xf]
    %v2403 = vld [vmem:[#allocation10 + $0x8b8] sm:$0xff]
    %v2404 = vld [vmem:[#allocation10 + $0x8c0] sm:$0xf]
    %v2405 = vld [vmem:[#allocation10 + $0x8c4] sm:$0xff]
    %v2406 = vld [vmem:[#allocation10 + $0x8cc] sm:$0xf]
    %v2407 = vld [vmem:[#allocation10 + $0x8d0] sm:$0xff]
    %v2408 = vld [vmem:[#allocation10 + $0x8d8] sm:$0xf]
    %v2409 = vld [vmem:[#allocation10 + $0x8dc] sm:$0xff]
    %v2410 = vld [vmem:[#allocation10 + $0x8e4] sm:$0xf]
    %v2411 = vld [vmem:[#allocation10 + $0x8e8] sm:$0xff]
    %v2412 = vld [vmem:[#allocation10 + $0x8f0] sm:$0xf]
    %v2413 = vld [vmem:[#allocation10 + $0x8f4] sm:$0xff]
    %v2414 = vld [vmem:[#allocation10 + $0x8fc] sm:$0xf]
    %v2419 = vunpack.c.l.b16 %v2283
    %v2420 = vunpack.c.h.b16 %v2283
    %v2421 = vunpack.c.l.b16 %v2284
    %v2422 = vunpack.c.h.b16 %v2284
    %v2423 = vunpack.c.l.b16 %v2285
    %v2424 = vunpack.c.h.b16 %v2285
    %v2425 = vunpack.c.l.b16 %v2286
    %v2426 = vunpack.c.h.b16 %v2286
    %v2427 = vpack.c.b16 %v2423, %v2419
    %v2428 = vpack.c.b16 %v2424, %v2420
    %v2429 = vpack.c.b16 %v2425, %v2421
    %v2430 = vpack.c.b16 %v2426, %v2422
    %v2431 = vrot.slane %v2427, 1
    %v2432 = vrot.slane %v2428, 1
    %v2433 = vrot.slane %v2429, 1
    %v2434 = vrot.slane %v2430, 1
    %v2567 = vunpack.c.l.b16 %v2287
    %v2568 = vunpack.c.h.b16 %v2287
    %v2569 = vunpack.c.l.b16 %v2288
    %v2570 = vunpack.c.l.b16 %v2289
    %v2571 = vunpack.c.h.b16 %v2289
    %v2572 = vunpack.c.l.b16 %v2290
    %v2573 = vunpack.c.l.b16 %v2291
    %v2574 = vunpack.c.h.b16 %v2291
    %v2575 = vunpack.c.l.b16 %v2292
    %v2576 = vunpack.c.l.b16 %v2293
    %v2577 = vunpack.c.h.b16 %v2293
    %v2578 = vunpack.c.l.b16 %v2294
    %v2579 = vunpack.c.l.b16 %v2295
    %v2580 = vunpack.c.h.b16 %v2295
    %v2581 = vunpack.c.l.b16 %v2296
    %v2582 = vunpack.c.l.b16 %v2297
    %v2583 = vunpack.c.h.b16 %v2297
    %v2584 = vunpack.c.l.b16 %v2298
    %v2585 = vunpack.c.l.b16 %v2299
    %v2586 = vunpack.c.h.b16 %v2299
    %v2587 = vunpack.c.l.b16 %v2300
    %v2588 = vunpack.c.l.b16 %v2301
    %v2589 = vunpack.c.h.b16 %v2301
    %v2590 = vunpack.c.l.b16 %v2302
    %v2591 = vunpack.c.l.b16 %v2303
    %v2592 = vunpack.c.h.b16 %v2303
    %v2593 = vunpack.c.l.b16 %v2304
    %v2594 = vunpack.c.l.b16 %v2305
    %v2595 = vunpack.c.h.b16 %v2305
    %v2596 = vunpack.c.l.b16 %v2306
    %v2597 = vunpack.c.l.b16 %v2307
    %v2598 = vunpack.c.h.b16 %v2307
    %v2599 = vunpack.c.l.b16 %v2308
    %v2600 = vunpack.c.l.b16 %v2309
    %v2601 = vunpack.c.h.b16 %v2309
    %v2602 = vunpack.c.l.b16 %v2310
    %v2603 = vunpack.c.l.b16 %v2311
    %v2604 = vunpack.c.h.b16 %v2311
    %v2605 = vunpack.c.l.b16 %v2312
    %v2606 = vunpack.c.l.b16 %v2313
    %v2607 = vunpack.c.h.b16 %v2313
    %v2608 = vunpack.c.l.b16 %v2314
    %v2609 = vunpack.c.l.b16 %v2315
    %v2610 = vunpack.c.h.b16 %v2315
    %v2611 = vunpack.c.l.b16 %v2316
    %v2612 = vunpack.c.l.b16 %v2317
    %v2613 = vunpack.c.h.b16 %v2317
    %v2614 = vunpack.c.l.b16 %v2318
    %v2615 = vunpack.c.l.b16 %v2319
    %v2616 = vunpack.c.h.b16 %v2319
    %v2617 = vunpack.c.l.b16 %v2320
    %v2618 = vunpack.c.l.b16 %v2321
    %v2619 = vunpack.c.h.b16 %v2321
    %v2620 = vunpack.c.l.b16 %v2322
    %v2621 = vunpack.c.l.b16 %v2323
    %v2622 = vunpack.c.h.b16 %v2323
    %v2623 = vunpack.c.l.b16 %v2324
    %v2624 = vunpack.c.l.b16 %v2325
    %v2625 = vunpack.c.h.b16 %v2325
    %v2626 = vunpack.c.l.b16 %v2326
    %v2627 = vunpack.c.l.b16 %v2327
    %v2628 = vunpack.c.h.b16 %v2327
    %v2629 = vunpack.c.l.b16 %v2328
    %v2630 = vunpack.c.l.b16 %v2329
    %v2631 = vunpack.c.h.b16 %v2329
    %v2632 = vunpack.c.l.b16 %v2330
    %v2633 = vunpack.c.l.b16 %v2331
    %v2634 = vunpack.c.h.b16 %v2331
    %v2635 = vunpack.c.l.b16 %v2332
    %v2636 = vunpack.c.l.b16 %v2333
    %v2637 = vunpack.c.h.b16 %v2333
    %v2638 = vunpack.c.l.b16 %v2334
    %v2639 = vunpack.c.l.b16 %v2335
    %v2640 = vunpack.c.h.b16 %v2335
    %v2641 = vunpack.c.l.b16 %v2336
    %v2642 = vunpack.c.l.b16 %v2337
    %v2643 = vunpack.c.h.b16 %v2337
    %v2644 = vunpack.c.l.b16 %v2338
    %v2645 = vunpack.c.l.b16 %v2339
    %v2646 = vunpack.c.h.b16 %v2339
    %v2647 = vunpack.c.l.b16 %v2340
    %v2648 = vunpack.c.l.b16 %v2341
    %v2649 = vunpack.c.h.b16 %v2341
    %v2650 = vunpack.c.l.b16 %v2342
    %v2651 = vunpack.c.l.b16 %v2343
    %v2652 = vunpack.c.h.b16 %v2343
    %v2653 = vunpack.c.l.b16 %v2344
    %v2654 = vunpack.c.l.b16 %v2345
    %v2655 = vunpack.c.h.b16 %v2345
    %v2656 = vunpack.c.l.b16 %v2346
    %v2657 = vunpack.c.l.b16 %v2347
    %v2658 = vunpack.c.h.b16 %v2347
    %v2659 = vunpack.c.l.b16 %v2348
    %v2660 = vunpack.c.l.b16 %v2349
    %v2661 = vunpack.c.h.b16 %v2349
    %v2662 = vunpack.c.l.b16 %v2350
    %v2663 = vunpack.c.l.b16 %v2351
    %v2664 = vunpack.c.h.b16 %v2351
    %v2665 = vunpack.c.l.b16 %v2352
    %v2666 = vunpack.c.l.b16 %v2353
    %v2667 = vunpack.c.h.b16 %v2353
    %v2668 = vunpack.c.l.b16 %v2354
    %v2669 = vunpack.c.l.b16 %v2355
    %v2670 = vunpack.c.h.b16 %v2355
    %v2671 = vunpack.c.l.b16 %v2356
    %v2672 = vunpack.c.l.b16 %v2357
    %v2673 = vunpack.c.h.b16 %v2357
    %v2674 = vunpack.c.l.b16 %v2358
    %v2675 = vunpack.c.l.b16 %v2359
    %v2676 = vunpack.c.h.b16 %v2359
    %v2677 = vunpack.c.l.b16 %v2360
    %v2678 = vunpack.c.l.b16 %v2361
    %v2679 = vunpack.c.h.b16 %v2361
    %v2680 = vunpack.c.l.b16 %v2362
    %v2681 = vunpack.c.l.b16 %v2363
    %v2682 = vunpack.c.h.b16 %v2363
    %v2683 = vunpack.c.l.b16 %v2364
    %v2684 = vunpack.c.l.b16 %v2365
    %v2685 = vunpack.c.h.b16 %v2365
    %v2686 = vunpack.c.l.b16 %v2366
    %v2687 = vunpack.c.l.b16 %v2367
    %v2688 = vunpack.c.h.b16 %v2367
    %v2689 = vunpack.c.l.b16 %v2368
    %v2690 = vunpack.c.l.b16 %v2369
    %v2691 = vunpack.c.h.b16 %v2369
    %v2692 = vunpack.c.l.b16 %v2370
    %v2693 = vunpack.c.l.b16 %v2371
    %v2694 = vunpack.c.h.b16 %v2371
    %v2695 = vunpack.c.l.b16 %v2372
    %v2696 = vunpack.c.l.b16 %v2373
    %v2697 = vunpack.c.h.b16 %v2373
    %v2698 = vunpack.c.l.b16 %v2374
    %v2699 = vunpack.c.l.b16 %v2375
    %v2700 = vunpack.c.h.b16 %v2375
    %v2701 = vunpack.c.l.b16 %v2376
    %v2702 = vunpack.c.l.b16 %v2377
    %v2703 = vunpack.c.h.b16 %v2377
    %v2704 = vunpack.c.l.b16 %v2378
    %v2705 = vunpack.c.l.b16 %v2379
    %v2706 = vunpack.c.h.b16 %v2379
    %v2707 = vunpack.c.l.b16 %v2380
    %v2708 = vunpack.c.l.b16 %v2381
    %v2709 = vunpack.c.h.b16 %v2381
    %v2710 = vunpack.c.l.b16 %v2382
    %v2711 = vunpack.c.l.b16 %v2383
    %v2712 = vunpack.c.h.b16 %v2383
    %v2713 = vunpack.c.l.b16 %v2384
    %v2714 = vunpack.c.l.b16 %v2385
    %v2715 = vunpack.c.h.b16 %v2385
    %v2716 = vunpack.c.l.b16 %v2386
    %v2717 = vunpack.c.l.b16 %v2387
    %v2718 = vunpack.c.h.b16 %v2387
    %v2719 = vunpack.c.l.b16 %v2388
    %v2720 = vunpack.c.l.b16 %v2389
    %v2721 = vunpack.c.h.b16 %v2389
    %v2722 = vunpack.c.l.b16 %v2390
    %v2723 = vunpack.c.l.b16 %v2391
    %v2724 = vunpack.c.h.b16 %v2391
    %v2725 = vunpack.c.l.b16 %v2392
    %v2726 = vunpack.c.l.b16 %v2393
    %v2727 = vunpack.c.h.b16 %v2393
    %v2728 = vunpack.c.l.b16 %v2394
    %v2729 = vunpack.c.l.b16 %v2395
    %v2730 = vunpack.c.h.b16 %v2395
    %v2731 = vunpack.c.l.b16 %v2396
    %v2732 = vunpack.c.l.b16 %v2397
    %v2733 = vunpack.c.h.b16 %v2397
    %v2734 = vunpack.c.l.b16 %v2398
    %v2735 = vunpack.c.l.b16 %v2399
    %v2736 = vunpack.c.h.b16 %v2399
    %v2737 = vunpack.c.l.b16 %v2400
    %v2738 = vunpack.c.l.b16 %v2401
    %v2739 = vunpack.c.h.b16 %v2401
    %v2740 = vunpack.c.l.b16 %v2402
    %v2741 = vunpack.c.l.b16 %v2403
    %v2742 = vunpack.c.h.b16 %v2403
    %v2743 = vunpack.c.l.b16 %v2404
    %v2744 = vunpack.c.l.b16 %v2405
    %v2745 = vunpack.c.h.b16 %v2405
    %v2746 = vunpack.c.l.b16 %v2406
    %v2747 = vunpack.c.l.b16 %v2407
    %v2748 = vunpack.c.h.b16 %v2407
    %v2749 = vunpack.c.l.b16 %v2408
    %v2750 = vunpack.c.l.b16 %v2409
    %v2751 = vunpack.c.h.b16 %v2409
    %v2752 = vunpack.c.l.b16 %v2410
    %v2753 = vunpack.c.l.b16 %v2411
    %v2754 = vunpack.c.h.b16 %v2411
    %v2755 = vunpack.c.l.b16 %v2412
    %v2756 = vunpack.c.l.b16 %v2413
    %v2757 = vunpack.c.h.b16 %v2413
    %v2758 = vunpack.c.l.b16 %v2414
    %v2759 = vpack.c.b16 %v2570, %v2567
    %v2760 = vpack.c.b16 %v2571, %v2568
    %v2761 = vpack.c.b16 %v2572, %v2569
    %v2762 = vpack.c.b16 %v2576, %v2573
    %v2763 = vpack.c.b16 %v2577, %v2574
    %v2764 = vpack.c.b16 %v2578, %v2575
    %v2765 = vpack.c.b16 %v2582, %v2579
    %v2766 = vpack.c.b16 %v2583, %v2580
    %v2767 = vpack.c.b16 %v2584, %v2581
    %v2768 = vpack.c.b16 %v2588, %v2585
    %v2769 = vpack.c.b16 %v2589, %v2586
    %v2770 = vpack.c.b16 %v2590, %v2587
    %v2771 = vpack.c.b16 %v2594, %v2591
    %v2772 = vpack.c.b16 %v2595, %v2592
    %v2773 = vpack.c.b16 %v2596, %v2593
    %v2774 = vpack.c.b16 %v2600, %v2597
    %v2775 = vpack.c.b16 %v2601, %v2598
    %v2776 = vpack.c.b16 %v2602, %v2599
    %v2777 = vpack.c.b16 %v2606, %v2603
    %v2778 = vpack.c.b16 %v2607, %v2604
    %v2779 = vpack.c.b16 %v2608, %v2605
    %v2780 = vpack.c.b16 %v2612, %v2609
    %v2781 = vpack.c.b16 %v2613, %v2610
    %v2782 = vpack.c.b16 %v2614, %v2611
    %v2783 = vpack.c.b16 %v2618, %v2615
    %v2784 = vpack.c.b16 %v2619, %v2616
    %v2785 = vpack.c.b16 %v2620, %v2617
    %v2786 = vpack.c.b16 %v2624, %v2621
    %v2787 = vpack.c.b16 %v2625, %v2622
    %v2788 = vpack.c.b16 %v2626, %v2623
    %v2789 = vpack.c.b16 %v2630, %v2627
    %v2790 = vpack.c.b16 %v2631, %v2628
    %v2791 = vpack.c.b16 %v2632, %v2629
    %v2792 = vpack.c.b16 %v2636, %v2633
    %v2793 = vpack.c.b16 %v2637, %v2634
    %v2794 = vpack.c.b16 %v2638, %v2635
    %v2795 = vpack.c.b16 %v2642, %v2639
    %v2796 = vpack.c.b16 %v2643, %v2640
    %v2797 = vpack.c.b16 %v2644, %v2641
    %v2798 = vpack.c.b16 %v2648, %v2645
    %v2799 = vpack.c.b16 %v2649, %v2646
    %v2800 = vpack.c.b16 %v2650, %v2647
    %v2801 = vpack.c.b16 %v2654, %v2651
    %v2802 = vpack.c.b16 %v2655, %v2652
    %v2803 = vpack.c.b16 %v2656, %v2653
    %v2804 = vpack.c.b16 %v2660, %v2657
    %v2805 = vpack.c.b16 %v2661, %v2658
    %v2806 = vpack.c.b16 %v2662, %v2659
    %v2807 = vpack.c.b16 %v2666, %v2663
    %v2808 = vpack.c.b16 %v2667, %v2664
    %v2809 = vpack.c.b16 %v2668, %v2665
    %v2810 = vpack.c.b16 %v2672, %v2669
    %v2811 = vpack.c.b16 %v2673, %v2670
    %v2812 = vpack.c.b16 %v2674, %v2671
    %v2813 = vpack.c.b16 %v2678, %v2675
    %v2814 = vpack.c.b16 %v2679, %v2676
    %v2815 = vpack.c.b16 %v2680, %v2677
    %v2816 = vpack.c.b16 %v2684, %v2681
    %v2817 = vpack.c.b16 %v2685, %v2682
    %v2818 = vpack.c.b16 %v2686, %v2683
    %v2819 = vpack.c.b16 %v2690, %v2687
    %v2820 = vpack.c.b16 %v2691, %v2688
    %v2821 = vpack.c.b16 %v2692, %v2689
    %v2822 = vpack.c.b16 %v2696, %v2693
    %v2823 = vpack.c.b16 %v2697, %v2694
    %v2824 = vpack.c.b16 %v2698, %v2695
    %v2825 = vpack.c.b16 %v2702, %v2699
    %v2826 = vpack.c.b16 %v2703, %v2700
    %v2827 = vpack.c.b16 %v2704, %v2701
    %v2828 = vpack.c.b16 %v2708, %v2705
    %v2829 = vpack.c.b16 %v2709, %v2706
    %v2830 = vpack.c.b16 %v2710, %v2707
    %v2831 = vpack.c.b16 %v2714, %v2711
    %v2832 = vpack.c.b16 %v2715, %v2712
    %v2833 = vpack.c.b16 %v2716, %v2713
    %v2834 = vpack.c.b16 %v2720, %v2717
    %v2835 = vpack.c.b16 %v2721, %v2718
    %v2836 = vpack.c.b16 %v2722, %v2719
    %v2837 = vpack.c.b16 %v2726, %v2723
    %v2838 = vpack.c.b16 %v2727, %v2724
    %v2839 = vpack.c.b16 %v2728, %v2725
    %v2840 = vpack.c.b16 %v2732, %v2729
    %v2841 = vpack.c.b16 %v2733, %v2730
    %v2842 = vpack.c.b16 %v2734, %v2731
    %v2843 = vpack.c.b16 %v2738, %v2735
    %v2844 = vpack.c.b16 %v2739, %v2736
    %v2845 = vpack.c.b16 %v2740, %v2737
    %v2846 = vpack.c.b16 %v2744, %v2741
    %v2847 = vpack.c.b16 %v2745, %v2742
    %v2848 = vpack.c.b16 %v2746, %v2743
    %v2849 = vpack.c.b16 %v2750, %v2747
    %v2850 = vpack.c.b16 %v2751, %v2748
    %v2851 = vpack.c.b16 %v2752, %v2749
    %v2852 = vpack.c.b16 %v2756, %v2753
    %v2853 = vpack.c.b16 %v2757, %v2754
    %v2854 = vpack.c.b16 %v2758, %v2755
    %2951 = vmatpush.bf16.msra.mxu0 %v2780
    %2952 = vmatpush.bf16.msra.mxu0 %v2777
    %2953 = vmatpush.bf16.msra.mxu0 %v2774
    %2954 = vmatpush.bf16.msra.mxu0 %v2771
    %2955 = vmatpush.bf16.msra.mxu0 %v2768
    %2956 = vmatpush.bf16.msra.mxu0 %v2765
    %2957 = vmatpush.bf16.msra.mxu0 %v2762
    %2958 = vmatpush.bf16.msra.mxu0 %v2759
    %2959 = vmatmul.bf16.gmra.mxu0 %v2431
    %v2960 = vpop.f32.mrf.mxu0
    %v2961 = vadd.f32 0.0, %v2960
    %v2962 = vpop.f32.mrf.mxu0
    %v2963 = vadd.f32 0.0, %v2962
    %2964 = vdwg.mxu0
    %2965 = vmatpush.bf16.msra.mxu0 %v2804
    %2966 = vmatpush.bf16.msra.mxu0 %v2801
    %2967 = vmatpush.bf16.msra.mxu0 %v2798
    %2968 = vmatpush.bf16.msra.mxu0 %v2795
    %2969 = vmatpush.bf16.msra.mxu0 %v2792
    %2970 = vmatpush.bf16.msra.mxu0 %v2789
    %2971 = vmatpush.bf16.msra.mxu0 %v2786
    %2972 = vmatpush.bf16.msra.mxu0 %v2783
    %2973 = vmatmul.bf16.gmra.mxu0 %v2432
    %v2974 = vpop.f32.mrf.mxu0
    %v2975 = vadd.f32 %v2961, %v2974
    %v2976 = vpop.f32.mrf.mxu0
    %v2977 = vadd.f32 %v2963, %v2976
    %2978 = vdwg.mxu0
    %2979 = vmatpush.bf16.msra.mxu0 %v2828
    %2980 = vmatpush.bf16.msra.mxu0 %v2825
    %2981 = vmatpush.bf16.msra.mxu0 %v2822
    %2982 = vmatpush.bf16.msra.mxu0 %v2819
    %2983 = vmatpush.bf16.msra.mxu0 %v2816
    %2984 = vmatpush.bf16.msra.mxu0 %v2813
    %2985 = vmatpush.bf16.msra.mxu0 %v2810
    %2986 = vmatpush.bf16.msra.mxu0 %v2807
    %2987 = vmatmul.bf16.gmra.mxu0 %v2433
    %v2988 = vpop.f32.mrf.mxu0
    %v2989 = vadd.f32 %v2975, %v2988
    %v2990 = vpop.f32.mrf.mxu0
    %v2991 = vadd.f32 %v2977, %v2990
    %2992 = vdwg.mxu0
    %2993 = vmatpush.bf16.msra.mxu0 %v2852
    %2994 = vmatpush.bf16.msra.mxu0 %v2849
    %2995 = vmatpush.bf16.msra.mxu0 %v2846
    %2996 = vmatpush.bf16.msra.mxu0 %v2843
    %2997 = vmatpush.bf16.msra.mxu0 %v2840
    %2998 = vmatpush.bf16.msra.mxu0 %v2837
    %2999 = vmatpush.bf16.msra.mxu0 %v2834
    %3000 = vmatpush.bf16.msra.mxu0 %v2831
    %3001 = vmatmul.bf16.gmra.mxu0 %v2434
    %v3002 = vpop.f32.mrf.mxu0
    %v3003 = vadd.f32 %v2989, %v3002
    %v3004 = vpop.f32.mrf.mxu0
    %v3005 = vadd.f32 %v2991, %v3004
    %3006 = vdwg.mxu0
    %3007 = vmatpush.bf16.msra.mxu0 %v2781
    %3008 = vmatpush.bf16.msra.mxu0 %v2778
    %3009 = vmatpush.bf16.msra.mxu0 %v2775
    %3010 = vmatpush.bf16.msra.mxu0 %v2772
    %3011 = vmatpush.bf16.msra.mxu0 %v2769
    %3012 = vmatpush.bf16.msra.mxu0 %v2766
    %3013 = vmatpush.bf16.msra.mxu0 %v2763
    %3014 = vmatpush.bf16.msra.mxu0 %v2760
    %3015 = vmatmul.bf16.gmra.mxu0 %v2431
    %v3016 = vpop.f32.mrf.mxu0
    %v3017 = vadd.f32 0.0, %v3016
    %v3018 = vpop.f32.mrf.mxu0
    %v3019 = vadd.f32 0.0, %v3018
    %3020 = vdwg.mxu0
    %3021 = vmatpush.bf16.msra.mxu0 %v2805
    %3022 = vmatpush.bf16.msra.mxu0 %v2802
    %3023 = vmatpush.bf16.msra.mxu0 %v2799
    %3024 = vmatpush.bf16.msra.mxu0 %v2796
    %3025 = vmatpush.bf16.msra.mxu0 %v2793
    %3026 = vmatpush.bf16.msra.mxu0 %v2790
    %3027 = vmatpush.bf16.msra.mxu0 %v2787
    %3028 = vmatpush.bf16.msra.mxu0 %v2784
    %3029 = vmatmul.bf16.gmra.mxu0 %v2432
    %v3030 = vpop.f32.mrf.mxu0
    %v3031 = vadd.f32 %v3017, %v3030
    %v3032 = vpop.f32.mrf.mxu0
    %v3033 = vadd.f32 %v3019, %v3032
    %3034 = vdwg.mxu0
    %3035 = vmatpush.bf16.msra.mxu0 %v2829
    %3036 = vmatpush.bf16.msra.mxu0 %v2826
    %3037 = vmatpush.bf16.msra.mxu0 %v2823
    %3038 = vmatpush.bf16.msra.mxu0 %v2820
    %3039 = vmatpush.bf16.msra.mxu0 %v2817
    %3040 = vmatpush.bf16.msra.mxu0 %v2814
    %3041 = vmatpush.bf16.msra.mxu0 %v2811
    %3042 = vmatpush.bf16.msra.mxu0 %v2808
    %3043 = vmatmul.bf16.gmra.mxu0 %v2433
    %v3044 = vpop.f32.mrf.mxu0
    %v3045 = vadd.f32 %v3031, %v3044
    %v3046 = vpop.f32.mrf.mxu0
    %v3047 = vadd.f32 %v3033, %v3046
    %3048 = vdwg.mxu0
    %3049 = vmatpush.bf16.msra.mxu0 %v2853
    %3050 = vmatpush.bf16.msra.mxu0 %v2850
    %3051 = vmatpush.bf16.msra.mxu0 %v2847
    %3052 = vmatpush.bf16.msra.mxu0 %v2844
    %3053 = vmatpush.bf16.msra.mxu0 %v2841
    %3054 = vmatpush.bf16.msra.mxu0 %v2838
    %3055 = vmatpush.bf16.msra.mxu0 %v2835
    %3056 = vmatpush.bf16.msra.mxu0 %v2832
    %3057 = vmatmul.bf16.gmra.mxu0 %v2434
    %v3058 = vpop.f32.mrf.mxu0
    %v3059 = vadd.f32 %v3045, %v3058
    %v3060 = vpop.f32.mrf.mxu0
    %v3061 = vadd.f32 %v3047, %v3060
    %3062 = vdwg.mxu0
    %3063 = vmatpush.bf16.msra.mxu0 %v2782
    %3064 = vmatpush.bf16.msra.mxu0 %v2779
    %3065 = vmatpush.bf16.msra.mxu0 %v2776
    %3066 = vmatpush.bf16.msra.mxu0 %v2773
    %3067 = vmatpush.bf16.msra.mxu0 %v2770
    %3068 = vmatpush.bf16.msra.mxu0 %v2767
    %3069 = vmatpush.bf16.msra.mxu0 %v2764
    %3070 = vmatpush.bf16.msra.mxu0 %v2761
    %3071 = vmatmul.bf16.gmra.mxu0 %v2431
    %v3072 = vpop.f32.mrf.mxu0
    %v3073 = vadd.f32 0.0, %v3072
    %v3074 = vpop.f32.mrf.mxu0
    %v3075 = vadd.f32 0.0, %v3074
    %3076 = vdwg.mxu0
    %3077 = vmatpush.bf16.msra.mxu0 %v2806
    %3078 = vmatpush.bf16.msra.mxu0 %v2803
    %3079 = vmatpush.bf16.msra.mxu0 %v2800
    %3080 = vmatpush.bf16.msra.mxu0 %v2797
    %3081 = vmatpush.bf16.msra.mxu0 %v2794
    %3082 = vmatpush.bf16.msra.mxu0 %v2791
    %3083 = vmatpush.bf16.msra.mxu0 %v2788
    %3084 = vmatpush.bf16.msra.mxu0 %v2785
    %3085 = vmatmul.bf16.gmra.mxu0 %v2432
    %v3086 = vpop.f32.mrf.mxu0
    %v3087 = vadd.f32 %v3073, %v3086
    %v3088 = vpop.f32.mrf.mxu0
    %v3089 = vadd.f32 %v3075, %v3088
    %3090 = vdwg.mxu0
    %3091 = vmatpush.bf16.msra.mxu0 %v2830
    %3092 = vmatpush.bf16.msra.mxu0 %v2827
    %3093 = vmatpush.bf16.msra.mxu0 %v2824
    %3094 = vmatpush.bf16.msra.mxu0 %v2821
    %3095 = vmatpush.bf16.msra.mxu0 %v2818
    %3096 = vmatpush.bf16.msra.mxu0 %v2815
    %3097 = vmatpush.bf16.msra.mxu0 %v2812
    %3098 = vmatpush.bf16.msra.mxu0 %v2809
    %3099 = vmatmul.bf16.gmra.mxu0 %v2433
    %v3100 = vpop.f32.mrf.mxu0
    %v3101 = vadd.f32 %v3087, %v3100
    %v3102 = vpop.f32.mrf.mxu0
    %v3103 = vadd.f32 %v3089, %v3102
    %3104 = vdwg.mxu0
    %3105 = vmatpush.bf16.msra.mxu0 %v2854
    %3106 = vmatpush.bf16.msra.mxu0 %v2851
    %3107 = vmatpush.bf16.msra.mxu0 %v2848
    %3108 = vmatpush.bf16.msra.mxu0 %v2845
    %3109 = vmatpush.bf16.msra.mxu0 %v2842
    %3110 = vmatpush.bf16.msra.mxu0 %v2839
    %3111 = vmatpush.bf16.msra.mxu0 %v2836
    %3112 = vmatpush.bf16.msra.mxu0 %v2833
    %3113 = vmatmul.bf16.gmra.mxu0 %v2434
    %v3114 = vpop.f32.mrf.mxu0
    %v3115 = vadd.f32 %v3101, %v3114
    %v3116 = vpop.f32.mrf.mxu0
    %v3117 = vadd.f32 %v3103, %v3116
    %3118 = vdwg.mxu0
    %v3119 = vadd.f32 %v2167, %v3003
    %v3120 = vadd.f32 %v2223, %v3059
    %v3121 = vadd.f32 %v2279, %v3115
    %v3122 = vadd.f32 %v2169, %v3005
    %v3123 = vadd.f32 %v2225, %v3061
    %v3124 = vadd.f32 %v2281, %v3117
    %v3125 = vld [vmem:[#allocation2] sm:$0xee]
    %v3126 = vld [vmem:[#allocation2 + $0x8] sm:$0xee]
    %v3127 = vld [vmem:[#allocation2 + $0x10] sm:$0x77]
    %v3128 = vld [vmem:[#allocation2 + $0x18] sm:$0x77]
    %v3129 = vld [vmem:[#allocation10 + $0x900] sm:$0xff]
    %v3130 = vld [vmem:[#allocation10 + $0x908] sm:$0xf]
    %v3131 = vld [vmem:[#allocation10 + $0x90c] sm:$0xff]
    %v3132 = vld [vmem:[#allocation10 + $0x914] sm:$0xf]
    %v3133 = vld [vmem:[#allocation10 + $0x918] sm:$0xff]
    %v3134 = vld [vmem:[#allocation10 + $0x920] sm:$0xf]
    %v3135 = vld [vmem:[#allocation10 + $0x924] sm:$0xff]
    %v3136 = vld [vmem:[#allocation10 + $0x92c] sm:$0xf]
    %v3137 = vld [vmem:[#allocation10 + $0x930] sm:$0xff]
    %v3138 = vld [vmem:[#allocation10 + $0x938] sm:$0xf]
    %v3139 = vld [vmem:[#allocation10 + $0x93c] sm:$0xff]
    %v3140 = vld [vmem:[#allocation10 + $0x944] sm:$0xf]
    %v3141 = vld [vmem:[#allocation10 + $0x948] sm:$0xff]
    %v3142 = vld [vmem:[#allocation10 + $0x950] sm:$0xf]
    %v3143 = vld [vmem:[#allocation10 + $0x954] sm:$0xff]
    %v3144 = vld [vmem:[#allocation10 + $0x95c] sm:$0xf]
    %v3145 = vld [vmem:[#allocation10 + $0x960] sm:$0xff]
    %v3146 = vld [vmem:[#allocation10 + $0x968] sm:$0xf]
    %v3147 = vld [vmem:[#allocation10 + $0x96c] sm:$0xff]
    %v3148 = vld [vmem:[#allocation10 + $0x974] sm:$0xf]
    %v3149 = vld [vmem:[#allocation10 + $0x978] sm:$0xff]
    %v3150 = vld [vmem:[#allocation10 + $0x980] sm:$0xf]
    %v3151 = vld [vmem:[#allocation10 + $0x984] sm:$0xff]
    %v3152 = vld [vmem:[#allocation10 + $0x98c] sm:$0xf]
    %v3153 = vld [vmem:[#allocation10 + $0x990] sm:$0xff]
    %v3154 = vld [vmem:[#allocation10 + $0x998] sm:$0xf]
    %v3155 = vld [vmem:[#allocation10 + $0x99c] sm:$0xff]
    %v3156 = vld [vmem:[#allocation10 + $0x9a4] sm:$0xf]
    %v3157 = vld [vmem:[#allocation10 + $0x9a8] sm:$0xff]
    %v3158 = vld [vmem:[#allocation10 + $0x9b0] sm:$0xf]
    %v3159 = vld [vmem:[#allocation10 + $0x9b4] sm:$0xff]
    %v3160 = vld [vmem:[#allocation10 + $0x9bc] sm:$0xf]
    %v3161 = vld [vmem:[#allocation10 + $0x9c0] sm:$0xff]
    %v3162 = vld [vmem:[#allocation10 + $0x9c8] sm:$0xf]
    %v3163 = vld [vmem:[#allocation10 + $0x9cc] sm:$0xff]
    %v3164 = vld [vmem:[#allocation10 + $0x9d4] sm:$0xf]
    %v3165 = vld [vmem:[#allocation10 + $0x9d8] sm:$0xff]
    %v3166 = vld [vmem:[#allocation10 + $0x9e0] sm:$0xf]
    %v3167 = vld [vmem:[#allocation10 + $0x9e4] sm:$0xff]
    %v3168 = vld [vmem:[#allocation10 + $0x9ec] sm:$0xf]
    %v3169 = vld [vmem:[#allocation10 + $0x9f0] sm:$0xff]
    %v3170 = vld [vmem:[#allocation10 + $0x9f8] sm:$0xf]
    %v3171 = vld [vmem:[#allocation10 + $0x9fc] sm:$0xff]
    %v3172 = vld [vmem:[#allocation10 + $0xa04] sm:$0xf]
    %v3173 = vld [vmem:[#allocation10 + $0xa08] sm:$0xff]
    %v3174 = vld [vmem:[#allocation10 + $0xa10] sm:$0xf]
    %v3175 = vld [vmem:[#allocation10 + $0xa14] sm:$0xff]
    %v3176 = vld [vmem:[#allocation10 + $0xa1c] sm:$0xf]
    %v3177 = vld [vmem:[#allocation10 + $0xa20] sm:$0xff]
    %v3178 = vld [vmem:[#allocation10 + $0xa28] sm:$0xf]
    %v3179 = vld [vmem:[#allocation10 + $0xa2c] sm:$0xff]
    %v3180 = vld [vmem:[#allocation10 + $0xa34] sm:$0xf]
    %v3181 = vld [vmem:[#allocation10 + $0xa38] sm:$0xff]
    %v3182 = vld [vmem:[#allocation10 + $0xa40] sm:$0xf]
    %v3183 = vld [vmem:[#allocation10 + $0xa44] sm:$0xff]
    %v3184 = vld [vmem:[#allocation10 + $0xa4c] sm:$0xf]
    %v3185 = vld [vmem:[#allocation10 + $0xa50] sm:$0xff]
    %v3186 = vld [vmem:[#allocation10 + $0xa58] sm:$0xf]
    %v3187 = vld [vmem:[#allocation10 + $0xa5c] sm:$0xff]
    %v3188 = vld [vmem:[#allocation10 + $0xa64] sm:$0xf]
    %v3189 = vld [vmem:[#allocation10 + $0xa68] sm:$0xff]
    %v3190 = vld [vmem:[#allocation10 + $0xa70] sm:$0xf]
    %v3191 = vld [vmem:[#allocation10 + $0xa74] sm:$0xff]
    %v3192 = vld [vmem:[#allocation10 + $0xa7c] sm:$0xf]
    %v3193 = vld [vmem:[#allocation10 + $0xa80] sm:$0xff]
    %v3194 = vld [vmem:[#allocation10 + $0xa88] sm:$0xf]
    %v3195 = vld [vmem:[#allocation10 + $0xa8c] sm:$0xff]
    %v3196 = vld [vmem:[#allocation10 + $0xa94] sm:$0xf]
    %v3197 = vld [vmem:[#allocation10 + $0xa98] sm:$0xff]
    %v3198 = vld [vmem:[#allocation10 + $0xaa0] sm:$0xf]
    %v3199 = vld [vmem:[#allocation10 + $0xaa4] sm:$0xff]
    %v3200 = vld [vmem:[#allocation10 + $0xaac] sm:$0xf]
    %v3201 = vld [vmem:[#allocation10 + $0xab0] sm:$0xff]
    %v3202 = vld [vmem:[#allocation10 + $0xab8] sm:$0xf]
    %v3203 = vld [vmem:[#allocation10 + $0xabc] sm:$0xff]
    %v3204 = vld [vmem:[#allocation10 + $0xac4] sm:$0xf]
    %v3205 = vld [vmem:[#allocation10 + $0xac8] sm:$0xff]
    %v3206 = vld [vmem:[#allocation10 + $0xad0] sm:$0xf]
    %v3207 = vld [vmem:[#allocation10 + $0xad4] sm:$0xff]
    %v3208 = vld [vmem:[#allocation10 + $0xadc] sm:$0xf]
    %v3209 = vld [vmem:[#allocation10 + $0xae0] sm:$0xff]
    %v3210 = vld [vmem:[#allocation10 + $0xae8] sm:$0xf]
    %v3211 = vld [vmem:[#allocation10 + $0xaec] sm:$0xff]
    %v3212 = vld [vmem:[#allocation10 + $0xaf4] sm:$0xf]
    %v3213 = vld [vmem:[#allocation10 + $0xaf8] sm:$0xff]
    %v3214 = vld [vmem:[#allocation10 + $0xb00] sm:$0xf]
    %v3215 = vld [vmem:[#allocation10 + $0xb04] sm:$0xff]
    %v3216 = vld [vmem:[#allocation10 + $0xb0c] sm:$0xf]
    %v3217 = vld [vmem:[#allocation10 + $0xb10] sm:$0xff]
    %v3218 = vld [vmem:[#allocation10 + $0xb18] sm:$0xf]
    %v3219 = vld [vmem:[#allocation10 + $0xb1c] sm:$0xff]
    %v3220 = vld [vmem:[#allocation10 + $0xb24] sm:$0xf]
    %v3221 = vld [vmem:[#allocation10 + $0xb28] sm:$0xff]
    %v3222 = vld [vmem:[#allocation10 + $0xb30] sm:$0xf]
    %v3223 = vld [vmem:[#allocation10 + $0xb34] sm:$0xff]
    %v3224 = vld [vmem:[#allocation10 + $0xb3c] sm:$0xf]
    %v3225 = vld [vmem:[#allocation10 + $0xb40] sm:$0xff]
    %v3226 = vld [vmem:[#allocation10 + $0xb48] sm:$0xf]
    %v3227 = vld [vmem:[#allocation10 + $0xb4c] sm:$0xff]
    %v3228 = vld [vmem:[#allocation10 + $0xb54] sm:$0xf]
    %v3229 = vld [vmem:[#allocation10 + $0xb58] sm:$0xff]
    %v3230 = vld [vmem:[#allocation10 + $0xb60] sm:$0xf]
    %v3231 = vld [vmem:[#allocation10 + $0xb64] sm:$0xff]
    %v3232 = vld [vmem:[#allocation10 + $0xb6c] sm:$0xf]
    %v3233 = vld [vmem:[#allocation10 + $0xb70] sm:$0xff]
    %v3234 = vld [vmem:[#allocation10 + $0xb78] sm:$0xf]
    %v3235 = vld [vmem:[#allocation10 + $0xb7c] sm:$0xff]
    %v3236 = vld [vmem:[#allocation10 + $0xb84] sm:$0xf]
    %v3237 = vld [vmem:[#allocation10 + $0xb88] sm:$0xff]
    %v3238 = vld [vmem:[#allocation10 + $0xb90] sm:$0xf]
    %v3239 = vld [vmem:[#allocation10 + $0xb94] sm:$0xff]
    %v3240 = vld [vmem:[#allocation10 + $0xb9c] sm:$0xf]
    %v3241 = vld [vmem:[#allocation10 + $0xba0] sm:$0xff]
    %v3242 = vld [vmem:[#allocation10 + $0xba8] sm:$0xf]
    %v3243 = vld [vmem:[#allocation10 + $0xbac] sm:$0xff]
    %v3244 = vld [vmem:[#allocation10 + $0xbb4] sm:$0xf]
    %v3245 = vld [vmem:[#allocation10 + $0xbb8] sm:$0xff]
    %v3246 = vld [vmem:[#allocation10 + $0xbc0] sm:$0xf]
    %v3247 = vld [vmem:[#allocation10 + $0xbc4] sm:$0xff]
    %v3248 = vld [vmem:[#allocation10 + $0xbcc] sm:$0xf]
    %v3249 = vld [vmem:[#allocation10 + $0xbd0] sm:$0xff]
    %v3250 = vld [vmem:[#allocation10 + $0xbd8] sm:$0xf]
    %v3251 = vld [vmem:[#allocation10 + $0xbdc] sm:$0xff]
    %v3252 = vld [vmem:[#allocation10 + $0xbe4] sm:$0xf]
    %v3253 = vld [vmem:[#allocation10 + $0xbe8] sm:$0xff]
    %v3254 = vld [vmem:[#allocation10 + $0xbf0] sm:$0xf]
    %v3255 = vld [vmem:[#allocation10 + $0xbf4] sm:$0xff]
    %v3256 = vld [vmem:[#allocation10 + $0xbfc] sm:$0xf]
    %v3261 = vunpack.c.l.b16 %v3125
    %v3262 = vunpack.c.h.b16 %v3125
    %v3263 = vunpack.c.l.b16 %v3126
    %v3264 = vunpack.c.h.b16 %v3126
    %v3265 = vunpack.c.l.b16 %v3127
    %v3266 = vunpack.c.h.b16 %v3127
    %v3267 = vunpack.c.l.b16 %v3128
    %v3268 = vunpack.c.h.b16 %v3128
    %v3269 = vpack.c.b16 %v3265, %v3261
    %v3270 = vpack.c.b16 %v3266, %v3262
    %v3271 = vpack.c.b16 %v3267, %v3263
    %v3272 = vpack.c.b16 %v3268, %v3264
    %v3273 = vrot.slane %v3269, 1
    %v3274 = vrot.slane %v3270, 1
    %v3275 = vrot.slane %v3271, 1
    %v3276 = vrot.slane %v3272, 1
    %v3409 = vunpack.c.l.b16 %v3129
    %v3410 = vunpack.c.h.b16 %v3129
    %v3411 = vunpack.c.l.b16 %v3130
    %v3412 = vunpack.c.l.b16 %v3131
    %v3413 = vunpack.c.h.b16 %v3131
    %v3414 = vunpack.c.l.b16 %v3132
    %v3415 = vunpack.c.l.b16 %v3133
    %v3416 = vunpack.c.h.b16 %v3133
    %v3417 = vunpack.c.l.b16 %v3134
    %v3418 = vunpack.c.l.b16 %v3135
    %v3419 = vunpack.c.h.b16 %v3135
    %v3420 = vunpack.c.l.b16 %v3136
    %v3421 = vunpack.c.l.b16 %v3137
    %v3422 = vunpack.c.h.b16 %v3137
    %v3423 = vunpack.c.l.b16 %v3138
    %v3424 = vunpack.c.l.b16 %v3139
    %v3425 = vunpack.c.h.b16 %v3139
    %v3426 = vunpack.c.l.b16 %v3140
    %v3427 = vunpack.c.l.b16 %v3141
    %v3428 = vunpack.c.h.b16 %v3141
    %v3429 = vunpack.c.l.b16 %v3142
    %v3430 = vunpack.c.l.b16 %v3143
    %v3431 = vunpack.c.h.b16 %v3143
    %v3432 = vunpack.c.l.b16 %v3144
    %v3433 = vunpack.c.l.b16 %v3145
    %v3434 = vunpack.c.h.b16 %v3145
    %v3435 = vunpack.c.l.b16 %v3146
    %v3436 = vunpack.c.l.b16 %v3147
    %v3437 = vunpack.c.h.b16 %v3147
    %v3438 = vunpack.c.l.b16 %v3148
    %v3439 = vunpack.c.l.b16 %v3149
    %v3440 = vunpack.c.h.b16 %v3149
    %v3441 = vunpack.c.l.b16 %v3150
    %v3442 = vunpack.c.l.b16 %v3151
    %v3443 = vunpack.c.h.b16 %v3151
    %v3444 = vunpack.c.l.b16 %v3152
    %v3445 = vunpack.c.l.b16 %v3153
    %v3446 = vunpack.c.h.b16 %v3153
    %v3447 = vunpack.c.l.b16 %v3154
    %v3448 = vunpack.c.l.b16 %v3155
    %v3449 = vunpack.c.h.b16 %v3155
    %v3450 = vunpack.c.l.b16 %v3156
    %v3451 = vunpack.c.l.b16 %v3157
    %v3452 = vunpack.c.h.b16 %v3157
    %v3453 = vunpack.c.l.b16 %v3158
    %v3454 = vunpack.c.l.b16 %v3159
    %v3455 = vunpack.c.h.b16 %v3159
    %v3456 = vunpack.c.l.b16 %v3160
    %v3457 = vunpack.c.l.b16 %v3161
    %v3458 = vunpack.c.h.b16 %v3161
    %v3459 = vunpack.c.l.b16 %v3162
    %v3460 = vunpack.c.l.b16 %v3163
    %v3461 = vunpack.c.h.b16 %v3163
    %v3462 = vunpack.c.l.b16 %v3164
    %v3463 = vunpack.c.l.b16 %v3165
    %v3464 = vunpack.c.h.b16 %v3165
    %v3465 = vunpack.c.l.b16 %v3166
    %v3466 = vunpack.c.l.b16 %v3167
    %v3467 = vunpack.c.h.b16 %v3167
    %v3468 = vunpack.c.l.b16 %v3168
    %v3469 = vunpack.c.l.b16 %v3169
    %v3470 = vunpack.c.h.b16 %v3169
    %v3471 = vunpack.c.l.b16 %v3170
    %v3472 = vunpack.c.l.b16 %v3171
    %v3473 = vunpack.c.h.b16 %v3171
    %v3474 = vunpack.c.l.b16 %v3172
    %v3475 = vunpack.c.l.b16 %v3173
    %v3476 = vunpack.c.h.b16 %v3173
    %v3477 = vunpack.c.l.b16 %v3174
    %v3478 = vunpack.c.l.b16 %v3175
    %v3479 = vunpack.c.h.b16 %v3175
    %v3480 = vunpack.c.l.b16 %v3176
    %v3481 = vunpack.c.l.b16 %v3177
    %v3482 = vunpack.c.h.b16 %v3177
    %v3483 = vunpack.c.l.b16 %v3178
    %v3484 = vunpack.c.l.b16 %v3179
    %v3485 = vunpack.c.h.b16 %v3179
    %v3486 = vunpack.c.l.b16 %v3180
    %v3487 = vunpack.c.l.b16 %v3181
    %v3488 = vunpack.c.h.b16 %v3181
    %v3489 = vunpack.c.l.b16 %v3182
    %v3490 = vunpack.c.l.b16 %v3183
    %v3491 = vunpack.c.h.b16 %v3183
    %v3492 = vunpack.c.l.b16 %v3184
    %v3493 = vunpack.c.l.b16 %v3185
    %v3494 = vunpack.c.h.b16 %v3185
    %v3495 = vunpack.c.l.b16 %v3186
    %v3496 = vunpack.c.l.b16 %v3187
    %v3497 = vunpack.c.h.b16 %v3187
    %v3498 = vunpack.c.l.b16 %v3188
    %v3499 = vunpack.c.l.b16 %v3189
    %v3500 = vunpack.c.h.b16 %v3189
    %v3501 = vunpack.c.l.b16 %v3190
    %v3502 = vunpack.c.l.b16 %v3191
    %v3503 = vunpack.c.h.b16 %v3191
    %v3504 = vunpack.c.l.b16 %v3192
    %v3505 = vunpack.c.l.b16 %v3193
    %v3506 = vunpack.c.h.b16 %v3193
    %v3507 = vunpack.c.l.b16 %v3194
    %v3508 = vunpack.c.l.b16 %v3195
    %v3509 = vunpack.c.h.b16 %v3195
    %v3510 = vunpack.c.l.b16 %v3196
    %v3511 = vunpack.c.l.b16 %v3197
    %v3512 = vunpack.c.h.b16 %v3197
    %v3513 = vunpack.c.l.b16 %v3198
    %v3514 = vunpack.c.l.b16 %v3199
    %v3515 = vunpack.c.h.b16 %v3199
    %v3516 = vunpack.c.l.b16 %v3200
    %v3517 = vunpack.c.l.b16 %v3201
    %v3518 = vunpack.c.h.b16 %v3201
    %v3519 = vunpack.c.l.b16 %v3202
    %v3520 = vunpack.c.l.b16 %v3203
    %v3521 = vunpack.c.h.b16 %v3203
    %v3522 = vunpack.c.l.b16 %v3204
    %v3523 = vunpack.c.l.b16 %v3205
    %v3524 = vunpack.c.h.b16 %v3205
    %v3525 = vunpack.c.l.b16 %v3206
    %v3526 = vunpack.c.l.b16 %v3207
    %v3527 = vunpack.c.h.b16 %v3207
    %v3528 = vunpack.c.l.b16 %v3208
    %v3529 = vunpack.c.l.b16 %v3209
    %v3530 = vunpack.c.h.b16 %v3209
    %v3531 = vunpack.c.l.b16 %v3210
    %v3532 = vunpack.c.l.b16 %v3211
    %v3533 = vunpack.c.h.b16 %v3211
    %v3534 = vunpack.c.l.b16 %v3212
    %v3535 = vunpack.c.l.b16 %v3213
    %v3536 = vunpack.c.h.b16 %v3213
    %v3537 = vunpack.c.l.b16 %v3214
    %v3538 = vunpack.c.l.b16 %v3215
    %v3539 = vunpack.c.h.b16 %v3215
    %v3540 = vunpack.c.l.b16 %v3216
    %v3541 = vunpack.c.l.b16 %v3217
    %v3542 = vunpack.c.h.b16 %v3217
    %v3543 = vunpack.c.l.b16 %v3218
    %v3544 = vunpack.c.l.b16 %v3219
    %v3545 = vunpack.c.h.b16 %v3219
    %v3546 = vunpack.c.l.b16 %v3220
    %v3547 = vunpack.c.l.b16 %v3221
    %v3548 = vunpack.c.h.b16 %v3221
    %v3549 = vunpack.c.l.b16 %v3222
    %v3550 = vunpack.c.l.b16 %v3223
    %v3551 = vunpack.c.h.b16 %v3223
    %v3552 = vunpack.c.l.b16 %v3224
    %v3553 = vunpack.c.l.b16 %v3225
    %v3554 = vunpack.c.h.b16 %v3225
    %v3555 = vunpack.c.l.b16 %v3226
    %v3556 = vunpack.c.l.b16 %v3227
    %v3557 = vunpack.c.h.b16 %v3227
    %v3558 = vunpack.c.l.b16 %v3228
    %v3559 = vunpack.c.l.b16 %v3229
    %v3560 = vunpack.c.h.b16 %v3229
    %v3561 = vunpack.c.l.b16 %v3230
    %v3562 = vunpack.c.l.b16 %v3231
    %v3563 = vunpack.c.h.b16 %v3231
    %v3564 = vunpack.c.l.b16 %v3232
    %v3565 = vunpack.c.l.b16 %v3233
    %v3566 = vunpack.c.h.b16 %v3233
    %v3567 = vunpack.c.l.b16 %v3234
    %v3568 = vunpack.c.l.b16 %v3235
    %v3569 = vunpack.c.h.b16 %v3235
    %v3570 = vunpack.c.l.b16 %v3236
    %v3571 = vunpack.c.l.b16 %v3237
    %v3572 = vunpack.c.h.b16 %v3237
    %v3573 = vunpack.c.l.b16 %v3238
    %v3574 = vunpack.c.l.b16 %v3239
    %v3575 = vunpack.c.h.b16 %v3239
    %v3576 = vunpack.c.l.b16 %v3240
    %v3577 = vunpack.c.l.b16 %v3241
    %v3578 = vunpack.c.h.b16 %v3241
    %v3579 = vunpack.c.l.b16 %v3242
    %v3580 = vunpack.c.l.b16 %v3243
    %v3581 = vunpack.c.h.b16 %v3243
    %v3582 = vunpack.c.l.b16 %v3244
    %v3583 = vunpack.c.l.b16 %v3245
    %v3584 = vunpack.c.h.b16 %v3245
    %v3585 = vunpack.c.l.b16 %v3246
    %v3586 = vunpack.c.l.b16 %v3247
    %v3587 = vunpack.c.h.b16 %v3247
    %v3588 = vunpack.c.l.b16 %v3248
    %v3589 = vunpack.c.l.b16 %v3249
    %v3590 = vunpack.c.h.b16 %v3249
    %v3591 = vunpack.c.l.b16 %v3250
    %v3592 = vunpack.c.l.b16 %v3251
    %v3593 = vunpack.c.h.b16 %v3251
    %v3594 = vunpack.c.l.b16 %v3252
    %v3595 = vunpack.c.l.b16 %v3253
    %v3596 = vunpack.c.h.b16 %v3253
    %v3597 = vunpack.c.l.b16 %v3254
    %v3598 = vunpack.c.l.b16 %v3255
    %v3599 = vunpack.c.h.b16 %v3255
    %v3600 = vunpack.c.l.b16 %v3256
    %v3601 = vpack.c.b16 %v3412, %v3409
    %v3602 = vpack.c.b16 %v3413, %v3410
    %v3603 = vpack.c.b16 %v3414, %v3411
    %v3604 = vpack.c.b16 %v3418, %v3415
    %v3605 = vpack.c.b16 %v3419, %v3416
    %v3606 = vpack.c.b16 %v3420, %v3417
    %v3607 = vpack.c.b16 %v3424, %v3421
    %v3608 = vpack.c.b16 %v3425, %v3422
    %v3609 = vpack.c.b16 %v3426, %v3423
    %v3610 = vpack.c.b16 %v3430, %v3427
    %v3611 = vpack.c.b16 %v3431, %v3428
    %v3612 = vpack.c.b16 %v3432, %v3429
    %v3613 = vpack.c.b16 %v3436, %v3433
    %v3614 = vpack.c.b16 %v3437, %v3434
    %v3615 = vpack.c.b16 %v3438, %v3435
    %v3616 = vpack.c.b16 %v3442, %v3439
    %v3617 = vpack.c.b16 %v3443, %v3440
    %v3618 = vpack.c.b16 %v3444, %v3441
    %v3619 = vpack.c.b16 %v3448, %v3445
    %v3620 = vpack.c.b16 %v3449, %v3446
    %v3621 = vpack.c.b16 %v3450, %v3447
    %v3622 = vpack.c.b16 %v3454, %v3451
    %v3623 = vpack.c.b16 %v3455, %v3452
    %v3624 = vpack.c.b16 %v3456, %v3453
    %v3625 = vpack.c.b16 %v3460, %v3457
    %v3626 = vpack.c.b16 %v3461, %v3458
    %v3627 = vpack.c.b16 %v3462, %v3459
    %v3628 = vpack.c.b16 %v3466, %v3463
    %v3629 = vpack.c.b16 %v3467, %v3464
    %v3630 = vpack.c.b16 %v3468, %v3465
    %v3631 = vpack.c.b16 %v3472, %v3469
    %v3632 = vpack.c.b16 %v3473, %v3470
    %v3633 = vpack.c.b16 %v3474, %v3471
    %v3634 = vpack.c.b16 %v3478, %v3475
    %v3635 = vpack.c.b16 %v3479, %v3476
    %v3636 = vpack.c.b16 %v3480, %v3477
    %v3637 = vpack.c.b16 %v3484, %v3481
    %v3638 = vpack.c.b16 %v3485, %v3482
    %v3639 = vpack.c.b16 %v3486, %v3483
    %v3640 = vpack.c.b16 %v3490, %v3487
    %v3641 = vpack.c.b16 %v3491, %v3488
    %v3642 = vpack.c.b16 %v3492, %v3489
    %v3643 = vpack.c.b16 %v3496, %v3493
    %v3644 = vpack.c.b16 %v3497, %v3494
    %v3645 = vpack.c.b16 %v3498, %v3495
    %v3646 = vpack.c.b16 %v3502, %v3499
    %v3647 = vpack.c.b16 %v3503, %v3500
    %v3648 = vpack.c.b16 %v3504, %v3501
    %v3649 = vpack.c.b16 %v3508, %v3505
    %v3650 = vpack.c.b16 %v3509, %v3506
    %v3651 = vpack.c.b16 %v3510, %v3507
    %v3652 = vpack.c.b16 %v3514, %v3511
    %v3653 = vpack.c.b16 %v3515, %v3512
    %v3654 = vpack.c.b16 %v3516, %v3513
    %v3655 = vpack.c.b16 %v3520, %v3517
    %v3656 = vpack.c.b16 %v3521, %v3518
    %v3657 = vpack.c.b16 %v3522, %v3519
    %v3658 = vpack.c.b16 %v3526, %v3523
    %v3659 = vpack.c.b16 %v3527, %v3524
    %v3660 = vpack.c.b16 %v3528, %v3525
    %v3661 = vpack.c.b16 %v3532, %v3529
    %v3662 = vpack.c.b16 %v3533, %v3530
    %v3663 = vpack.c.b16 %v3534, %v3531
    %v3664 = vpack.c.b16 %v3538, %v3535
    %v3665 = vpack.c.b16 %v3539, %v3536
    %v3666 = vpack.c.b16 %v3540, %v3537
    %v3667 = vpack.c.b16 %v3544, %v3541
    %v3668 = vpack.c.b16 %v3545, %v3542
    %v3669 = vpack.c.b16 %v3546, %v3543
    %v3670 = vpack.c.b16 %v3550, %v3547
    %v3671 = vpack.c.b16 %v3551, %v3548
    %v3672 = vpack.c.b16 %v3552, %v3549
    %v3673 = vpack.c.b16 %v3556, %v3553
    %v3674 = vpack.c.b16 %v3557, %v3554
    %v3675 = vpack.c.b16 %v3558, %v3555
    %v3676 = vpack.c.b16 %v3562, %v3559
    %v3677 = vpack.c.b16 %v3563, %v3560
    %v3678 = vpack.c.b16 %v3564, %v3561
    %v3679 = vpack.c.b16 %v3568, %v3565
    %v3680 = vpack.c.b16 %v3569, %v3566
    %v3681 = vpack.c.b16 %v3570, %v3567
    %v3682 = vpack.c.b16 %v3574, %v3571
    %v3683 = vpack.c.b16 %v3575, %v3572
    %v3684 = vpack.c.b16 %v3576, %v3573
    %v3685 = vpack.c.b16 %v3580, %v3577
    %v3686 = vpack.c.b16 %v3581, %v3578
    %v3687 = vpack.c.b16 %v3582, %v3579
    %v3688 = vpack.c.b16 %v3586, %v3583
    %v3689 = vpack.c.b16 %v3587, %v3584
    %v3690 = vpack.c.b16 %v3588, %v3585
    %v3691 = vpack.c.b16 %v3592, %v3589
    %v3692 = vpack.c.b16 %v3593, %v3590
    %v3693 = vpack.c.b16 %v3594, %v3591
    %v3694 = vpack.c.b16 %v3598, %v3595
    %v3695 = vpack.c.b16 %v3599, %v3596
    %v3696 = vpack.c.b16 %v3600, %v3597
    %3793 = vmatpush.bf16.msra.mxu0 %v3622
    %3794 = vmatpush.bf16.msra.mxu0 %v3619
    %3795 = vmatpush.bf16.msra.mxu0 %v3616
    %3796 = vmatpush.bf16.msra.mxu0 %v3613
    %3797 = vmatpush.bf16.msra.mxu0 %v3610
    %3798 = vmatpush.bf16.msra.mxu0 %v3607
    %3799 = vmatpush.bf16.msra.mxu0 %v3604
    %3800 = vmatpush.bf16.msra.mxu0 %v3601
    %3801 = vmatmul.bf16.gmra.mxu0 %v3273
    %v3802 = vpop.f32.mrf.mxu0
    %v3803 = vadd.f32 0.0, %v3802
    %v3804 = vpop.f32.mrf.mxu0
    %v3805 = vadd.f32 0.0, %v3804
    %3806 = vdwg.mxu0
    %3807 = vmatpush.bf16.msra.mxu0 %v3646
    %3808 = vmatpush.bf16.msra.mxu0 %v3643
    %3809 = vmatpush.bf16.msra.mxu0 %v3640
    %3810 = vmatpush.bf16.msra.mxu0 %v3637
    %3811 = vmatpush.bf16.msra.mxu0 %v3634
    %3812 = vmatpush.bf16.msra.mxu0 %v3631
    %3813 = vmatpush.bf16.msra.mxu0 %v3628
    %3814 = vmatpush.bf16.msra.mxu0 %v3625
    %3815 = vmatmul.bf16.gmra.mxu0 %v3274
    %v3816 = vpop.f32.mrf.mxu0
    %v3817 = vadd.f32 %v3803, %v3816
    %v3818 = vpop.f32.mrf.mxu0
    %v3819 = vadd.f32 %v3805, %v3818
    %3820 = vdwg.mxu0
    %3821 = vmatpush.bf16.msra.mxu0 %v3670
    %3822 = vmatpush.bf16.msra.mxu0 %v3667
    %3823 = vmatpush.bf16.msra.mxu0 %v3664
    %3824 = vmatpush.bf16.msra.mxu0 %v3661
    %3825 = vmatpush.bf16.msra.mxu0 %v3658
    %3826 = vmatpush.bf16.msra.mxu0 %v3655
    %3827 = vmatpush.bf16.msra.mxu0 %v3652
    %3828 = vmatpush.bf16.msra.mxu0 %v3649
    %3829 = vmatmul.bf16.gmra.mxu0 %v3275
    %v3830 = vpop.f32.mrf.mxu0
    %v3831 = vadd.f32 %v3817, %v3830
    %v3832 = vpop.f32.mrf.mxu0
    %v3833 = vadd.f32 %v3819, %v3832
    %3834 = vdwg.mxu0
    %3835 = vmatpush.bf16.msra.mxu0 %v3694
    %3836 = vmatpush.bf16.msra.mxu0 %v3691
    %3837 = vmatpush.bf16.msra.mxu0 %v3688
    %3838 = vmatpush.bf16.msra.mxu0 %v3685
    %3839 = vmatpush.bf16.msra.mxu0 %v3682
    %3840 = vmatpush.bf16.msra.mxu0 %v3679
    %3841 = vmatpush.bf16.msra.mxu0 %v3676
    %3842 = vmatpush.bf16.msra.mxu0 %v3673
    %3843 = vmatmul.bf16.gmra.mxu0 %v3276
    %v3844 = vpop.f32.mrf.mxu0
    %v3845 = vadd.f32 %v3831, %v3844
    %v3846 = vpop.f32.mrf.mxu0
    %v3847 = vadd.f32 %v3833, %v3846
    %3848 = vdwg.mxu0
    %3849 = vmatpush.bf16.msra.mxu0 %v3623
    %3850 = vmatpush.bf16.msra.mxu0 %v3620
    %3851 = vmatpush.bf16.msra.mxu0 %v3617
    %3852 = vmatpush.bf16.msra.mxu0 %v3614
    %3853 = vmatpush.bf16.msra.mxu0 %v3611
    %3854 = vmatpush.bf16.msra.mxu0 %v3608
    %3855 = vmatpush.bf16.msra.mxu0 %v3605
    %3856 = vmatpush.bf16.msra.mxu0 %v3602
    %3857 = vmatmul.bf16.gmra.mxu0 %v3273
    %v3858 = vpop.f32.mrf.mxu0
    %v3859 = vadd.f32 0.0, %v3858
    %v3860 = vpop.f32.mrf.mxu0
    %v3861 = vadd.f32 0.0, %v3860
    %3862 = vdwg.mxu0
    %3863 = vmatpush.bf16.msra.mxu0 %v3647
    %3864 = vmatpush.bf16.msra.mxu0 %v3644
    %3865 = vmatpush.bf16.msra.mxu0 %v3641
    %3866 = vmatpush.bf16.msra.mxu0 %v3638
    %3867 = vmatpush.bf16.msra.mxu0 %v3635
    %3868 = vmatpush.bf16.msra.mxu0 %v3632
    %3869 = vmatpush.bf16.msra.mxu0 %v3629
    %3870 = vmatpush.bf16.msra.mxu0 %v3626
    %3871 = vmatmul.bf16.gmra.mxu0 %v3274
    %v3872 = vpop.f32.mrf.mxu0
    %v3873 = vadd.f32 %v3859, %v3872
    %v3874 = vpop.f32.mrf.mxu0
    %v3875 = vadd.f32 %v3861, %v3874
    %3876 = vdwg.mxu0
    %3877 = vmatpush.bf16.msra.mxu0 %v3671
    %3878 = vmatpush.bf16.msra.mxu0 %v3668
    %3879 = vmatpush.bf16.msra.mxu0 %v3665
    %3880 = vmatpush.bf16.msra.mxu0 %v3662
    %3881 = vmatpush.bf16.msra.mxu0 %v3659
    %3882 = vmatpush.bf16.msra.mxu0 %v3656
    %3883 = vmatpush.bf16.msra.mxu0 %v3653
    %3884 = vmatpush.bf16.msra.mxu0 %v3650
    %3885 = vmatmul.bf16.gmra.mxu0 %v3275
    %v3886 = vpop.f32.mrf.mxu0
    %v3887 = vadd.f32 %v3873, %v3886
    %v3888 = vpop.f32.mrf.mxu0
    %v3889 = vadd.f32 %v3875, %v3888
    %3890 = vdwg.mxu0
    %3891 = vmatpush.bf16.msra.mxu0 %v3695
    %3892 = vmatpush.bf16.msra.mxu0 %v3692
    %3893 = vmatpush.bf16.msra.mxu0 %v3689
    %3894 = vmatpush.bf16.msra.mxu0 %v3686
    %3895 = vmatpush.bf16.msra.mxu0 %v3683
    %3896 = vmatpush.bf16.msra.mxu0 %v3680
    %3897 = vmatpush.bf16.msra.mxu0 %v3677
    %3898 = vmatpush.bf16.msra.mxu0 %v3674
    %3899 = vmatmul.bf16.gmra.mxu0 %v3276
    %v3900 = vpop.f32.mrf.mxu0
    %v3901 = vadd.f32 %v3887, %v3900
    %v3902 = vpop.f32.mrf.mxu0
    %v3903 = vadd.f32 %v3889, %v3902
    %3904 = vdwg.mxu0
    %3905 = vmatpush.bf16.msra.mxu0 %v3624
    %3906 = vmatpush.bf16.msra.mxu0 %v3621
    %3907 = vmatpush.bf16.msra.mxu0 %v3618
    %3908 = vmatpush.bf16.msra.mxu0 %v3615
    %3909 = vmatpush.bf16.msra.mxu0 %v3612
    %3910 = vmatpush.bf16.msra.mxu0 %v3609
    %3911 = vmatpush.bf16.msra.mxu0 %v3606
    %3912 = vmatpush.bf16.msra.mxu0 %v3603
    %3913 = vmatmul.bf16.gmra.mxu0 %v3273
    %v3914 = vpop.f32.mrf.mxu0
    %v3915 = vadd.f32 0.0, %v3914
    %v3916 = vpop.f32.mrf.mxu0
    %v3917 = vadd.f32 0.0, %v3916
    %3918 = vdwg.mxu0
    %3919 = vmatpush.bf16.msra.mxu0 %v3648
    %3920 = vmatpush.bf16.msra.mxu0 %v3645
    %3921 = vmatpush.bf16.msra.mxu0 %v3642
    %3922 = vmatpush.bf16.msra.mxu0 %v3639
    %3923 = vmatpush.bf16.msra.mxu0 %v3636
    %3924 = vmatpush.bf16.msra.mxu0 %v3633
    %3925 = vmatpush.bf16.msra.mxu0 %v3630
    %3926 = vmatpush.bf16.msra.mxu0 %v3627
    %3927 = vmatmul.bf16.gmra.mxu0 %v3274
    %v3928 = vpop.f32.mrf.mxu0
    %v3929 = vadd.f32 %v3915, %v3928
    %v3930 = vpop.f32.mrf.mxu0
    %v3931 = vadd.f32 %v3917, %v3930
    %3932 = vdwg.mxu0
    %3933 = vmatpush.bf16.msra.mxu0 %v3672
    %3934 = vmatpush.bf16.msra.mxu0 %v3669
    %3935 = vmatpush.bf16.msra.mxu0 %v3666
    %3936 = vmatpush.bf16.msra.mxu0 %v3663
    %3937 = vmatpush.bf16.msra.mxu0 %v3660
    %3938 = vmatpush.bf16.msra.mxu0 %v3657
    %3939 = vmatpush.bf16.msra.mxu0 %v3654
    %3940 = vmatpush.bf16.msra.mxu0 %v3651
    %3941 = vmatmul.bf16.gmra.mxu0 %v3275
    %v3942 = vpop.f32.mrf.mxu0
    %v3943 = vadd.f32 %v3929, %v3942
    %v3944 = vpop.f32.mrf.mxu0
    %v3945 = vadd.f32 %v3931, %v3944
    %3946 = vdwg.mxu0
    %3947 = vmatpush.bf16.msra.mxu0 %v3696
    %3948 = vmatpush.bf16.msra.mxu0 %v3693
    %3949 = vmatpush.bf16.msra.mxu0 %v3690
    %3950 = vmatpush.bf16.msra.mxu0 %v3687
    %3951 = vmatpush.bf16.msra.mxu0 %v3684
    %3952 = vmatpush.bf16.msra.mxu0 %v3681
    %3953 = vmatpush.bf16.msra.mxu0 %v3678
    %3954 = vmatpush.bf16.msra.mxu0 %v3675
    %3955 = vmatmul.bf16.gmra.mxu0 %v3276
    %v3956 = vpop.f32.mrf.mxu0
    %v3957 = vadd.f32 %v3943, %v3956
    %v3958 = vpop.f32.mrf.mxu0
    %v3959 = vadd.f32 %v3945, %v3958
    %3960 = vdwg.mxu0
    %v3961 = vadd.f32 %v3119, %v3845
    %v3962 = vadd.f32 %v3120, %v3901
    %v3963 = vadd.f32 %v3121, %v3957
    %v3964 = vadd.f32 %v3122, %v3847
    %v3965 = vadd.f32 %v3123, %v3903
    %v3966 = vadd.f32 %v3124, %v3959
    %v3967 = vld [vmem:[#allocation3] sm:$0xcc]
    %v3968 = vld [vmem:[#allocation3 + $0x8] sm:$0xcc]
    %v3969 = vld [vmem:[#allocation3 + $0x10] sm:$0xff]
    %v3970 = vld [vmem:[#allocation3 + $0x18] sm:$0xff]
    %v3971 = vld [vmem:[#allocation10 + $0xc00] sm:$0xff]
    %v3972 = vld [vmem:[#allocation10 + $0xc08] sm:$0xf]
    %v3973 = vld [vmem:[#allocation10 + $0xc0c] sm:$0xff]
    %v3974 = vld [vmem:[#allocation10 + $0xc14] sm:$0xf]
    %v3975 = vld [vmem:[#allocation10 + $0xc18] sm:$0xff]
    %v3976 = vld [vmem:[#allocation10 + $0xc20] sm:$0xf]
    %v3977 = vld [vmem:[#allocation10 + $0xc24] sm:$0xff]
    %v3978 = vld [vmem:[#allocation10 + $0xc2c] sm:$0xf]
    %v3979 = vld [vmem:[#allocation10 + $0xc30] sm:$0xff]
    %v3980 = vld [vmem:[#allocation10 + $0xc38] sm:$0xf]
    %v3981 = vld [vmem:[#allocation10 + $0xc3c] sm:$0xff]
    %v3982 = vld [vmem:[#allocation10 + $0xc44] sm:$0xf]
    %v3983 = vld [vmem:[#allocation10 + $0xc48] sm:$0xff]
    %v3984 = vld [vmem:[#allocation10 + $0xc50] sm:$0xf]
    %v3985 = vld [vmem:[#allocation10 + $0xc54] sm:$0xff]
    %v3986 = vld [vmem:[#allocation10 + $0xc5c] sm:$0xf]
    %v3987 = vld [vmem:[#allocation10 + $0xc60] sm:$0xff]
    %v3988 = vld [vmem:[#allocation10 + $0xc68] sm:$0xf]
    %v3989 = vld [vmem:[#allocation10 + $0xc6c] sm:$0xff]
    %v3990 = vld [vmem:[#allocation10 + $0xc74] sm:$0xf]
    %v3991 = vld [vmem:[#allocation10 + $0xc78] sm:$0xff]
    %v3992 = vld [vmem:[#allocation10 + $0xc80] sm:$0xf]
    %v3993 = vld [vmem:[#allocation10 + $0xc84] sm:$0xff]
    %v3994 = vld [vmem:[#allocation10 + $0xc8c] sm:$0xf]
    %v3995 = vld [vmem:[#allocation10 + $0xc90] sm:$0xff]
    %v3996 = vld [vmem:[#allocation10 + $0xc98] sm:$0xf]
    %v3997 = vld [vmem:[#allocation10 + $0xc9c] sm:$0xff]
    %v3998 = vld [vmem:[#allocation10 + $0xca4] sm:$0xf]
    %v3999 = vld [vmem:[#allocation10 + $0xca8] sm:$0xff]
    %v4000 = vld [vmem:[#allocation10 + $0xcb0] sm:$0xf]
    %v4001 = vld [vmem:[#allocation10 + $0xcb4] sm:$0xff]
    %v4002 = vld [vmem:[#allocation10 + $0xcbc] sm:$0xf]
    %v4003 = vld [vmem:[#allocation10 + $0xcc0] sm:$0xff]
    %v4004 = vld [vmem:[#allocation10 + $0xcc8] sm:$0xf]
    %v4005 = vld [vmem:[#allocation10 + $0xccc] sm:$0xff]
    %v4006 = vld [vmem:[#allocation10 + $0xcd4] sm:$0xf]
    %v4007 = vld [vmem:[#allocation10 + $0xcd8] sm:$0xff]
    %v4008 = vld [vmem:[#allocation10 + $0xce0] sm:$0xf]
    %v4009 = vld [vmem:[#allocation10 + $0xce4] sm:$0xff]
    %v4010 = vld [vmem:[#allocation10 + $0xcec] sm:$0xf]
    %v4011 = vld [vmem:[#allocation10 + $0xcf0] sm:$0xff]
    %v4012 = vld [vmem:[#allocation10 + $0xcf8] sm:$0xf]
    %v4013 = vld [vmem:[#allocation10 + $0xcfc] sm:$0xff]
    %v4014 = vld [vmem:[#allocation10 + $0xd04] sm:$0xf]
    %v4015 = vld [vmem:[#allocation10 + $0xd08] sm:$0xff]
    %v4016 = vld [vmem:[#allocation10 + $0xd10] sm:$0xf]
    %v4017 = vld [vmem:[#allocation10 + $0xd14] sm:$0xff]
    %v4018 = vld [vmem:[#allocation10 + $0xd1c] sm:$0xf]
    %v4019 = vld [vmem:[#allocation10 + $0xd20] sm:$0xff]
    %v4020 = vld [vmem:[#allocation10 + $0xd28] sm:$0xf]
    %v4021 = vld [vmem:[#allocation10 + $0xd2c] sm:$0xff]
    %v4022 = vld [vmem:[#allocation10 + $0xd34] sm:$0xf]
    %v4023 = vld [vmem:[#allocation10 + $0xd38] sm:$0xff]
    %v4024 = vld [vmem:[#allocation10 + $0xd40] sm:$0xf]
    %v4025 = vld [vmem:[#allocation10 + $0xd44] sm:$0xff]
    %v4026 = vld [vmem:[#allocation10 + $0xd4c] sm:$0xf]
    %v4027 = vld [vmem:[#allocation10 + $0xd50] sm:$0xff]
    %v4028 = vld [vmem:[#allocation10 + $0xd58] sm:$0xf]
    %v4029 = vld [vmem:[#allocation10 + $0xd5c] sm:$0xff]
    %v4030 = vld [vmem:[#allocation10 + $0xd64] sm:$0xf]
    %v4031 = vld [vmem:[#allocation10 + $0xd68] sm:$0xff]
    %v4032 = vld [vmem:[#allocation10 + $0xd70] sm:$0xf]
    %v4033 = vld [vmem:[#allocation10 + $0xd74] sm:$0xff]
    %v4034 = vld [vmem:[#allocation10 + $0xd7c] sm:$0xf]
    %v4035 = vld [vmem:[#allocation10 + $0xd80] sm:$0xff]
    %v4036 = vld [vmem:[#allocation10 + $0xd88] sm:$0xf]
    %v4037 = vld [vmem:[#allocation10 + $0xd8c] sm:$0xff]
    %v4038 = vld [vmem:[#allocation10 + $0xd94] sm:$0xf]
    %v4039 = vld [vmem:[#allocation10 + $0xd98] sm:$0xff]
    %v4040 = vld [vmem:[#allocation10 + $0xda0] sm:$0xf]
    %v4041 = vld [vmem:[#allocation10 + $0xda4] sm:$0xff]
    %v4042 = vld [vmem:[#allocation10 + $0xdac] sm:$0xf]
    %v4043 = vld [vmem:[#allocation10 + $0xdb0] sm:$0xff]
    %v4044 = vld [vmem:[#allocation10 + $0xdb8] sm:$0xf]
    %v4045 = vld [vmem:[#allocation10 + $0xdbc] sm:$0xff]
    %v4046 = vld [vmem:[#allocation10 + $0xdc4] sm:$0xf]
    %v4047 = vld [vmem:[#allocation10 + $0xdc8] sm:$0xff]
    %v4048 = vld [vmem:[#allocation10 + $0xdd0] sm:$0xf]
    %v4049 = vld [vmem:[#allocation10 + $0xdd4] sm:$0xff]
    %v4050 = vld [vmem:[#allocation10 + $0xddc] sm:$0xf]
    %v4051 = vld [vmem:[#allocation10 + $0xde0] sm:$0xff]
    %v4052 = vld [vmem:[#allocation10 + $0xde8] sm:$0xf]
    %v4053 = vld [vmem:[#allocation10 + $0xdec] sm:$0xff]
    %v4054 = vld [vmem:[#allocation10 + $0xdf4] sm:$0xf]
    %v4055 = vld [vmem:[#allocation10 + $0xdf8] sm:$0xff]
    %v4056 = vld [vmem:[#allocation10 + $0xe00] sm:$0xf]
    %v4057 = vld [vmem:[#allocation10 + $0xe04] sm:$0xff]
    %v4058 = vld [vmem:[#allocation10 + $0xe0c] sm:$0xf]
    %v4059 = vld [vmem:[#allocation10 + $0xe10] sm:$0xff]
    %v4060 = vld [vmem:[#allocation10 + $0xe18] sm:$0xf]
    %v4061 = vld [vmem:[#allocation10 + $0xe1c] sm:$0xff]
    %v4062 = vld [vmem:[#allocation10 + $0xe24] sm:$0xf]
    %v4063 = vld [vmem:[#allocation10 + $0xe28] sm:$0xff]
    %v4064 = vld [vmem:[#allocation10 + $0xe30] sm:$0xf]
    %v4065 = vld [vmem:[#allocation10 + $0xe34] sm:$0xff]
    %v4066 = vld [vmem:[#allocation10 + $0xe3c] sm:$0xf]
    %v4067 = vld [vmem:[#allocation10 + $0xe40] sm:$0xff]
    %v4068 = vld [vmem:[#allocation10 + $0xe48] sm:$0xf]
    %v4069 = vld [vmem:[#allocation10 + $0xe4c] sm:$0xff]
    %v4070 = vld [vmem:[#allocation10 + $0xe54] sm:$0xf]
    %v4071 = vld [vmem:[#allocation10 + $0xe58] sm:$0xff]
    %v4072 = vld [vmem:[#allocation10 + $0xe60] sm:$0xf]
    %v4073 = vld [vmem:[#allocation10 + $0xe64] sm:$0xff]
    %v4074 = vld [vmem:[#allocation10 + $0xe6c] sm:$0xf]
    %v4075 = vld [vmem:[#allocation10 + $0xe70] sm:$0xff]
    %v4076 = vld [vmem:[#allocation10 + $0xe78] sm:$0xf]
    %v4077 = vld [vmem:[#allocation10 + $0xe7c] sm:$0xff]
    %v4078 = vld [vmem:[#allocation10 + $0xe84] sm:$0xf]
    %v4079 = vld [vmem:[#allocation10 + $0xe88] sm:$0xff]
    %v4080 = vld [vmem:[#allocation10 + $0xe90] sm:$0xf]
    %v4081 = vld [vmem:[#allocation10 + $0xe94] sm:$0xff]
    %v4082 = vld [vmem:[#allocation10 + $0xe9c] sm:$0xf]
    %v4083 = vld [vmem:[#allocation10 + $0xea0] sm:$0xff]
    %v4084 = vld [vmem:[#allocation10 + $0xea8] sm:$0xf]
    %v4085 = vld [vmem:[#allocation10 + $0xeac] sm:$0xff]
    %v4086 = vld [vmem:[#allocation10 + $0xeb4] sm:$0xf]
    %v4087 = vld [vmem:[#allocation10 + $0xeb8] sm:$0xff]
    %v4088 = vld [vmem:[#allocation10 + $0xec0] sm:$0xf]
    %v4089 = vld [vmem:[#allocation10 + $0xec4] sm:$0xff]
    %v4090 = vld [vmem:[#allocation10 + $0xecc] sm:$0xf]
    %v4091 = vld [vmem:[#allocation10 + $0xed0] sm:$0xff]
    %v4092 = vld [vmem:[#allocation10 + $0xed8] sm:$0xf]
    %v4093 = vld [vmem:[#allocation10 + $0xedc] sm:$0xff]
    %v4094 = vld [vmem:[#allocation10 + $0xee4] sm:$0xf]
    %v4095 = vld [vmem:[#allocation10 + $0xee8] sm:$0xff]
    %v4096 = vld [vmem:[#allocation10 + $0xef0] sm:$0xf]
    %v4097 = vld [vmem:[#allocation10 + $0xef4] sm:$0xff]
    %v4098 = vld [vmem:[#allocation10 + $0xefc] sm:$0xf]
    %v4103 = vunpack.c.l.b16 %v3967
    %v4104 = vunpack.c.h.b16 %v3967
    %v4105 = vunpack.c.l.b16 %v3968
    %v4106 = vunpack.c.h.b16 %v3968
    %v4107 = vunpack.c.l.b16 %v3969
    %v4108 = vunpack.c.h.b16 %v3969
    %v4109 = vunpack.c.l.b16 %v3970
    %v4110 = vunpack.c.h.b16 %v3970
    %v4111 = vpack.c.b16 %v4107, %v4103
    %v4112 = vpack.c.b16 %v4108, %v4104
    %v4113 = vpack.c.b16 %v4109, %v4105
    %v4114 = vpack.c.b16 %v4110, %v4106
    %v4115 = vrot.slane %v4111, 2
    %v4116 = vrot.slane %v4112, 2
    %v4117 = vrot.slane %v4113, 2
    %v4118 = vrot.slane %v4114, 2
    %v4251 = vunpack.c.l.b16 %v3971
    %v4252 = vunpack.c.h.b16 %v3971
    %v4253 = vunpack.c.l.b16 %v3972
    %v4254 = vunpack.c.l.b16 %v3973
    %v4255 = vunpack.c.h.b16 %v3973
    %v4256 = vunpack.c.l.b16 %v3974
    %v4257 = vunpack.c.l.b16 %v3975
    %v4258 = vunpack.c.h.b16 %v3975
    %v4259 = vunpack.c.l.b16 %v3976
    %v4260 = vunpack.c.l.b16 %v3977
    %v4261 = vunpack.c.h.b16 %v3977
    %v4262 = vunpack.c.l.b16 %v3978
    %v4263 = vunpack.c.l.b16 %v3979
    %v4264 = vunpack.c.h.b16 %v3979
    %v4265 = vunpack.c.l.b16 %v3980
    %v4266 = vunpack.c.l.b16 %v3981
    %v4267 = vunpack.c.h.b16 %v3981
    %v4268 = vunpack.c.l.b16 %v3982
    %v4269 = vunpack.c.l.b16 %v3983
    %v4270 = vunpack.c.h.b16 %v3983
    %v4271 = vunpack.c.l.b16 %v3984
    %v4272 = vunpack.c.l.b16 %v3985
    %v4273 = vunpack.c.h.b16 %v3985
    %v4274 = vunpack.c.l.b16 %v3986
    %v4275 = vunpack.c.l.b16 %v3987
    %v4276 = vunpack.c.h.b16 %v3987
    %v4277 = vunpack.c.l.b16 %v3988
    %v4278 = vunpack.c.l.b16 %v3989
    %v4279 = vunpack.c.h.b16 %v3989
    %v4280 = vunpack.c.l.b16 %v3990
    %v4281 = vunpack.c.l.b16 %v3991
    %v4282 = vunpack.c.h.b16 %v3991
    %v4283 = vunpack.c.l.b16 %v3992
    %v4284 = vunpack.c.l.b16 %v3993
    %v4285 = vunpack.c.h.b16 %v3993
    %v4286 = vunpack.c.l.b16 %v3994
    %v4287 = vunpack.c.l.b16 %v3995
    %v4288 = vunpack.c.h.b16 %v3995
    %v4289 = vunpack.c.l.b16 %v3996
    %v4290 = vunpack.c.l.b16 %v3997
    %v4291 = vunpack.c.h.b16 %v3997
    %v4292 = vunpack.c.l.b16 %v3998
    %v4293 = vunpack.c.l.b16 %v3999
    %v4294 = vunpack.c.h.b16 %v3999
    %v4295 = vunpack.c.l.b16 %v4000
    %v4296 = vunpack.c.l.b16 %v4001
    %v4297 = vunpack.c.h.b16 %v4001
    %v4298 = vunpack.c.l.b16 %v4002
    %v4299 = vunpack.c.l.b16 %v4003
    %v4300 = vunpack.c.h.b16 %v4003
    %v4301 = vunpack.c.l.b16 %v4004
    %v4302 = vunpack.c.l.b16 %v4005
    %v4303 = vunpack.c.h.b16 %v4005
    %v4304 = vunpack.c.l.b16 %v4006
    %v4305 = vunpack.c.l.b16 %v4007
    %v4306 = vunpack.c.h.b16 %v4007
    %v4307 = vunpack.c.l.b16 %v4008
    %v4308 = vunpack.c.l.b16 %v4009
    %v4309 = vunpack.c.h.b16 %v4009
    %v4310 = vunpack.c.l.b16 %v4010
    %v4311 = vunpack.c.l.b16 %v4011
    %v4312 = vunpack.c.h.b16 %v4011
    %v4313 = vunpack.c.l.b16 %v4012
    %v4314 = vunpack.c.l.b16 %v4013
    %v4315 = vunpack.c.h.b16 %v4013
    %v4316 = vunpack.c.l.b16 %v4014
    %v4317 = vunpack.c.l.b16 %v4015
    %v4318 = vunpack.c.h.b16 %v4015
    %v4319 = vunpack.c.l.b16 %v4016
    %v4320 = vunpack.c.l.b16 %v4017
    %v4321 = vunpack.c.h.b16 %v4017
    %v4322 = vunpack.c.l.b16 %v4018
    %v4323 = vunpack.c.l.b16 %v4019
    %v4324 = vunpack.c.h.b16 %v4019
    %v4325 = vunpack.c.l.b16 %v4020
    %v4326 = vunpack.c.l.b16 %v4021
    %v4327 = vunpack.c.h.b16 %v4021
    %v4328 = vunpack.c.l.b16 %v4022
    %v4329 = vunpack.c.l.b16 %v4023
    %v4330 = vunpack.c.h.b16 %v4023
    %v4331 = vunpack.c.l.b16 %v4024
    %v4332 = vunpack.c.l.b16 %v4025
    %v4333 = vunpack.c.h.b16 %v4025
    %v4334 = vunpack.c.l.b16 %v4026
    %v4335 = vunpack.c.l.b16 %v4027
    %v4336 = vunpack.c.h.b16 %v4027
    %v4337 = vunpack.c.l.b16 %v4028
    %v4338 = vunpack.c.l.b16 %v4029
    %v4339 = vunpack.c.h.b16 %v4029
    %v4340 = vunpack.c.l.b16 %v4030
    %v4341 = vunpack.c.l.b16 %v4031
    %v4342 = vunpack.c.h.b16 %v4031
    %v4343 = vunpack.c.l.b16 %v4032
    %v4344 = vunpack.c.l.b16 %v4033
    %v4345 = vunpack.c.h.b16 %v4033
    %v4346 = vunpack.c.l.b16 %v4034
    %v4347 = vunpack.c.l.b16 %v4035
    %v4348 = vunpack.c.h.b16 %v4035
    %v4349 = vunpack.c.l.b16 %v4036
    %v4350 = vunpack.c.l.b16 %v4037
    %v4351 = vunpack.c.h.b16 %v4037
    %v4352 = vunpack.c.l.b16 %v4038
    %v4353 = vunpack.c.l.b16 %v4039
    %v4354 = vunpack.c.h.b16 %v4039
    %v4355 = vunpack.c.l.b16 %v4040
    %v4356 = vunpack.c.l.b16 %v4041
    %v4357 = vunpack.c.h.b16 %v4041
    %v4358 = vunpack.c.l.b16 %v4042
    %v4359 = vunpack.c.l.b16 %v4043
    %v4360 = vunpack.c.h.b16 %v4043
    %v4361 = vunpack.c.l.b16 %v4044
    %v4362 = vunpack.c.l.b16 %v4045
    %v4363 = vunpack.c.h.b16 %v4045
    %v4364 = vunpack.c.l.b16 %v4046
    %v4365 = vunpack.c.l.b16 %v4047
    %v4366 = vunpack.c.h.b16 %v4047
    %v4367 = vunpack.c.l.b16 %v4048
    %v4368 = vunpack.c.l.b16 %v4049
    %v4369 = vunpack.c.h.b16 %v4049
    %v4370 = vunpack.c.l.b16 %v4050
    %v4371 = vunpack.c.l.b16 %v4051
    %v4372 = vunpack.c.h.b16 %v4051
    %v4373 = vunpack.c.l.b16 %v4052
    %v4374 = vunpack.c.l.b16 %v4053
    %v4375 = vunpack.c.h.b16 %v4053
    %v4376 = vunpack.c.l.b16 %v4054
    %v4377 = vunpack.c.l.b16 %v4055
    %v4378 = vunpack.c.h.b16 %v4055
    %v4379 = vunpack.c.l.b16 %v4056
    %v4380 = vunpack.c.l.b16 %v4057
    %v4381 = vunpack.c.h.b16 %v4057
    %v4382 = vunpack.c.l.b16 %v4058
    %v4383 = vunpack.c.l.b16 %v4059
    %v4384 = vunpack.c.h.b16 %v4059
    %v4385 = vunpack.c.l.b16 %v4060
    %v4386 = vunpack.c.l.b16 %v4061
    %v4387 = vunpack.c.h.b16 %v4061
    %v4388 = vunpack.c.l.b16 %v4062
    %v4389 = vunpack.c.l.b16 %v4063
    %v4390 = vunpack.c.h.b16 %v4063
    %v4391 = vunpack.c.l.b16 %v4064
    %v4392 = vunpack.c.l.b16 %v4065
    %v4393 = vunpack.c.h.b16 %v4065
    %v4394 = vunpack.c.l.b16 %v4066
    %v4395 = vunpack.c.l.b16 %v4067
    %v4396 = vunpack.c.h.b16 %v4067
    %v4397 = vunpack.c.l.b16 %v4068
    %v4398 = vunpack.c.l.b16 %v4069
    %v4399 = vunpack.c.h.b16 %v4069
    %v4400 = vunpack.c.l.b16 %v4070
    %v4401 = vunpack.c.l.b16 %v4071
    %v4402 = vunpack.c.h.b16 %v4071
    %v4403 = vunpack.c.l.b16 %v4072
    %v4404 = vunpack.c.l.b16 %v4073
    %v4405 = vunpack.c.h.b16 %v4073
    %v4406 = vunpack.c.l.b16 %v4074
    %v4407 = vunpack.c.l.b16 %v4075
    %v4408 = vunpack.c.h.b16 %v4075
    %v4409 = vunpack.c.l.b16 %v4076
    %v4410 = vunpack.c.l.b16 %v4077
    %v4411 = vunpack.c.h.b16 %v4077
    %v4412 = vunpack.c.l.b16 %v4078
    %v4413 = vunpack.c.l.b16 %v4079
    %v4414 = vunpack.c.h.b16 %v4079
    %v4415 = vunpack.c.l.b16 %v4080
    %v4416 = vunpack.c.l.b16 %v4081
    %v4417 = vunpack.c.h.b16 %v4081
    %v4418 = vunpack.c.l.b16 %v4082
    %v4419 = vunpack.c.l.b16 %v4083
    %v4420 = vunpack.c.h.b16 %v4083
    %v4421 = vunpack.c.l.b16 %v4084
    %v4422 = vunpack.c.l.b16 %v4085
    %v4423 = vunpack.c.h.b16 %v4085
    %v4424 = vunpack.c.l.b16 %v4086
    %v4425 = vunpack.c.l.b16 %v4087
    %v4426 = vunpack.c.h.b16 %v4087
    %v4427 = vunpack.c.l.b16 %v4088
    %v4428 = vunpack.c.l.b16 %v4089
    %v4429 = vunpack.c.h.b16 %v4089
    %v4430 = vunpack.c.l.b16 %v4090
    %v4431 = vunpack.c.l.b16 %v4091
    %v4432 = vunpack.c.h.b16 %v4091
    %v4433 = vunpack.c.l.b16 %v4092
    %v4434 = vunpack.c.l.b16 %v4093
    %v4435 = vunpack.c.h.b16 %v4093
    %v4436 = vunpack.c.l.b16 %v4094
    %v4437 = vunpack.c.l.b16 %v4095
    %v4438 = vunpack.c.h.b16 %v4095
    %v4439 = vunpack.c.l.b16 %v4096
    %v4440 = vunpack.c.l.b16 %v4097
    %v4441 = vunpack.c.h.b16 %v4097
    %v4442 = vunpack.c.l.b16 %v4098
    %v4443 = vpack.c.b16 %v4254, %v4251
    %v4444 = vpack.c.b16 %v4255, %v4252
    %v4445 = vpack.c.b16 %v4256, %v4253
    %v4446 = vpack.c.b16 %v4260, %v4257
    %v4447 = vpack.c.b16 %v4261, %v4258
    %v4448 = vpack.c.b16 %v4262, %v4259
    %v4449 = vpack.c.b16 %v4266, %v4263
    %v4450 = vpack.c.b16 %v4267, %v4264
    %v4451 = vpack.c.b16 %v4268, %v4265
    %v4452 = vpack.c.b16 %v4272, %v4269
    %v4453 = vpack.c.b16 %v4273, %v4270
    %v4454 = vpack.c.b16 %v4274, %v4271
    %v4455 = vpack.c.b16 %v4278, %v4275
    %v4456 = vpack.c.b16 %v4279, %v4276
    %v4457 = vpack.c.b16 %v4280, %v4277
    %v4458 = vpack.c.b16 %v4284, %v4281
    %v4459 = vpack.c.b16 %v4285, %v4282
    %v4460 = vpack.c.b16 %v4286, %v4283
    %v4461 = vpack.c.b16 %v4290, %v4287
    %v4462 = vpack.c.b16 %v4291, %v4288
    %v4463 = vpack.c.b16 %v4292, %v4289
    %v4464 = vpack.c.b16 %v4296, %v4293
    %v4465 = vpack.c.b16 %v4297, %v4294
    %v4466 = vpack.c.b16 %v4298, %v4295
    %v4467 = vpack.c.b16 %v4302, %v4299
    %v4468 = vpack.c.b16 %v4303, %v4300
    %v4469 = vpack.c.b16 %v4304, %v4301
    %v4470 = vpack.c.b16 %v4308, %v4305
    %v4471 = vpack.c.b16 %v4309, %v4306
    %v4472 = vpack.c.b16 %v4310, %v4307
    %v4473 = vpack.c.b16 %v4314, %v4311
    %v4474 = vpack.c.b16 %v4315, %v4312
    %v4475 = vpack.c.b16 %v4316, %v4313
    %v4476 = vpack.c.b16 %v4320, %v4317
    %v4477 = vpack.c.b16 %v4321, %v4318
    %v4478 = vpack.c.b16 %v4322, %v4319
    %v4479 = vpack.c.b16 %v4326, %v4323
    %v4480 = vpack.c.b16 %v4327, %v4324
    %v4481 = vpack.c.b16 %v4328, %v4325
    %v4482 = vpack.c.b16 %v4332, %v4329
    %v4483 = vpack.c.b16 %v4333, %v4330
    %v4484 = vpack.c.b16 %v4334, %v4331
    %v4485 = vpack.c.b16 %v4338, %v4335
    %v4486 = vpack.c.b16 %v4339, %v4336
    %v4487 = vpack.c.b16 %v4340, %v4337
    %v4488 = vpack.c.b16 %v4344, %v4341
    %v4489 = vpack.c.b16 %v4345, %v4342
    %v4490 = vpack.c.b16 %v4346, %v4343
    %v4491 = vpack.c.b16 %v4350, %v4347
    %v4492 = vpack.c.b16 %v4351, %v4348
    %v4493 = vpack.c.b16 %v4352, %v4349
    %v4494 = vpack.c.b16 %v4356, %v4353
    %v4495 = vpack.c.b16 %v4357, %v4354
    %v4496 = vpack.c.b16 %v4358, %v4355
    %v4497 = vpack.c.b16 %v4362, %v4359
    %v4498 = vpack.c.b16 %v4363, %v4360
    %v4499 = vpack.c.b16 %v4364, %v4361
    %v4500 = vpack.c.b16 %v4368, %v4365
    %v4501 = vpack.c.b16 %v4369, %v4366
    %v4502 = vpack.c.b16 %v4370, %v4367
    %v4503 = vpack.c.b16 %v4374, %v4371
    %v4504 = vpack.c.b16 %v4375, %v4372
    %v4505 = vpack.c.b16 %v4376, %v4373
    %v4506 = vpack.c.b16 %v4380, %v4377
    %v4507 = vpack.c.b16 %v4381, %v4378
    %v4508 = vpack.c.b16 %v4382, %v4379
    %v4509 = vpack.c.b16 %v4386, %v4383
    %v4510 = vpack.c.b16 %v4387, %v4384
    %v4511 = vpack.c.b16 %v4388, %v4385
    %v4512 = vpack.c.b16 %v4392, %v4389
    %v4513 = vpack.c.b16 %v4393, %v4390
    %v4514 = vpack.c.b16 %v4394, %v4391
    %v4515 = vpack.c.b16 %v4398, %v4395
    %v4516 = vpack.c.b16 %v4399, %v4396
    %v4517 = vpack.c.b16 %v4400, %v4397
    %v4518 = vpack.c.b16 %v4404, %v4401
    %v4519 = vpack.c.b16 %v4405, %v4402
    %v4520 = vpack.c.b16 %v4406, %v4403
    %v4521 = vpack.c.b16 %v4410, %v4407
    %v4522 = vpack.c.b16 %v4411, %v4408
    %v4523 = vpack.c.b16 %v4412, %v4409
    %v4524 = vpack.c.b16 %v4416, %v4413
    %v4525 = vpack.c.b16 %v4417, %v4414
    %v4526 = vpack.c.b16 %v4418, %v4415
    %v4527 = vpack.c.b16 %v4422, %v4419
    %v4528 = vpack.c.b16 %v4423, %v4420
    %v4529 = vpack.c.b16 %v4424, %v4421
    %v4530 = vpack.c.b16 %v4428, %v4425
    %v4531 = vpack.c.b16 %v4429, %v4426
    %v4532 = vpack.c.b16 %v4430, %v4427
    %v4533 = vpack.c.b16 %v4434, %v4431
    %v4534 = vpack.c.b16 %v4435, %v4432
    %v4535 = vpack.c.b16 %v4436, %v4433
    %v4536 = vpack.c.b16 %v4440, %v4437
    %v4537 = vpack.c.b16 %v4441, %v4438
    %v4538 = vpack.c.b16 %v4442, %v4439
    %4635 = vmatpush.bf16.msra.mxu0 %v4464
    %4636 = vmatpush.bf16.msra.mxu0 %v4461
    %4637 = vmatpush.bf16.msra.mxu0 %v4458
    %4638 = vmatpush.bf16.msra.mxu0 %v4455
    %4639 = vmatpush.bf16.msra.mxu0 %v4452
    %4640 = vmatpush.bf16.msra.mxu0 %v4449
    %4641 = vmatpush.bf16.msra.mxu0 %v4446
    %4642 = vmatpush.bf16.msra.mxu0 %v4443
    %4643 = vmatmul.bf16.gmra.mxu0 %v4115
    %v4644 = vpop.f32.mrf.mxu0
    %v4645 = vadd.f32 0.0, %v4644
    %v4646 = vpop.f32.mrf.mxu0
    %v4647 = vadd.f32 0.0, %v4646
    %4648 = vdwg.mxu0
    %4649 = vmatpush.bf16.msra.mxu0 %v4488
    %4650 = vmatpush.bf16.msra.mxu0 %v4485
    %4651 = vmatpush.bf16.msra.mxu0 %v4482
    %4652 = vmatpush.bf16.msra.mxu0 %v4479
    %4653 = vmatpush.bf16.msra.mxu0 %v4476
    %4654 = vmatpush.bf16.msra.mxu0 %v4473
    %4655 = vmatpush.bf16.msra.mxu0 %v4470
    %4656 = vmatpush.bf16.msra.mxu0 %v4467
    %4657 = vmatmul.bf16.gmra.mxu0 %v4116
    %v4658 = vpop.f32.mrf.mxu0
    %v4659 = vadd.f32 %v4645, %v4658
    %v4660 = vpop.f32.mrf.mxu0
    %v4661 = vadd.f32 %v4647, %v4660
    %4662 = vdwg.mxu0
    %4663 = vmatpush.bf16.msra.mxu0 %v4512
    %4664 = vmatpush.bf16.msra.mxu0 %v4509
    %4665 = vmatpush.bf16.msra.mxu0 %v4506
    %4666 = vmatpush.bf16.msra.mxu0 %v4503
    %4667 = vmatpush.bf16.msra.mxu0 %v4500
    %4668 = vmatpush.bf16.msra.mxu0 %v4497
    %4669 = vmatpush.bf16.msra.mxu0 %v4494
    %4670 = vmatpush.bf16.msra.mxu0 %v4491
    %4671 = vmatmul.bf16.gmra.mxu0 %v4117
    %v4672 = vpop.f32.mrf.mxu0
    %v4673 = vadd.f32 %v4659, %v4672
    %v4674 = vpop.f32.mrf.mxu0
    %v4675 = vadd.f32 %v4661, %v4674
    %4676 = vdwg.mxu0
    %4677 = vmatpush.bf16.msra.mxu0 %v4536
    %4678 = vmatpush.bf16.msra.mxu0 %v4533
    %4679 = vmatpush.bf16.msra.mxu0 %v4530
    %4680 = vmatpush.bf16.msra.mxu0 %v4527
    %4681 = vmatpush.bf16.msra.mxu0 %v4524
    %4682 = vmatpush.bf16.msra.mxu0 %v4521
    %4683 = vmatpush.bf16.msra.mxu0 %v4518
    %4684 = vmatpush.bf16.msra.mxu0 %v4515
    %4685 = vmatmul.bf16.gmra.mxu0 %v4118
    %v4686 = vpop.f32.mrf.mxu0
    %v4687 = vadd.f32 %v4673, %v4686
    %v4688 = vpop.f32.mrf.mxu0
    %v4689 = vadd.f32 %v4675, %v4688
    %4690 = vdwg.mxu0
    %4691 = vmatpush.bf16.msra.mxu0 %v4465
    %4692 = vmatpush.bf16.msra.mxu0 %v4462
    %4693 = vmatpush.bf16.msra.mxu0 %v4459
    %4694 = vmatpush.bf16.msra.mxu0 %v4456
    %4695 = vmatpush.bf16.msra.mxu0 %v4453
    %4696 = vmatpush.bf16.msra.mxu0 %v4450
    %4697 = vmatpush.bf16.msra.mxu0 %v4447
    %4698 = vmatpush.bf16.msra.mxu0 %v4444
    %4699 = vmatmul.bf16.gmra.mxu0 %v4115
    %v4700 = vpop.f32.mrf.mxu0
    %v4701 = vadd.f32 0.0, %v4700
    %v4702 = vpop.f32.mrf.mxu0
    %v4703 = vadd.f32 0.0, %v4702
    %4704 = vdwg.mxu0
    %4705 = vmatpush.bf16.msra.mxu0 %v4489
    %4706 = vmatpush.bf16.msra.mxu0 %v4486
    %4707 = vmatpush.bf16.msra.mxu0 %v4483
    %4708 = vmatpush.bf16.msra.mxu0 %v4480
    %4709 = vmatpush.bf16.msra.mxu0 %v4477
    %4710 = vmatpush.bf16.msra.mxu0 %v4474
    %4711 = vmatpush.bf16.msra.mxu0 %v4471
    %4712 = vmatpush.bf16.msra.mxu0 %v4468
    %4713 = vmatmul.bf16.gmra.mxu0 %v4116
    %v4714 = vpop.f32.mrf.mxu0
    %v4715 = vadd.f32 %v4701, %v4714
    %v4716 = vpop.f32.mrf.mxu0
    %v4717 = vadd.f32 %v4703, %v4716
    %4718 = vdwg.mxu0
    %4719 = vmatpush.bf16.msra.mxu0 %v4513
    %4720 = vmatpush.bf16.msra.mxu0 %v4510
    %4721 = vmatpush.bf16.msra.mxu0 %v4507
    %4722 = vmatpush.bf16.msra.mxu0 %v4504
    %4723 = vmatpush.bf16.msra.mxu0 %v4501
    %4724 = vmatpush.bf16.msra.mxu0 %v4498
    %4725 = vmatpush.bf16.msra.mxu0 %v4495
    %4726 = vmatpush.bf16.msra.mxu0 %v4492
    %4727 = vmatmul.bf16.gmra.mxu0 %v4117
    %v4728 = vpop.f32.mrf.mxu0
    %v4729 = vadd.f32 %v4715, %v4728
    %v4730 = vpop.f32.mrf.mxu0
    %v4731 = vadd.f32 %v4717, %v4730
    %4732 = vdwg.mxu0
    %4733 = vmatpush.bf16.msra.mxu0 %v4537
    %4734 = vmatpush.bf16.msra.mxu0 %v4534
    %4735 = vmatpush.bf16.msra.mxu0 %v4531
    %4736 = vmatpush.bf16.msra.mxu0 %v4528
    %4737 = vmatpush.bf16.msra.mxu0 %v4525
    %4738 = vmatpush.bf16.msra.mxu0 %v4522
    %4739 = vmatpush.bf16.msra.mxu0 %v4519
    %4740 = vmatpush.bf16.msra.mxu0 %v4516
    %4741 = vmatmul.bf16.gmra.mxu0 %v4118
    %v4742 = vpop.f32.mrf.mxu0
    %v4743 = vadd.f32 %v4729, %v4742
    %v4744 = vpop.f32.mrf.mxu0
    %v4745 = vadd.f32 %v4731, %v4744
    %4746 = vdwg.mxu0
    %4747 = vmatpush.bf16.msra.mxu0 %v4466
    %4748 = vmatpush.bf16.msra.mxu0 %v4463
    %4749 = vmatpush.bf16.msra.mxu0 %v4460
    %4750 = vmatpush.bf16.msra.mxu0 %v4457
    %4751 = vmatpush.bf16.msra.mxu0 %v4454
    %4752 = vmatpush.bf16.msra.mxu0 %v4451
    %4753 = vmatpush.bf16.msra.mxu0 %v4448
    %4754 = vmatpush.bf16.msra.mxu0 %v4445
    %4755 = vmatmul.bf16.gmra.mxu0 %v4115
    %v4756 = vpop.f32.mrf.mxu0
    %v4757 = vadd.f32 0.0, %v4756
    %v4758 = vpop.f32.mrf.mxu0
    %v4759 = vadd.f32 0.0, %v4758
    %4760 = vdwg.mxu0
    %4761 = vmatpush.bf16.msra.mxu0 %v4490
    %4762 = vmatpush.bf16.msra.mxu0 %v4487
    %4763 = vmatpush.bf16.msra.mxu0 %v4484
    %4764 = vmatpush.bf16.msra.mxu0 %v4481
    %4765 = vmatpush.bf16.msra.mxu0 %v4478
    %4766 = vmatpush.bf16.msra.mxu0 %v4475
    %4767 = vmatpush.bf16.msra.mxu0 %v4472
    %4768 = vmatpush.bf16.msra.mxu0 %v4469
    %4769 = vmatmul.bf16.gmra.mxu0 %v4116
    %v4770 = vpop.f32.mrf.mxu0
    %v4771 = vadd.f32 %v4757, %v4770
    %v4772 = vpop.f32.mrf.mxu0
    %v4773 = vadd.f32 %v4759, %v4772
    %4774 = vdwg.mxu0
    %4775 = vmatpush.bf16.msra.mxu0 %v4514
    %4776 = vmatpush.bf16.msra.mxu0 %v4511
    %4777 = vmatpush.bf16.msra.mxu0 %v4508
    %4778 = vmatpush.bf16.msra.mxu0 %v4505
    %4779 = vmatpush.bf16.msra.mxu0 %v4502
    %4780 = vmatpush.bf16.msra.mxu0 %v4499
    %4781 = vmatpush.bf16.msra.mxu0 %v4496
    %4782 = vmatpush.bf16.msra.mxu0 %v4493
    %4783 = vmatmul.bf16.gmra.mxu0 %v4117
    %v4784 = vpop.f32.mrf.mxu0
    %v4785 = vadd.f32 %v4771, %v4784
    %v4786 = vpop.f32.mrf.mxu0
    %v4787 = vadd.f32 %v4773, %v4786
    %4788 = vdwg.mxu0
    %4789 = vmatpush.bf16.msra.mxu0 %v4538
    %4790 = vmatpush.bf16.msra.mxu0 %v4535
    %4791 = vmatpush.bf16.msra.mxu0 %v4532
    %4792 = vmatpush.bf16.msra.mxu0 %v4529
    %4793 = vmatpush.bf16.msra.mxu0 %v4526
    %4794 = vmatpush.bf16.msra.mxu0 %v4523
    %4795 = vmatpush.bf16.msra.mxu0 %v4520
    %4796 = vmatpush.bf16.msra.mxu0 %v4517
    %4797 = vmatmul.bf16.gmra.mxu0 %v4118
    %v4798 = vpop.f32.mrf.mxu0
    %v4799 = vadd.f32 %v4785, %v4798
    %v4800 = vpop.f32.mrf.mxu0
    %v4801 = vadd.f32 %v4787, %v4800
    %4802 = vdwg.mxu0
    %v4803 = vadd.f32 %v3961, %v4687
    %v4804 = vadd.f32 %v3962, %v4743
    %v4805 = vadd.f32 %v3963, %v4799
    %v4806 = vadd.f32 %v3964, %v4689
    %v4807 = vadd.f32 %v3965, %v4745
    %v4808 = vadd.f32 %v3966, %v4801
    %v4809 = vld [vmem:[#allocation11] sm:$0x7]
    %v4811 = vperm.slane %v4809, 0
    %v4812 = vperm.slane %v4809, 1
    %v4813 = vperm.slane %v4809, 2
    %v4817 = vadd.f32 %v4803, %v4811
    %v4818 = vadd.f32 %v4804, %v4812
    %v4819 = vadd.f32 %v4805, %v4813
    %v4820 = vadd.f32 %v4806, %v4811
    %v4821 = vadd.f32 %v4807, %v4812
    %v4822 = vadd.f32 %v4808, %v4813
    %v4823 = vpack.c.bf16 %v4818, %v4817
    %v4824 = vpack.c.bf16 %v4819, %v4819
    %v4825 = vpack.c.bf16 %v4821, %v4820
    %v4826 = vpack.c.bf16 %v4822, %v4822
    %4827 = vst [vmem:[#allocation4] sm:$0xff] %v4823
    %4828 = vst [vmem:[#allocation4 + $0x8] sm:$0xf] %v4824
    %4829 = vst [vmem:[#allocation4 + $0xc] sm:$0x33] %v4825
    %4830 = vst [vmem:[#allocation4 + $0x14] sm:$0x3] %v4826
    %v4831 = vld [vmem:[#allocation14] sm:$0x1]
    %v4832 = vld [vmem:[#allocation4] sm:$0x11]
    %v4833 = vld [vmem:[#allocation4 + $0x8] sm:$0x1]
    %v4834 = vld [vmem:[#allocation13] sm:$0xf]
    %v4835 = vld [vmem:[#allocation13 + $0x4] sm:$0xf]
    %v4836 = vld [vmem:[#allocation13 + $0x8] sm:$0xf]
    %v4837 = vld [vmem:[#allocation13 + $0xc] sm:$0xf]
    %v4838 = vld [vmem:[#allocation13 + $0x10] sm:$0xf]
    %v4839 = vld [vmem:[#allocation13 + $0x14] sm:$0xf]
    %v4840 = vld [vmem:[#allocation13 + $0x18] sm:$0xf]
    %v4841 = vld [vmem:[#allocation13 + $0x1c] sm:$0xf]
    %v4842 = vld [vmem:[#allocation13 + $0x20] sm:$0xf]
    %v4843 = vld [vmem:[#allocation13 + $0x24] sm:$0xf]
    %v4844 = vld [vmem:[#allocation13 + $0x28] sm:$0xf]
    %v4845 = vld [vmem:[#allocation13 + $0x2c] sm:$0xf]
    %v4846 = vld [vmem:[#allocation13 + $0x30] sm:$0xf]
    %v4847 = vld [vmem:[#allocation13 + $0x34] sm:$0xf]
    %v4848 = vld [vmem:[#allocation13 + $0x38] sm:$0xf]
    %v4849 = vld [vmem:[#allocation13 + $0x3c] sm:$0xf]
    %v4850 = vld [vmem:[#allocation13 + $0x40] sm:$0xf]
    %v4851 = vld [vmem:[#allocation13 + $0x44] sm:$0xf]
    %v4852 = vld [vmem:[#allocation13 + $0x48] sm:$0xf]
    %v4853 = vld [vmem:[#allocation13 + $0x4c] sm:$0xf]
    %v4854 = vld [vmem:[#allocation13 + $0x50] sm:$0xf]
    %v4855 = vld [vmem:[#allocation13 + $0x54] sm:$0xf]
    %v4856 = vld [vmem:[#allocation13 + $0x58] sm:$0xf]
    %v4857 = vld [vmem:[#allocation13 + $0x5c] sm:$0xf]
    %v4858 = vld [vmem:[#allocation13 + $0x60] sm:$0xf]
    %v4859 = vld [vmem:[#allocation13 + $0x64] sm:$0xf]
    %v4860 = vld [vmem:[#allocation13 + $0x68] sm:$0xf]
    %v4861 = vld [vmem:[#allocation13 + $0x6c] sm:$0xf]
    %v4862 = vld [vmem:[#allocation13 + $0x70] sm:$0xf]
    %v4863 = vld [vmem:[#allocation13 + $0x74] sm:$0xf]
    %v4864 = vld [vmem:[#allocation13 + $0x78] sm:$0xf]
    %v4865 = vld [vmem:[#allocation13 + $0x7c] sm:$0xf]
    %v4866 = vld [vmem:[#allocation13 + $0x80] sm:$0xf]
    %v4867 = vld [vmem:[#allocation13 + $0x84] sm:$0xf]
    %v4868 = vld [vmem:[#allocation13 + $0x88] sm:$0xf]
    %v4869 = vld [vmem:[#allocation13 + $0x8c] sm:$0xf]
    %v4870 = vld [vmem:[#allocation13 + $0x90] sm:$0xf]
    %v4871 = vld [vmem:[#allocation13 + $0x94] sm:$0xf]
    %v4872 = vld [vmem:[#allocation13 + $0x98] sm:$0xf]
    %v4873 = vld [vmem:[#allocation13 + $0x9c] sm:$0xf]
    %v4874 = vld [vmem:[#allocation13 + $0xa0] sm:$0xf]
    %v4875 = vld [vmem:[#allocation13 + $0xa4] sm:$0xf]
    %v4876 = vld [vmem:[#allocation13 + $0xa8] sm:$0xf]
    %v4877 = vld [vmem:[#allocation13 + $0xac] sm:$0xf]
    %v4878 = vld [vmem:[#allocation13 + $0xb0] sm:$0xf]
    %v4879 = vld [vmem:[#allocation13 + $0xb4] sm:$0xf]
    %v4880 = vld [vmem:[#allocation13 + $0xb8] sm:$0xf]
    %v4881 = vld [vmem:[#allocation13 + $0xbc] sm:$0xf]
    %v4884 = vunpack.c.l.b16 %v4832
    %v4885 = vunpack.c.h.b16 %v4832
    %v4886 = vunpack.c.l.b16 %v4833
    %v4887 = vpack.c.b16 %v4884, %v4884
    %v4888 = vpack.c.b16 %v4885, %v4885
    %v4889 = vpack.c.b16 %v4886, %v4886
    %v4941 = vunpack.c.l.b16 %v4834
    %v4942 = vunpack.c.l.b16 %v4835
    %v4943 = vunpack.c.l.b16 %v4836
    %v4944 = vunpack.c.l.b16 %v4837
    %v4945 = vunpack.c.l.b16 %v4838
    %v4946 = vunpack.c.l.b16 %v4839
    %v4947 = vunpack.c.l.b16 %v4840
    %v4948 = vunpack.c.l.b16 %v4841
    %v4949 = vunpack.c.l.b16 %v4842
    %v4950 = vunpack.c.l.b16 %v4843
    %v4951 = vunpack.c.l.b16 %v4844
    %v4952 = vunpack.c.l.b16 %v4845
    %v4953 = vunpack.c.l.b16 %v4846
    %v4954 = vunpack.c.l.b16 %v4847
    %v4955 = vunpack.c.l.b16 %v4848
    %v4956 = vunpack.c.l.b16 %v4849
    %v4957 = vunpack.c.l.b16 %v4850
    %v4958 = vunpack.c.l.b16 %v4851
    %v4959 = vunpack.c.l.b16 %v4852
    %v4960 = vunpack.c.l.b16 %v4853
    %v4961 = vunpack.c.l.b16 %v4854
    %v4962 = vunpack.c.l.b16 %v4855
    %v4963 = vunpack.c.l.b16 %v4856
    %v4964 = vunpack.c.l.b16 %v4857
    %v4965 = vunpack.c.l.b16 %v4858
    %v4966 = vunpack.c.l.b16 %v4859
    %v4967 = vunpack.c.l.b16 %v4860
    %v4968 = vunpack.c.l.b16 %v4861
    %v4969 = vunpack.c.l.b16 %v4862
    %v4970 = vunpack.c.l.b16 %v4863
    %v4971 = vunpack.c.l.b16 %v4864
    %v4972 = vunpack.c.l.b16 %v4865
    %v4973 = vunpack.c.l.b16 %v4866
    %v4974 = vunpack.c.l.b16 %v4867
    %v4975 = vunpack.c.l.b16 %v4868
    %v4976 = vunpack.c.l.b16 %v4869
    %v4977 = vunpack.c.l.b16 %v4870
    %v4978 = vunpack.c.l.b16 %v4871
    %v4979 = vunpack.c.l.b16 %v4872
    %v4980 = vunpack.c.l.b16 %v4873
    %v4981 = vunpack.c.l.b16 %v4874
    %v4982 = vunpack.c.l.b16 %v4875
    %v4983 = vunpack.c.l.b16 %v4876
    %v4984 = vunpack.c.l.b16 %v4877
    %v4985 = vunpack.c.l.b16 %v4878
    %v4986 = vunpack.c.l.b16 %v4879
    %v4987 = vunpack.c.l.b16 %v4880
    %v4988 = vunpack.c.l.b16 %v4881
    %v4989 = vpack.c.b16 %v4942, %v4941
    %v4990 = vpack.c.b16 %v4944, %v4943
    %v4991 = vpack.c.b16 %v4946, %v4945
    %v4992 = vpack.c.b16 %v4948, %v4947
    %v4993 = vpack.c.b16 %v4950, %v4949
    %v4994 = vpack.c.b16 %v4952, %v4951
    %v4995 = vpack.c.b16 %v4954, %v4953
    %v4996 = vpack.c.b16 %v4956, %v4955
    %v4997 = vpack.c.b16 %v4958, %v4957
    %v4998 = vpack.c.b16 %v4960, %v4959
    %v4999 = vpack.c.b16 %v4962, %v4961
    %v5000 = vpack.c.b16 %v4964, %v4963
    %v5001 = vpack.c.b16 %v4966, %v4965
    %v5002 = vpack.c.b16 %v4968, %v4967
    %v5003 = vpack.c.b16 %v4970, %v4969
    %v5004 = vpack.c.b16 %v4972, %v4971
    %v5005 = vpack.c.b16 %v4974, %v4973
    %v5006 = vpack.c.b16 %v4976, %v4975
    %v5007 = vpack.c.b16 %v4978, %v4977
    %v5008 = vpack.c.b16 %v4980, %v4979
    %v5009 = vpack.c.b16 %v4982, %v4981
    %v5010 = vpack.c.b16 %v4984, %v4983
    %v5011 = vpack.c.b16 %v4986, %v4985
    %v5012 = vpack.c.b16 %v4988, %v4987
    %5037 = vmatpush.bf16.msra.mxu0 %v4996
    %5038 = vmatpush.bf16.msra.mxu0 %v4995
    %5039 = vmatpush.bf16.msra.mxu0 %v4994
    %5040 = vmatpush.bf16.msra.mxu0 %v4993
    %5041 = vmatpush.bf16.msra.mxu0 %v4992
    %5042 = vmatpush.bf16.msra.mxu0 %v4991
    %5043 = vmatpush.bf16.msra.mxu0 %v4990
    %5044 = vmatpush.bf16.msra.mxu0 %v4989
    %5045 = vmatmul.bf16.gmra.mxu0 %v4887
    %v5046 = vpop.f32.mrf.mxu0
    %v5047 = vadd.f32 0.0, %v5046
    %v5048 = vpop.f32.mrf.mxu0
    %5049 = vdwg.mxu0
    %5050 = vmatpush.bf16.msra.mxu0 %v5004
    %5051 = vmatpush.bf16.msra.mxu0 %v5003
    %5052 = vmatpush.bf16.msra.mxu0 %v5002
    %5053 = vmatpush.bf16.msra.mxu0 %v5001
    %5054 = vmatpush.bf16.msra.mxu0 %v5000
    %5055 = vmatpush.bf16.msra.mxu0 %v4999
    %5056 = vmatpush.bf16.msra.mxu0 %v4998
    %5057 = vmatpush.bf16.msra.mxu0 %v4997
    %5058 = vmatmul.bf16.gmra.mxu0 %v4888
    %v5059 = vpop.f32.mrf.mxu0
    %v5060 = vadd.f32 %v5047, %v5059
    %v5061 = vpop.f32.mrf.mxu0
    %5062 = vdwg.mxu0
    %5063 = vmatpush.bf16.msra.mxu0 %v5012
    %5064 = vmatpush.bf16.msra.mxu0 %v5011
    %5065 = vmatpush.bf16.msra.mxu0 %v5010
    %5066 = vmatpush.bf16.msra.mxu0 %v5009
    %5067 = vmatpush.bf16.msra.mxu0 %v5008
    %5068 = vmatpush.bf16.msra.mxu0 %v5007
    %5069 = vmatpush.bf16.msra.mxu0 %v5006
    %5070 = vmatpush.bf16.msra.mxu0 %v5005
    %5071 = vmatmul.bf16.gmra.mxu0 %v4889
    %v5072 = vpop.f32.mrf.mxu0
    %v5073 = vadd.f32 %v5060, %v5072
    %v5074 = vpop.f32.mrf.mxu0
    %5075 = vdwg.mxu0
    %v5077 = vperm.slane %v4831, 0
    %v5079 = vadd.f32 %v5077, %v5073
    %v5080 = vld [vmem:[#allocation4] sm:$0x22]
    %v5081 = vld [vmem:[#allocation4 + $0x8] sm:$0x2]
    %v5082 = vld [vmem:[#allocation13 + $0xc0] sm:$0xf]
    %v5083 = vld [vmem:[#allocation13 + $0xc4] sm:$0xf]
    %v5084 = vld [vmem:[#allocation13 + $0xc8] sm:$0xf]
    %v5085 = vld [vmem:[#allocation13 + $0xcc] sm:$0xf]
    %v5086 = vld [vmem:[#allocation13 + $0xd0] sm:$0xf]
    %v5087 = vld [vmem:[#allocation13 + $0xd4] sm:$0xf]
    %v5088 = vld [vmem:[#allocation13 + $0xd8] sm:$0xf]
    %v5089 = vld [vmem:[#allocation13 + $0xdc] sm:$0xf]
    %v5090 = vld [vmem:[#allocation13 + $0xe0] sm:$0xf]
    %v5091 = vld [vmem:[#allocation13 + $0xe4] sm:$0xf]
    %v5092 = vld [vmem:[#allocation13 + $0xe8] sm:$0xf]
    %v5093 = vld [vmem:[#allocation13 + $0xec] sm:$0xf]
    %v5094 = vld [vmem:[#allocation13 + $0xf0] sm:$0xf]
    %v5095 = vld [vmem:[#allocation13 + $0xf4] sm:$0xf]
    %v5096 = vld [vmem:[#allocation13 + $0xf8] sm:$0xf]
    %v5097 = vld [vmem:[#allocation13 + $0xfc] sm:$0xf]
    %v5098 = vld [vmem:[#allocation13 + $0x100] sm:$0xf]
    %v5099 = vld [vmem:[#allocation13 + $0x104] sm:$0xf]
    %v5100 = vld [vmem:[#allocation13 + $0x108] sm:$0xf]
    %v5101 = vld [vmem:[#allocation13 + $0x10c] sm:$0xf]
    %v5102 = vld [vmem:[#allocation13 + $0x110] sm:$0xf]
    %v5103 = vld [vmem:[#allocation13 + $0x114] sm:$0xf]
    %v5104 = vld [vmem:[#allocation13 + $0x118] sm:$0xf]
    %v5105 = vld [vmem:[#allocation13 + $0x11c] sm:$0xf]
    %v5106 = vld [vmem:[#allocation13 + $0x120] sm:$0xf]
    %v5107 = vld [vmem:[#allocation13 + $0x124] sm:$0xf]
    %v5108 = vld [vmem:[#allocation13 + $0x128] sm:$0xf]
    %v5109 = vld [vmem:[#allocation13 + $0x12c] sm:$0xf]
    %v5110 = vld [vmem:[#allocation13 + $0x130] sm:$0xf]
    %v5111 = vld [vmem:[#allocation13 + $0x134] sm:$0xf]
    %v5112 = vld [vmem:[#allocation13 + $0x138] sm:$0xf]
    %v5113 = vld [vmem:[#allocation13 + $0x13c] sm:$0xf]
    %v5114 = vld [vmem:[#allocation13 + $0x140] sm:$0xf]
    %v5115 = vld [vmem:[#allocation13 + $0x144] sm:$0xf]
    %v5116 = vld [vmem:[#allocation13 + $0x148] sm:$0xf]
    %v5117 = vld [vmem:[#allocation13 + $0x14c] sm:$0xf]
    %v5118 = vld [vmem:[#allocation13 + $0x150] sm:$0xf]
    %v5119 = vld [vmem:[#allocation13 + $0x154] sm:$0xf]
    %v5120 = vld [vmem:[#allocation13 + $0x158] sm:$0xf]
    %v5121 = vld [vmem:[#allocation13 + $0x15c] sm:$0xf]
    %v5122 = vld [vmem:[#allocation13 + $0x160] sm:$0xf]
    %v5123 = vld [vmem:[#allocation13 + $0x164] sm:$0xf]
    %v5124 = vld [vmem:[#allocation13 + $0x168] sm:$0xf]
    %v5125 = vld [vmem:[#allocation13 + $0x16c] sm:$0xf]
    %v5126 = vld [vmem:[#allocation13 + $0x170] sm:$0xf]
    %v5127 = vld [vmem:[#allocation13 + $0x174] sm:$0xf]
    %v5128 = vld [vmem:[#allocation13 + $0x178] sm:$0xf]
    %v5129 = vld [vmem:[#allocation13 + $0x17c] sm:$0xf]
    %v5132 = vunpack.c.l.b16 %v5080
    %v5133 = vunpack.c.h.b16 %v5080
    %v5134 = vunpack.c.l.b16 %v5081
    %v5135 = vpack.c.b16 %v5132, %v5132
    %v5136 = vpack.c.b16 %v5133, %v5133
    %v5137 = vpack.c.b16 %v5134, %v5134
    %v5138 = vrot.slane %v5135, 1
    %v5139 = vrot.slane %v5136, 1
    %v5140 = vrot.slane %v5137, 1
    %v5192 = vunpack.c.l.b16 %v5082
    %v5193 = vunpack.c.l.b16 %v5083
    %v5194 = vunpack.c.l.b16 %v5084
    %v5195 = vunpack.c.l.b16 %v5085
    %v5196 = vunpack.c.l.b16 %v5086
    %v5197 = vunpack.c.l.b16 %v5087
    %v5198 = vunpack.c.l.b16 %v5088
    %v5199 = vunpack.c.l.b16 %v5089
    %v5200 = vunpack.c.l.b16 %v5090
    %v5201 = vunpack.c.l.b16 %v5091
    %v5202 = vunpack.c.l.b16 %v5092
    %v5203 = vunpack.c.l.b16 %v5093
    %v5204 = vunpack.c.l.b16 %v5094
    %v5205 = vunpack.c.l.b16 %v5095
    %v5206 = vunpack.c.l.b16 %v5096
    %v5207 = vunpack.c.l.b16 %v5097
    %v5208 = vunpack.c.l.b16 %v5098
    %v5209 = vunpack.c.l.b16 %v5099
    %v5210 = vunpack.c.l.b16 %v5100
    %v5211 = vunpack.c.l.b16 %v5101
    %v5212 = vunpack.c.l.b16 %v5102
    %v5213 = vunpack.c.l.b16 %v5103
    %v5214 = vunpack.c.l.b16 %v5104
    %v5215 = vunpack.c.l.b16 %v5105
    %v5216 = vunpack.c.l.b16 %v5106
    %v5217 = vunpack.c.l.b16 %v5107
    %v5218 = vunpack.c.l.b16 %v5108
    %v5219 = vunpack.c.l.b16 %v5109
    %v5220 = vunpack.c.l.b16 %v5110
    %v5221 = vunpack.c.l.b16 %v5111
    %v5222 = vunpack.c.l.b16 %v5112
    %v5223 = vunpack.c.l.b16 %v5113
    %v5224 = vunpack.c.l.b16 %v5114
    %v5225 = vunpack.c.l.b16 %v5115
    %v5226 = vunpack.c.l.b16 %v5116
    %v5227 = vunpack.c.l.b16 %v5117
    %v5228 = vunpack.c.l.b16 %v5118
    %v5229 = vunpack.c.l.b16 %v5119
    %v5230 = vunpack.c.l.b16 %v5120
    %v5231 = vunpack.c.l.b16 %v5121
    %v5232 = vunpack.c.l.b16 %v5122
    %v5233 = vunpack.c.l.b16 %v5123
    %v5234 = vunpack.c.l.b16 %v5124
    %v5235 = vunpack.c.l.b16 %v5125
    %v5236 = vunpack.c.l.b16 %v5126
    %v5237 = vunpack.c.l.b16 %v5127
    %v5238 = vunpack.c.l.b16 %v5128
    %v5239 = vunpack.c.l.b16 %v5129
    %v5240 = vpack.c.b16 %v5193, %v5192
    %v5241 = vpack.c.b16 %v5195, %v5194
    %v5242 = vpack.c.b16 %v5197, %v5196
    %v5243 = vpack.c.b16 %v5199, %v5198
    %v5244 = vpack.c.b16 %v5201, %v5200
    %v5245 = vpack.c.b16 %v5203, %v5202
    %v5246 = vpack.c.b16 %v5205, %v5204
    %v5247 = vpack.c.b16 %v5207, %v5206
    %v5248 = vpack.c.b16 %v5209, %v5208
    %v5249 = vpack.c.b16 %v5211, %v5210
    %v5250 = vpack.c.b16 %v5213, %v5212
    %v5251 = vpack.c.b16 %v5215, %v5214
    %v5252 = vpack.c.b16 %v5217, %v5216
    %v5253 = vpack.c.b16 %v5219, %v5218
    %v5254 = vpack.c.b16 %v5221, %v5220
    %v5255 = vpack.c.b16 %v5223, %v5222
    %v5256 = vpack.c.b16 %v5225, %v5224
    %v5257 = vpack.c.b16 %v5227, %v5226
    %v5258 = vpack.c.b16 %v5229, %v5228
    %v5259 = vpack.c.b16 %v5231, %v5230
    %v5260 = vpack.c.b16 %v5233, %v5232
    %v5261 = vpack.c.b16 %v5235, %v5234
    %v5262 = vpack.c.b16 %v5237, %v5236
    %v5263 = vpack.c.b16 %v5239, %v5238
    %5288 = vmatpush.bf16.msra.mxu0 %v5247
    %5289 = vmatpush.bf16.msra.mxu0 %v5246
    %5290 = vmatpush.bf16.msra.mxu0 %v5245
    %5291 = vmatpush.bf16.msra.mxu0 %v5244
    %5292 = vmatpush.bf16.msra.mxu0 %v5243
    %5293 = vmatpush.bf16.msra.mxu0 %v5242
    %5294 = vmatpush.bf16.msra.mxu0 %v5241
    %5295 = vmatpush.bf16.msra.mxu0 %v5240
    %5296 = vmatmul.bf16.gmra.mxu0 %v5138
    %v5297 = vpop.f32.mrf.mxu0
    %v5298 = vadd.f32 0.0, %v5297
    %v5299 = vpop.f32.mrf.mxu0
    %5300 = vdwg.mxu0
    %5301 = vmatpush.bf16.msra.mxu0 %v5255
    %5302 = vmatpush.bf16.msra.mxu0 %v5254
    %5303 = vmatpush.bf16.msra.mxu0 %v5253
    %5304 = vmatpush.bf16.msra.mxu0 %v5252
    %5305 = vmatpush.bf16.msra.mxu0 %v5251
    %5306 = vmatpush.bf16.msra.mxu0 %v5250
    %5307 = vmatpush.bf16.msra.mxu0 %v5249
    %5308 = vmatpush.bf16.msra.mxu0 %v5248
    %5309 = vmatmul.bf16.gmra.mxu0 %v5139
    %v5310 = vpop.f32.mrf.mxu0
    %v5311 = vadd.f32 %v5298, %v5310
    %v5312 = vpop.f32.mrf.mxu0
    %5313 = vdwg.mxu0
    %5314 = vmatpush.bf16.msra.mxu0 %v5263
    %5315 = vmatpush.bf16.msra.mxu0 %v5262
    %5316 = vmatpush.bf16.msra.mxu0 %v5261
    %5317 = vmatpush.bf16.msra.mxu0 %v5260
    %5318 = vmatpush.bf16.msra.mxu0 %v5259
    %5319 = vmatpush.bf16.msra.mxu0 %v5258
    %5320 = vmatpush.bf16.msra.mxu0 %v5257
    %5321 = vmatpush.bf16.msra.mxu0 %v5256
    %5322 = vmatmul.bf16.gmra.mxu0 %v5140
    %v5323 = vpop.f32.mrf.mxu0
    %v5324 = vadd.f32 %v5311, %v5323
    %v5325 = vpop.f32.mrf.mxu0
    %5326 = vdwg.mxu0
    %v5327 = vadd.f32 %v5079, %v5324
    %v5328 = vld [vmem:[#allocation4] sm:$0x44]
    %v5329 = vld [vmem:[#allocation4 + $0x8] sm:$0x4]
    %v5330 = vld [vmem:[#allocation13 + $0x180] sm:$0xf]
    %v5331 = vld [vmem:[#allocation13 + $0x184] sm:$0xf]
    %v5332 = vld [vmem:[#allocation13 + $0x188] sm:$0xf]
    %v5333 = vld [vmem:[#allocation13 + $0x18c] sm:$0xf]
    %v5334 = vld [vmem:[#allocation13 + $0x190] sm:$0xf]
    %v5335 = vld [vmem:[#allocation13 + $0x194] sm:$0xf]
    %v5336 = vld [vmem:[#allocation13 + $0x198] sm:$0xf]
    %v5337 = vld [vmem:[#allocation13 + $0x19c] sm:$0xf]
    %v5338 = vld [vmem:[#allocation13 + $0x1a0] sm:$0xf]
    %v5339 = vld [vmem:[#allocation13 + $0x1a4] sm:$0xf]
    %v5340 = vld [vmem:[#allocation13 + $0x1a8] sm:$0xf]
    %v5341 = vld [vmem:[#allocation13 + $0x1ac] sm:$0xf]
    %v5342 = vld [vmem:[#allocation13 + $0x1b0] sm:$0xf]
    %v5343 = vld [vmem:[#allocation13 + $0x1b4] sm:$0xf]
    %v5344 = vld [vmem:[#allocation13 + $0x1b8] sm:$0xf]
    %v5345 = vld [vmem:[#allocation13 + $0x1bc] sm:$0xf]
    %v5346 = vld [vmem:[#allocation13 + $0x1c0] sm:$0xf]
    %v5347 = vld [vmem:[#allocation13 + $0x1c4] sm:$0xf]
    %v5348 = vld [vmem:[#allocation13 + $0x1c8] sm:$0xf]
    %v5349 = vld [vmem:[#allocation13 + $0x1cc] sm:$0xf]
    %v5350 = vld [vmem:[#allocation13 + $0x1d0] sm:$0xf]
    %v5351 = vld [vmem:[#allocation13 + $0x1d4] sm:$0xf]
    %v5352 = vld [vmem:[#allocation13 + $0x1d8] sm:$0xf]
    %v5353 = vld [vmem:[#allocation13 + $0x1dc] sm:$0xf]
    %v5354 = vld [vmem:[#allocation13 + $0x1e0] sm:$0xf]
    %v5355 = vld [vmem:[#allocation13 + $0x1e4] sm:$0xf]
    %v5356 = vld [vmem:[#allocation13 + $0x1e8] sm:$0xf]
    %v5357 = vld [vmem:[#allocation13 + $0x1ec] sm:$0xf]
    %v5358 = vld [vmem:[#allocation13 + $0x1f0] sm:$0xf]
    %v5359 = vld [vmem:[#allocation13 + $0x1f4] sm:$0xf]
    %v5360 = vld [vmem:[#allocation13 + $0x1f8] sm:$0xf]
    %v5361 = vld [vmem:[#allocation13 + $0x1fc] sm:$0xf]
    %v5362 = vld [vmem:[#allocation13 + $0x200] sm:$0xf]
    %v5363 = vld [vmem:[#allocation13 + $0x204] sm:$0xf]
    %v5364 = vld [vmem:[#allocation13 + $0x208] sm:$0xf]
    %v5365 = vld [vmem:[#allocation13 + $0x20c] sm:$0xf]
    %v5366 = vld [vmem:[#allocation13 + $0x210] sm:$0xf]
    %v5367 = vld [vmem:[#allocation13 + $0x214] sm:$0xf]
    %v5368 = vld [vmem:[#allocation13 + $0x218] sm:$0xf]
    %v5369 = vld [vmem:[#allocation13 + $0x21c] sm:$0xf]
    %v5370 = vld [vmem:[#allocation13 + $0x220] sm:$0xf]
    %v5371 = vld [vmem:[#allocation13 + $0x224] sm:$0xf]
    %v5372 = vld [vmem:[#allocation13 + $0x228] sm:$0xf]
    %v5373 = vld [vmem:[#allocation13 + $0x22c] sm:$0xf]
    %v5374 = vld [vmem:[#allocation13 + $0x230] sm:$0xf]
    %v5375 = vld [vmem:[#allocation13 + $0x234] sm:$0xf]
    %v5376 = vld [vmem:[#allocation13 + $0x238] sm:$0xf]
    %v5377 = vld [vmem:[#allocation13 + $0x23c] sm:$0xf]
    %v5380 = vunpack.c.l.b16 %v5328
    %v5381 = vunpack.c.h.b16 %v5328
    %v5382 = vunpack.c.l.b16 %v5329
    %v5383 = vpack.c.b16 %v5380, %v5380
    %v5384 = vpack.c.b16 %v5381, %v5381
    %v5385 = vpack.c.b16 %v5382, %v5382
    %v5386 = vrot.slane %v5383, 2
    %v5387 = vrot.slane %v5384, 2
    %v5388 = vrot.slane %v5385, 2
    %v5440 = vunpack.c.l.b16 %v5330
    %v5441 = vunpack.c.l.b16 %v5331
    %v5442 = vunpack.c.l.b16 %v5332
    %v5443 = vunpack.c.l.b16 %v5333
    %v5444 = vunpack.c.l.b16 %v5334
    %v5445 = vunpack.c.l.b16 %v5335
    %v5446 = vunpack.c.l.b16 %v5336
    %v5447 = vunpack.c.l.b16 %v5337
    %v5448 = vunpack.c.l.b16 %v5338
    %v5449 = vunpack.c.l.b16 %v5339
    %v5450 = vunpack.c.l.b16 %v5340
    %v5451 = vunpack.c.l.b16 %v5341
    %v5452 = vunpack.c.l.b16 %v5342
    %v5453 = vunpack.c.l.b16 %v5343
    %v5454 = vunpack.c.l.b16 %v5344
    %v5455 = vunpack.c.l.b16 %v5345
    %v5456 = vunpack.c.l.b16 %v5346
    %v5457 = vunpack.c.l.b16 %v5347
    %v5458 = vunpack.c.l.b16 %v5348
    %v5459 = vunpack.c.l.b16 %v5349
    %v5460 = vunpack.c.l.b16 %v5350
    %v5461 = vunpack.c.l.b16 %v5351
    %v5462 = vunpack.c.l.b16 %v5352
    %v5463 = vunpack.c.l.b16 %v5353
    %v5464 = vunpack.c.l.b16 %v5354
    %v5465 = vunpack.c.l.b16 %v5355
    %v5466 = vunpack.c.l.b16 %v5356
    %v5467 = vunpack.c.l.b16 %v5357
    %v5468 = vunpack.c.l.b16 %v5358
    %v5469 = vunpack.c.l.b16 %v5359
    %v5470 = vunpack.c.l.b16 %v5360
    %v5471 = vunpack.c.l.b16 %v5361
    %v5472 = vunpack.c.l.b16 %v5362
    %v5473 = vunpack.c.l.b16 %v5363
    %v5474 = vunpack.c.l.b16 %v5364
    %v5475 = vunpack.c.l.b16 %v5365
    %v5476 = vunpack.c.l.b16 %v5366
    %v5477 = vunpack.c.l.b16 %v5367
    %v5478 = vunpack.c.l.b16 %v5368
    %v5479 = vunpack.c.l.b16 %v5369
    %v5480 = vunpack.c.l.b16 %v5370
    %v5481 = vunpack.c.l.b16 %v5371
    %v5482 = vunpack.c.l.b16 %v5372
    %v5483 = vunpack.c.l.b16 %v5373
    %v5484 = vunpack.c.l.b16 %v5374
    %v5485 = vunpack.c.l.b16 %v5375
    %v5486 = vunpack.c.l.b16 %v5376
    %v5487 = vunpack.c.l.b16 %v5377
    %v5488 = vpack.c.b16 %v5441, %v5440
    %v5489 = vpack.c.b16 %v5443, %v5442
    %v5490 = vpack.c.b16 %v5445, %v5444
    %v5491 = vpack.c.b16 %v5447, %v5446
    %v5492 = vpack.c.b16 %v5449, %v5448
    %v5493 = vpack.c.b16 %v5451, %v5450
    %v5494 = vpack.c.b16 %v5453, %v5452
    %v5495 = vpack.c.b16 %v5455, %v5454
    %v5496 = vpack.c.b16 %v5457, %v5456
    %v5497 = vpack.c.b16 %v5459, %v5458
    %v5498 = vpack.c.b16 %v5461, %v5460
    %v5499 = vpack.c.b16 %v5463, %v5462
    %v5500 = vpack.c.b16 %v5465, %v5464
    %v5501 = vpack.c.b16 %v5467, %v5466
    %v5502 = vpack.c.b16 %v5469, %v5468
    %v5503 = vpack.c.b16 %v5471, %v5470
    %v5504 = vpack.c.b16 %v5473, %v5472
    %v5505 = vpack.c.b16 %v5475, %v5474
    %v5506 = vpack.c.b16 %v5477, %v5476
    %v5507 = vpack.c.b16 %v5479, %v5478
    %v5508 = vpack.c.b16 %v5481, %v5480
    %v5509 = vpack.c.b16 %v5483, %v5482
    %v5510 = vpack.c.b16 %v5485, %v5484
    %v5511 = vpack.c.b16 %v5487, %v5486
    %5536 = vmatpush.bf16.msra.mxu0 %v5495
    %5537 = vmatpush.bf16.msra.mxu0 %v5494
    %5538 = vmatpush.bf16.msra.mxu0 %v5493
    %5539 = vmatpush.bf16.msra.mxu0 %v5492
    %5540 = vmatpush.bf16.msra.mxu0 %v5491
    %5541 = vmatpush.bf16.msra.mxu0 %v5490
    %5542 = vmatpush.bf16.msra.mxu0 %v5489
    %5543 = vmatpush.bf16.msra.mxu0 %v5488
    %5544 = vmatmul.bf16.gmra.mxu0 %v5386
    %v5545 = vpop.f32.mrf.mxu0
    %v5546 = vadd.f32 0.0, %v5545
    %v5547 = vpop.f32.mrf.mxu0
    %5548 = vdwg.mxu0
    %5549 = vmatpush.bf16.msra.mxu0 %v5503
    %5550 = vmatpush.bf16.msra.mxu0 %v5502
    %5551 = vmatpush.bf16.msra.mxu0 %v5501
    %5552 = vmatpush.bf16.msra.mxu0 %v5500
    %5553 = vmatpush.bf16.msra.mxu0 %v5499
    %5554 = vmatpush.bf16.msra.mxu0 %v5498
    %5555 = vmatpush.bf16.msra.mxu0 %v5497
    %5556 = vmatpush.bf16.msra.mxu0 %v5496
    %5557 = vmatmul.bf16.gmra.mxu0 %v5387
    %v5558 = vpop.f32.mrf.mxu0
    %v5559 = vadd.f32 %v5546, %v5558
    %v5560 = vpop.f32.mrf.mxu0
    %5561 = vdwg.mxu0
    %5562 = vmatpush.bf16.msra.mxu0 %v5511
    %5563 = vmatpush.bf16.msra.mxu0 %v5510
    %5564 = vmatpush.bf16.msra.mxu0 %v5509
    %5565 = vmatpush.bf16.msra.mxu0 %v5508
    %5566 = vmatpush.bf16.msra.mxu0 %v5507
    %5567 = vmatpush.bf16.msra.mxu0 %v5506
    %5568 = vmatpush.bf16.msra.mxu0 %v5505
    %5569 = vmatpush.bf16.msra.mxu0 %v5504
    %5570 = vmatmul.bf16.gmra.mxu0 %v5388
    %v5571 = vpop.f32.mrf.mxu0
    %v5572 = vadd.f32 %v5559, %v5571
    %v5573 = vpop.f32.mrf.mxu0
    %5574 = vdwg.mxu0
    %v5575 = vadd.f32 %v5327, %v5572
    %v5576 = vld [vmem:[#allocation4] sm:$0x88]
    %v5577 = vld [vmem:[#allocation4 + $0x8] sm:$0x8]
    %v5578 = vld [vmem:[#allocation13 + $0x240] sm:$0xf]
    %v5579 = vld [vmem:[#allocation13 + $0x244] sm:$0xf]
    %v5580 = vld [vmem:[#allocation13 + $0x248] sm:$0xf]
    %v5581 = vld [vmem:[#allocation13 + $0x24c] sm:$0xf]
    %v5582 = vld [vmem:[#allocation13 + $0x250] sm:$0xf]
    %v5583 = vld [vmem:[#allocation13 + $0x254] sm:$0xf]
    %v5584 = vld [vmem:[#allocation13 + $0x258] sm:$0xf]
    %v5585 = vld [vmem:[#allocation13 + $0x25c] sm:$0xf]
    %v5586 = vld [vmem:[#allocation13 + $0x260] sm:$0xf]
    %v5587 = vld [vmem:[#allocation13 + $0x264] sm:$0xf]
    %v5588 = vld [vmem:[#allocation13 + $0x268] sm:$0xf]
    %v5589 = vld [vmem:[#allocation13 + $0x26c] sm:$0xf]
    %v5590 = vld [vmem:[#allocation13 + $0x270] sm:$0xf]
    %v5591 = vld [vmem:[#allocation13 + $0x274] sm:$0xf]
    %v5592 = vld [vmem:[#allocation13 + $0x278] sm:$0xf]
    %v5593 = vld [vmem:[#allocation13 + $0x27c] sm:$0xf]
    %v5594 = vld [vmem:[#allocation13 + $0x280] sm:$0xf]
    %v5595 = vld [vmem:[#allocation13 + $0x284] sm:$0xf]
    %v5596 = vld [vmem:[#allocation13 + $0x288] sm:$0xf]
    %v5597 = vld [vmem:[#allocation13 + $0x28c] sm:$0xf]
    %v5598 = vld [vmem:[#allocation13 + $0x290] sm:$0xf]
    %v5599 = vld [vmem:[#allocation13 + $0x294] sm:$0xf]
    %v5600 = vld [vmem:[#allocation13 + $0x298] sm:$0xf]
    %v5601 = vld [vmem:[#allocation13 + $0x29c] sm:$0xf]
    %v5602 = vld [vmem:[#allocation13 + $0x2a0] sm:$0xf]
    %v5603 = vld [vmem:[#allocation13 + $0x2a4] sm:$0xf]
    %v5604 = vld [vmem:[#allocation13 + $0x2a8] sm:$0xf]
    %v5605 = vld [vmem:[#allocation13 + $0x2ac] sm:$0xf]
    %v5606 = vld [vmem:[#allocation13 + $0x2b0] sm:$0xf]
    %v5607 = vld [vmem:[#allocation13 + $0x2b4] sm:$0xf]
    %v5608 = vld [vmem:[#allocation13 + $0x2b8] sm:$0xf]
    %v5609 = vld [vmem:[#allocation13 + $0x2bc] sm:$0xf]
    %v5610 = vld [vmem:[#allocation13 + $0x2c0] sm:$0xf]
    %v5611 = vld [vmem:[#allocation13 + $0x2c4] sm:$0xf]
    %v5612 = vld [vmem:[#allocation13 + $0x2c8] sm:$0xf]
    %v5613 = vld [vmem:[#allocation13 + $0x2cc] sm:$0xf]
    %v5614 = vld [vmem:[#allocation13 + $0x2d0] sm:$0xf]
    %v5615 = vld [vmem:[#allocation13 + $0x2d4] sm:$0xf]
    %v5616 = vld [vmem:[#allocation13 + $0x2d8] sm:$0xf]
    %v5617 = vld [vmem:[#allocation13 + $0x2dc] sm:$0xf]
    %v5618 = vld [vmem:[#allocation13 + $0x2e0] sm:$0xf]
    %v5619 = vld [vmem:[#allocation13 + $0x2e4] sm:$0xf]
    %v5620 = vld [vmem:[#allocation13 + $0x2e8] sm:$0xf]
    %v5621 = vld [vmem:[#allocation13 + $0x2ec] sm:$0xf]
    %v5622 = vld [vmem:[#allocation13 + $0x2f0] sm:$0xf]
    %v5623 = vld [vmem:[#allocation13 + $0x2f4] sm:$0xf]
    %v5624 = vld [vmem:[#allocation13 + $0x2f8] sm:$0xf]
    %v5625 = vld [vmem:[#allocation13 + $0x2fc] sm:$0xf]
    %v5628 = vunpack.c.l.b16 %v5576
    %v5629 = vunpack.c.h.b16 %v5576
    %v5630 = vunpack.c.l.b16 %v5577
    %v5631 = vpack.c.b16 %v5628, %v5628
    %v5632 = vpack.c.b16 %v5629, %v5629
    %v5633 = vpack.c.b16 %v5630, %v5630
    %v5634 = vrot.slane %v5631, 3
    %v5635 = vrot.slane %v5632, 3
    %v5636 = vrot.slane %v5633, 3
    %v5688 = vunpack.c.l.b16 %v5578
    %v5689 = vunpack.c.l.b16 %v5579
    %v5690 = vunpack.c.l.b16 %v5580
    %v5691 = vunpack.c.l.b16 %v5581
    %v5692 = vunpack.c.l.b16 %v5582
    %v5693 = vunpack.c.l.b16 %v5583
    %v5694 = vunpack.c.l.b16 %v5584
    %v5695 = vunpack.c.l.b16 %v5585
    %v5696 = vunpack.c.l.b16 %v5586
    %v5697 = vunpack.c.l.b16 %v5587
    %v5698 = vunpack.c.l.b16 %v5588
    %v5699 = vunpack.c.l.b16 %v5589
    %v5700 = vunpack.c.l.b16 %v5590
    %v5701 = vunpack.c.l.b16 %v5591
    %v5702 = vunpack.c.l.b16 %v5592
    %v5703 = vunpack.c.l.b16 %v5593
    %v5704 = vunpack.c.l.b16 %v5594
    %v5705 = vunpack.c.l.b16 %v5595
    %v5706 = vunpack.c.l.b16 %v5596
    %v5707 = vunpack.c.l.b16 %v5597
    %v5708 = vunpack.c.l.b16 %v5598
    %v5709 = vunpack.c.l.b16 %v5599
    %v5710 = vunpack.c.l.b16 %v5600
    %v5711 = vunpack.c.l.b16 %v5601
    %v5712 = vunpack.c.l.b16 %v5602
    %v5713 = vunpack.c.l.b16 %v5603
    %v5714 = vunpack.c.l.b16 %v5604
    %v5715 = vunpack.c.l.b16 %v5605
    %v5716 = vunpack.c.l.b16 %v5606
    %v5717 = vunpack.c.l.b16 %v5607
    %v5718 = vunpack.c.l.b16 %v5608
    %v5719 = vunpack.c.l.b16 %v5609
    %v5720 = vunpack.c.l.b16 %v5610
    %v5721 = vunpack.c.l.b16 %v5611
    %v5722 = vunpack.c.l.b16 %v5612
    %v5723 = vunpack.c.l.b16 %v5613
    %v5724 = vunpack.c.l.b16 %v5614
    %v5725 = vunpack.c.l.b16 %v5615
    %v5726 = vunpack.c.l.b16 %v5616
    %v5727 = vunpack.c.l.b16 %v5617
    %v5728 = vunpack.c.l.b16 %v5618
    %v5729 = vunpack.c.l.b16 %v5619
    %v5730 = vunpack.c.l.b16 %v5620
    %v5731 = vunpack.c.l.b16 %v5621
    %v5732 = vunpack.c.l.b16 %v5622
    %v5733 = vunpack.c.l.b16 %v5623
    %v5734 = vunpack.c.l.b16 %v5624
    %v5735 = vunpack.c.l.b16 %v5625
    %v5736 = vpack.c.b16 %v5689, %v5688
    %v5737 = vpack.c.b16 %v5691, %v5690
    %v5738 = vpack.c.b16 %v5693, %v5692
    %v5739 = vpack.c.b16 %v5695, %v5694
    %v5740 = vpack.c.b16 %v5697, %v5696
    %v5741 = vpack.c.b16 %v5699, %v5698
    %v5742 = vpack.c.b16 %v5701, %v5700
    %v5743 = vpack.c.b16 %v5703, %v5702
    %v5744 = vpack.c.b16 %v5705, %v5704
    %v5745 = vpack.c.b16 %v5707, %v5706
    %v5746 = vpack.c.b16 %v5709, %v5708
    %v5747 = vpack.c.b16 %v5711, %v5710
    %v5748 = vpack.c.b16 %v5713, %v5712
    %v5749 = vpack.c.b16 %v5715, %v5714
    %v5750 = vpack.c.b16 %v5717, %v5716
    %v5751 = vpack.c.b16 %v5719, %v5718
    %v5752 = vpack.c.b16 %v5721, %v5720
    %v5753 = vpack.c.b16 %v5723, %v5722
    %v5754 = vpack.c.b16 %v5725, %v5724
    %v5755 = vpack.c.b16 %v5727, %v5726
    %v5756 = vpack.c.b16 %v5729, %v5728
    %v5757 = vpack.c.b16 %v5731, %v5730
    %v5758 = vpack.c.b16 %v5733, %v5732
    %v5759 = vpack.c.b16 %v5735, %v5734
    %5784 = vmatpush.bf16.msra.mxu0 %v5743
    %5785 = vmatpush.bf16.msra.mxu0 %v5742
    %5786 = vmatpush.bf16.msra.mxu0 %v5741
    %5787 = vmatpush.bf16.msra.mxu0 %v5740
    %5788 = vmatpush.bf16.msra.mxu0 %v5739
    %5789 = vmatpush.bf16.msra.mxu0 %v5738
    %5790 = vmatpush.bf16.msra.mxu0 %v5737
    %5791 = vmatpush.bf16.msra.mxu0 %v5736
    %5792 = vmatmul.bf16.gmra.mxu0 %v5634
    %v5793 = vpop.f32.mrf.mxu0
    %v5794 = vadd.f32 0.0, %v5793
    %v5795 = vpop.f32.mrf.mxu0
    %5796 = vdwg.mxu0
    %5797 = vmatpush.bf16.msra.mxu0 %v5751
    %5798 = vmatpush.bf16.msra.mxu0 %v5750
    %5799 = vmatpush.bf16.msra.mxu0 %v5749
    %5800 = vmatpush.bf16.msra.mxu0 %v5748
    %5801 = vmatpush.bf16.msra.mxu0 %v5747
    %5802 = vmatpush.bf16.msra.mxu0 %v5746
    %5803 = vmatpush.bf16.msra.mxu0 %v5745
    %5804 = vmatpush.bf16.msra.mxu0 %v5744
    %5805 = vmatmul.bf16.gmra.mxu0 %v5635
    %v5806 = vpop.f32.mrf.mxu0
    %v5807 = vadd.f32 %v5794, %v5806
    %v5808 = vpop.f32.mrf.mxu0
    %5809 = vdwg.mxu0
    %5810 = vmatpush.bf16.msra.mxu0 %v5759
    %5811 = vmatpush.bf16.msra.mxu0 %v5758
    %5812 = vmatpush.bf16.msra.mxu0 %v5757
    %5813 = vmatpush.bf16.msra.mxu0 %v5756
    %5814 = vmatpush.bf16.msra.mxu0 %v5755
    %5815 = vmatpush.bf16.msra.mxu0 %v5754
    %5816 = vmatpush.bf16.msra.mxu0 %v5753
    %5817 = vmatpush.bf16.msra.mxu0 %v5752
    %5818 = vmatmul.bf16.gmra.mxu0 %v5636
    %v5819 = vpop.f32.mrf.mxu0
    %v5820 = vadd.f32 %v5807, %v5819
    %v5821 = vpop.f32.mrf.mxu0
    %5822 = vdwg.mxu0
    %v5823 = vadd.f32 %v5575, %v5820
    %v5824 = vld [vmem:[#allocation4 + $0xc] sm:$0x11]
    %v5825 = vld [vmem:[#allocation4 + $0x14] sm:$0x1]
    %v5826 = vld [vmem:[#allocation13 + $0x300] sm:$0xf]
    %v5827 = vld [vmem:[#allocation13 + $0x304] sm:$0xf]
    %v5828 = vld [vmem:[#allocation13 + $0x308] sm:$0xf]
    %v5829 = vld [vmem:[#allocation13 + $0x30c] sm:$0xf]
    %v5830 = vld [vmem:[#allocation13 + $0x310] sm:$0xf]
    %v5831 = vld [vmem:[#allocation13 + $0x314] sm:$0xf]
    %v5832 = vld [vmem:[#allocation13 + $0x318] sm:$0xf]
    %v5833 = vld [vmem:[#allocation13 + $0x31c] sm:$0xf]
    %v5834 = vld [vmem:[#allocation13 + $0x320] sm:$0xf]
    %v5835 = vld [vmem:[#allocation13 + $0x324] sm:$0xf]
    %v5836 = vld [vmem:[#allocation13 + $0x328] sm:$0xf]
    %v5837 = vld [vmem:[#allocation13 + $0x32c] sm:$0xf]
    %v5838 = vld [vmem:[#allocation13 + $0x330] sm:$0xf]
    %v5839 = vld [vmem:[#allocation13 + $0x334] sm:$0xf]
    %v5840 = vld [vmem:[#allocation13 + $0x338] sm:$0xf]
    %v5841 = vld [vmem:[#allocation13 + $0x33c] sm:$0xf]
    %v5842 = vld [vmem:[#allocation13 + $0x340] sm:$0xf]
    %v5843 = vld [vmem:[#allocation13 + $0x344] sm:$0xf]
    %v5844 = vld [vmem:[#allocation13 + $0x348] sm:$0xf]
    %v5845 = vld [vmem:[#allocation13 + $0x34c] sm:$0xf]
    %v5846 = vld [vmem:[#allocation13 + $0x350] sm:$0xf]
    %v5847 = vld [vmem:[#allocation13 + $0x354] sm:$0xf]
    %v5848 = vld [vmem:[#allocation13 + $0x358] sm:$0xf]
    %v5849 = vld [vmem:[#allocation13 + $0x35c] sm:$0xf]
    %v5850 = vld [vmem:[#allocation13 + $0x360] sm:$0xf]
    %v5851 = vld [vmem:[#allocation13 + $0x364] sm:$0xf]
    %v5852 = vld [vmem:[#allocation13 + $0x368] sm:$0xf]
    %v5853 = vld [vmem:[#allocation13 + $0x36c] sm:$0xf]
    %v5854 = vld [vmem:[#allocation13 + $0x370] sm:$0xf]
    %v5855 = vld [vmem:[#allocation13 + $0x374] sm:$0xf]
    %v5856 = vld [vmem:[#allocation13 + $0x378] sm:$0xf]
    %v5857 = vld [vmem:[#allocation13 + $0x37c] sm:$0xf]
    %v5858 = vld [vmem:[#allocation13 + $0x380] sm:$0xf]
    %v5859 = vld [vmem:[#allocation13 + $0x384] sm:$0xf]
    %v5860 = vld [vmem:[#allocation13 + $0x388] sm:$0xf]
    %v5861 = vld [vmem:[#allocation13 + $0x38c] sm:$0xf]
    %v5862 = vld [vmem:[#allocation13 + $0x390] sm:$0xf]
    %v5863 = vld [vmem:[#allocation13 + $0x394] sm:$0xf]
    %v5864 = vld [vmem:[#allocation13 + $0x398] sm:$0xf]
    %v5865 = vld [vmem:[#allocation13 + $0x39c] sm:$0xf]
    %v5866 = vld [vmem:[#allocation13 + $0x3a0] sm:$0xf]
    %v5867 = vld [vmem:[#allocation13 + $0x3a4] sm:$0xf]
    %v5868 = vld [vmem:[#allocation13 + $0x3a8] sm:$0xf]
    %v5869 = vld [vmem:[#allocation13 + $0x3ac] sm:$0xf]
    %v5870 = vld [vmem:[#allocation13 + $0x3b0] sm:$0xf]
    %v5871 = vld [vmem:[#allocation13 + $0x3b4] sm:$0xf]
    %v5872 = vld [vmem:[#allocation13 + $0x3b8] sm:$0xf]
    %v5873 = vld [vmem:[#allocation13 + $0x3bc] sm:$0xf]
    %v5876 = vunpack.c.l.b16 %v5824
    %v5877 = vunpack.c.h.b16 %v5824
    %v5878 = vunpack.c.l.b16 %v5825
    %v5879 = vpack.c.b16 %v5876, %v5876
    %v5880 = vpack.c.b16 %v5877, %v5877
    %v5881 = vpack.c.b16 %v5878, %v5878
    %v5933 = vunpack.c.l.b16 %v5826
    %v5934 = vunpack.c.l.b16 %v5827
    %v5935 = vunpack.c.l.b16 %v5828
    %v5936 = vunpack.c.l.b16 %v5829
    %v5937 = vunpack.c.l.b16 %v5830
    %v5938 = vunpack.c.l.b16 %v5831
    %v5939 = vunpack.c.l.b16 %v5832
    %v5940 = vunpack.c.l.b16 %v5833
    %v5941 = vunpack.c.l.b16 %v5834
    %v5942 = vunpack.c.l.b16 %v5835
    %v5943 = vunpack.c.l.b16 %v5836
    %v5944 = vunpack.c.l.b16 %v5837
    %v5945 = vunpack.c.l.b16 %v5838
    %v5946 = vunpack.c.l.b16 %v5839
    %v5947 = vunpack.c.l.b16 %v5840
    %v5948 = vunpack.c.l.b16 %v5841
    %v5949 = vunpack.c.l.b16 %v5842
    %v5950 = vunpack.c.l.b16 %v5843
    %v5951 = vunpack.c.l.b16 %v5844
    %v5952 = vunpack.c.l.b16 %v5845
    %v5953 = vunpack.c.l.b16 %v5846
    %v5954 = vunpack.c.l.b16 %v5847
    %v5955 = vunpack.c.l.b16 %v5848
    %v5956 = vunpack.c.l.b16 %v5849
    %v5957 = vunpack.c.l.b16 %v5850
    %v5958 = vunpack.c.l.b16 %v5851
    %v5959 = vunpack.c.l.b16 %v5852
    %v5960 = vunpack.c.l.b16 %v5853
    %v5961 = vunpack.c.l.b16 %v5854
    %v5962 = vunpack.c.l.b16 %v5855
    %v5963 = vunpack.c.l.b16 %v5856
    %v5964 = vunpack.c.l.b16 %v5857
    %v5965 = vunpack.c.l.b16 %v5858
    %v5966 = vunpack.c.l.b16 %v5859
    %v5967 = vunpack.c.l.b16 %v5860
    %v5968 = vunpack.c.l.b16 %v5861
    %v5969 = vunpack.c.l.b16 %v5862
    %v5970 = vunpack.c.l.b16 %v5863
    %v5971 = vunpack.c.l.b16 %v5864
    %v5972 = vunpack.c.l.b16 %v5865
    %v5973 = vunpack.c.l.b16 %v5866
    %v5974 = vunpack.c.l.b16 %v5867
    %v5975 = vunpack.c.l.b16 %v5868
    %v5976 = vunpack.c.l.b16 %v5869
    %v5977 = vunpack.c.l.b16 %v5870
    %v5978 = vunpack.c.l.b16 %v5871
    %v5979 = vunpack.c.l.b16 %v5872
    %v5980 = vunpack.c.l.b16 %v5873
    %v5981 = vpack.c.b16 %v5934, %v5933
    %v5982 = vpack.c.b16 %v5936, %v5935
    %v5983 = vpack.c.b16 %v5938, %v5937
    %v5984 = vpack.c.b16 %v5940, %v5939
    %v5985 = vpack.c.b16 %v5942, %v5941
    %v5986 = vpack.c.b16 %v5944, %v5943
    %v5987 = vpack.c.b16 %v5946, %v5945
    %v5988 = vpack.c.b16 %v5948, %v5947
    %v5989 = vpack.c.b16 %v5950, %v5949
    %v5990 = vpack.c.b16 %v5952, %v5951
    %v5991 = vpack.c.b16 %v5954, %v5953
    %v5992 = vpack.c.b16 %v5956, %v5955
    %v5993 = vpack.c.b16 %v5958, %v5957
    %v5994 = vpack.c.b16 %v5960, %v5959
    %v5995 = vpack.c.b16 %v5962, %v5961
    %v5996 = vpack.c.b16 %v5964, %v5963
    %v5997 = vpack.c.b16 %v5966, %v5965
    %v5998 = vpack.c.b16 %v5968, %v5967
    %v5999 = vpack.c.b16 %v5970, %v5969
    %v6000 = vpack.c.b16 %v5972, %v5971
    %v6001 = vpack.c.b16 %v5974, %v5973
    %v6002 = vpack.c.b16 %v5976, %v5975
    %v6003 = vpack.c.b16 %v5978, %v5977
    %v6004 = vpack.c.b16 %v5980, %v5979
    %6029 = vmatpush.bf16.msra.mxu0 %v5988
    %6030 = vmatpush.bf16.msra.mxu0 %v5987
    %6031 = vmatpush.bf16.msra.mxu0 %v5986
    %6032 = vmatpush.bf16.msra.mxu0 %v5985
    %6033 = vmatpush.bf16.msra.mxu0 %v5984
    %6034 = vmatpush.bf16.msra.mxu0 %v5983
    %6035 = vmatpush.bf16.msra.mxu0 %v5982
    %6036 = vmatpush.bf16.msra.mxu0 %v5981
    %6037 = vmatmul.bf16.gmra.mxu0 %v5879
    %v6038 = vpop.f32.mrf.mxu0
    %v6039 = vadd.f32 0.0, %v6038
    %v6040 = vpop.f32.mrf.mxu0
    %6041 = vdwg.mxu0
    %6042 = vmatpush.bf16.msra.mxu0 %v5996
    %6043 = vmatpush.bf16.msra.mxu0 %v5995
    %6044 = vmatpush.bf16.msra.mxu0 %v5994
    %6045 = vmatpush.bf16.msra.mxu0 %v5993
    %6046 = vmatpush.bf16.msra.mxu0 %v5992
    %6047 = vmatpush.bf16.msra.mxu0 %v5991
    %6048 = vmatpush.bf16.msra.mxu0 %v5990
    %6049 = vmatpush.bf16.msra.mxu0 %v5989
    %6050 = vmatmul.bf16.gmra.mxu0 %v5880
    %v6051 = vpop.f32.mrf.mxu0
    %v6052 = vadd.f32 %v6039, %v6051
    %v6053 = vpop.f32.mrf.mxu0
    %6054 = vdwg.mxu0
    %6055 = vmatpush.bf16.msra.mxu0 %v6004
    %6056 = vmatpush.bf16.msra.mxu0 %v6003
    %6057 = vmatpush.bf16.msra.mxu0 %v6002
    %6058 = vmatpush.bf16.msra.mxu0 %v6001
    %6059 = vmatpush.bf16.msra.mxu0 %v6000
    %6060 = vmatpush.bf16.msra.mxu0 %v5999
    %6061 = vmatpush.bf16.msra.mxu0 %v5998
    %6062 = vmatpush.bf16.msra.mxu0 %v5997
    %6063 = vmatmul.bf16.gmra.mxu0 %v5881
    %v6064 = vpop.f32.mrf.mxu0
    %v6065 = vadd.f32 %v6052, %v6064
    %v6066 = vpop.f32.mrf.mxu0
    %6067 = vdwg.mxu0
    %v6068 = vadd.f32 %v5823, %v6065
    %v6069 = vld [vmem:[#allocation4 + $0xc] sm:$0x22]
    %v6070 = vld [vmem:[#allocation4 + $0x14] sm:$0x2]
    %v6071 = vld [vmem:[#allocation13 + $0x3c0] sm:$0xf]
    %v6072 = vld [vmem:[#allocation13 + $0x3c4] sm:$0xf]
    %v6073 = vld [vmem:[#allocation13 + $0x3c8] sm:$0xf]
    %v6074 = vld [vmem:[#allocation13 + $0x3cc] sm:$0xf]
    %v6075 = vld [vmem:[#allocation13 + $0x3d0] sm:$0xf]
    %v6076 = vld [vmem:[#allocation13 + $0x3d4] sm:$0xf]
    %v6077 = vld [vmem:[#allocation13 + $0x3d8] sm:$0xf]
    %v6078 = vld [vmem:[#allocation13 + $0x3dc] sm:$0xf]
    %v6079 = vld [vmem:[#allocation13 + $0x3e0] sm:$0xf]
    %v6080 = vld [vmem:[#allocation13 + $0x3e4] sm:$0xf]
    %v6081 = vld [vmem:[#allocation13 + $0x3e8] sm:$0xf]
    %v6082 = vld [vmem:[#allocation13 + $0x3ec] sm:$0xf]
    %v6083 = vld [vmem:[#allocation13 + $0x3f0] sm:$0xf]
    %v6084 = vld [vmem:[#allocation13 + $0x3f4] sm:$0xf]
    %v6085 = vld [vmem:[#allocation13 + $0x3f8] sm:$0xf]
    %v6086 = vld [vmem:[#allocation13 + $0x3fc] sm:$0xf]
    %v6087 = vld [vmem:[#allocation13 + $0x400] sm:$0xf]
    %v6088 = vld [vmem:[#allocation13 + $0x404] sm:$0xf]
    %v6089 = vld [vmem:[#allocation13 + $0x408] sm:$0xf]
    %v6090 = vld [vmem:[#allocation13 + $0x40c] sm:$0xf]
    %v6091 = vld [vmem:[#allocation13 + $0x410] sm:$0xf]
    %v6092 = vld [vmem:[#allocation13 + $0x414] sm:$0xf]
    %v6093 = vld [vmem:[#allocation13 + $0x418] sm:$0xf]
    %v6094 = vld [vmem:[#allocation13 + $0x41c] sm:$0xf]
    %v6095 = vld [vmem:[#allocation13 + $0x420] sm:$0xf]
    %v6096 = vld [vmem:[#allocation13 + $0x424] sm:$0xf]
    %v6097 = vld [vmem:[#allocation13 + $0x428] sm:$0xf]
    %v6098 = vld [vmem:[#allocation13 + $0x42c] sm:$0xf]
    %v6099 = vld [vmem:[#allocation13 + $0x430] sm:$0xf]
    %v6100 = vld [vmem:[#allocation13 + $0x434] sm:$0xf]
    %v6101 = vld [vmem:[#allocation13 + $0x438] sm:$0xf]
    %v6102 = vld [vmem:[#allocation13 + $0x43c] sm:$0xf]
    %v6103 = vld [vmem:[#allocation13 + $0x440] sm:$0xf]
    %v6104 = vld [vmem:[#allocation13 + $0x444] sm:$0xf]
    %v6105 = vld [vmem:[#allocation13 + $0x448] sm:$0xf]
    %v6106 = vld [vmem:[#allocation13 + $0x44c] sm:$0xf]
    %v6107 = vld [vmem:[#allocation13 + $0x450] sm:$0xf]
    %v6108 = vld [vmem:[#allocation13 + $0x454] sm:$0xf]
    %v6109 = vld [vmem:[#allocation13 + $0x458] sm:$0xf]
    %v6110 = vld [vmem:[#allocation13 + $0x45c] sm:$0xf]
    %v6111 = vld [vmem:[#allocation13 + $0x460] sm:$0xf]
    %v6112 = vld [vmem:[#allocation13 + $0x464] sm:$0xf]
    %v6113 = vld [vmem:[#allocation13 + $0x468] sm:$0xf]
    %v6114 = vld [vmem:[#allocation13 + $0x46c] sm:$0xf]
    %v6115 = vld [vmem:[#allocation13 + $0x470] sm:$0xf]
    %v6116 = vld [vmem:[#allocation13 + $0x474] sm:$0xf]
    %v6117 = vld [vmem:[#allocation13 + $0x478] sm:$0xf]
    %v6118 = vld [vmem:[#allocation13 + $0x47c] sm:$0xf]
    %v6121 = vunpack.c.l.b16 %v6069
    %v6122 = vunpack.c.h.b16 %v6069
    %v6123 = vunpack.c.l.b16 %v6070
    %v6124 = vpack.c.b16 %v6121, %v6121
    %v6125 = vpack.c.b16 %v6122, %v6122
    %v6126 = vpack.c.b16 %v6123, %v6123
    %v6127 = vrot.slane %v6124, 1
    %v6128 = vrot.slane %v6125, 1
    %v6129 = vrot.slane %v6126, 1
    %v6181 = vunpack.c.l.b16 %v6071
    %v6182 = vunpack.c.l.b16 %v6072
    %v6183 = vunpack.c.l.b16 %v6073
    %v6184 = vunpack.c.l.b16 %v6074
    %v6185 = vunpack.c.l.b16 %v6075
    %v6186 = vunpack.c.l.b16 %v6076
    %v6187 = vunpack.c.l.b16 %v6077
    %v6188 = vunpack.c.l.b16 %v6078
    %v6189 = vunpack.c.l.b16 %v6079
    %v6190 = vunpack.c.l.b16 %v6080
    %v6191 = vunpack.c.l.b16 %v6081
    %v6192 = vunpack.c.l.b16 %v6082
    %v6193 = vunpack.c.l.b16 %v6083
    %v6194 = vunpack.c.l.b16 %v6084
    %v6195 = vunpack.c.l.b16 %v6085
    %v6196 = vunpack.c.l.b16 %v6086
    %v6197 = vunpack.c.l.b16 %v6087
    %v6198 = vunpack.c.l.b16 %v6088
    %v6199 = vunpack.c.l.b16 %v6089
    %v6200 = vunpack.c.l.b16 %v6090
    %v6201 = vunpack.c.l.b16 %v6091
    %v6202 = vunpack.c.l.b16 %v6092
    %v6203 = vunpack.c.l.b16 %v6093
    %v6204 = vunpack.c.l.b16 %v6094
    %v6205 = vunpack.c.l.b16 %v6095
    %v6206 = vunpack.c.l.b16 %v6096
    %v6207 = vunpack.c.l.b16 %v6097
    %v6208 = vunpack.c.l.b16 %v6098
    %v6209 = vunpack.c.l.b16 %v6099
    %v6210 = vunpack.c.l.b16 %v6100
    %v6211 = vunpack.c.l.b16 %v6101
    %v6212 = vunpack.c.l.b16 %v6102
    %v6213 = vunpack.c.l.b16 %v6103
    %v6214 = vunpack.c.l.b16 %v6104
    %v6215 = vunpack.c.l.b16 %v6105
    %v6216 = vunpack.c.l.b16 %v6106
    %v6217 = vunpack.c.l.b16 %v6107
    %v6218 = vunpack.c.l.b16 %v6108
    %v6219 = vunpack.c.l.b16 %v6109
    %v6220 = vunpack.c.l.b16 %v6110
    %v6221 = vunpack.c.l.b16 %v6111
    %v6222 = vunpack.c.l.b16 %v6112
    %v6223 = vunpack.c.l.b16 %v6113
    %v6224 = vunpack.c.l.b16 %v6114
    %v6225 = vunpack.c.l.b16 %v6115
    %v6226 = vunpack.c.l.b16 %v6116
    %v6227 = vunpack.c.l.b16 %v6117
    %v6228 = vunpack.c.l.b16 %v6118
    %v6229 = vpack.c.b16 %v6182, %v6181
    %v6230 = vpack.c.b16 %v6184, %v6183
    %v6231 = vpack.c.b16 %v6186, %v6185
    %v6232 = vpack.c.b16 %v6188, %v6187
    %v6233 = vpack.c.b16 %v6190, %v6189
    %v6234 = vpack.c.b16 %v6192, %v6191
    %v6235 = vpack.c.b16 %v6194, %v6193
    %v6236 = vpack.c.b16 %v6196, %v6195
    %v6237 = vpack.c.b16 %v6198, %v6197
    %v6238 = vpack.c.b16 %v6200, %v6199
    %v6239 = vpack.c.b16 %v6202, %v6201
    %v6240 = vpack.c.b16 %v6204, %v6203
    %v6241 = vpack.c.b16 %v6206, %v6205
    %v6242 = vpack.c.b16 %v6208, %v6207
    %v6243 = vpack.c.b16 %v6210, %v6209
    %v6244 = vpack.c.b16 %v6212, %v6211
    %v6245 = vpack.c.b16 %v6214, %v6213
    %v6246 = vpack.c.b16 %v6216, %v6215
    %v6247 = vpack.c.b16 %v6218, %v6217
    %v6248 = vpack.c.b16 %v6220, %v6219
    %v6249 = vpack.c.b16 %v6222, %v6221
    %v6250 = vpack.c.b16 %v6224, %v6223
    %v6251 = vpack.c.b16 %v6226, %v6225
    %v6252 = vpack.c.b16 %v6228, %v6227
    %6277 = vmatpush.bf16.msra.mxu0 %v6236
    %6278 = vmatpush.bf16.msra.mxu0 %v6235
    %6279 = vmatpush.bf16.msra.mxu0 %v6234
    %6280 = vmatpush.bf16.msra.mxu0 %v6233
    %6281 = vmatpush.bf16.msra.mxu0 %v6232
    %6282 = vmatpush.bf16.msra.mxu0 %v6231
    %6283 = vmatpush.bf16.msra.mxu0 %v6230
    %6284 = vmatpush.bf16.msra.mxu0 %v6229
    %6285 = vmatmul.bf16.gmra.mxu0 %v6127
    %v6286 = vpop.f32.mrf.mxu0
    %v6287 = vadd.f32 0.0, %v6286
    %v6288 = vpop.f32.mrf.mxu0
    %6289 = vdwg.mxu0
    %6290 = vmatpush.bf16.msra.mxu0 %v6244
    %6291 = vmatpush.bf16.msra.mxu0 %v6243
    %6292 = vmatpush.bf16.msra.mxu0 %v6242
    %6293 = vmatpush.bf16.msra.mxu0 %v6241
    %6294 = vmatpush.bf16.msra.mxu0 %v6240
    %6295 = vmatpush.bf16.msra.mxu0 %v6239
    %6296 = vmatpush.bf16.msra.mxu0 %v6238
    %6297 = vmatpush.bf16.msra.mxu0 %v6237
    %6298 = vmatmul.bf16.gmra.mxu0 %v6128
    %v6299 = vpop.f32.mrf.mxu0
    %v6300 = vadd.f32 %v6287, %v6299
    %v6301 = vpop.f32.mrf.mxu0
    %6302 = vdwg.mxu0
    %6303 = vmatpush.bf16.msra.mxu0 %v6252
    %6304 = vmatpush.bf16.msra.mxu0 %v6251
    %6305 = vmatpush.bf16.msra.mxu0 %v6250
    %6306 = vmatpush.bf16.msra.mxu0 %v6249
    %6307 = vmatpush.bf16.msra.mxu0 %v6248
    %6308 = vmatpush.bf16.msra.mxu0 %v6247
    %6309 = vmatpush.bf16.msra.mxu0 %v6246
    %6310 = vmatpush.bf16.msra.mxu0 %v6245
    %6311 = vmatmul.bf16.gmra.mxu0 %v6129
    %v6312 = vpop.f32.mrf.mxu0
    %v6313 = vadd.f32 %v6300, %v6312
    %v6314 = vpop.f32.mrf.mxu0
    %6315 = vdwg.mxu0
    %v6316 = vadd.f32 %v6068, %v6313
    %v6317 = vpack.c.bf16 %v6316, %v6316
    %v6318 = vld [vmem:[#allocation16] sm:$0xf]
    %v6319 = vld [vmem:[#allocation16 + $0x4] sm:$0xf]
    %v6320 = vld [vmem:[#allocation16 + $0x8] sm:$0xf]
    %v6321 = vld [vmem:[#allocation16 + $0xc] sm:$0xf]
    %v6322 = vld [vmem:[#allocation16 + $0x10] sm:$0xf]
    %v6323 = vld [vmem:[#allocation16 + $0x14] sm:$0xf]
    %v6324 = vld [vmem:[#allocation16 + $0x18] sm:$0xf]
    %v6325 = vld [vmem:[#allocation16 + $0x1c] sm:$0xf]
    %v6326 = vld [vmem:[#allocation16 + $0x20] sm:$0xf]
    %v6327 = vld [vmem:[#allocation16 + $0x24] sm:$0xf]
    %v6328 = vld [vmem:[#allocation16 + $0x28] sm:$0xf]
    %v6329 = vld [vmem:[#allocation16 + $0x2c] sm:$0xf]
    %v6330 = vld [vmem:[#allocation16 + $0x30] sm:$0xf]
    %v6331 = vld [vmem:[#allocation16 + $0x34] sm:$0xf]
    %v6332 = vld [vmem:[#allocation16 + $0x38] sm:$0xf]
    %v6333 = vld [vmem:[#allocation16 + $0x3c] sm:$0xf]
    %v6334 = vld [vmem:[#allocation17] sm:$0x1]
    %v6336 = vperm.slane %v6334, 0
    %v6354 = vunpack.c.l.b16 %v6318
    %v6355 = vunpack.c.l.b16 %v6319
    %v6356 = vunpack.c.l.b16 %v6320
    %v6357 = vunpack.c.l.b16 %v6321
    %v6358 = vunpack.c.l.b16 %v6322
    %v6359 = vunpack.c.l.b16 %v6323
    %v6360 = vunpack.c.l.b16 %v6324
    %v6361 = vunpack.c.l.b16 %v6325
    %v6362 = vunpack.c.l.b16 %v6326
    %v6363 = vunpack.c.l.b16 %v6327
    %v6364 = vunpack.c.l.b16 %v6328
    %v6365 = vunpack.c.l.b16 %v6329
    %v6366 = vunpack.c.l.b16 %v6330
    %v6367 = vunpack.c.l.b16 %v6331
    %v6368 = vunpack.c.l.b16 %v6332
    %v6369 = vunpack.c.l.b16 %v6333
    %v6370 = vpack.c.b16 %v6355, %v6354
    %v6371 = vpack.c.b16 %v6357, %v6356
    %v6372 = vpack.c.b16 %v6359, %v6358
    %v6373 = vpack.c.b16 %v6361, %v6360
    %v6374 = vpack.c.b16 %v6363, %v6362
    %v6375 = vpack.c.b16 %v6365, %v6364
    %v6376 = vpack.c.b16 %v6367, %v6366
    %v6377 = vpack.c.b16 %v6369, %v6368
    %6386 = vmatpush.bf16.msra.mxu0 %v6377
    %6387 = vmatpush.bf16.msra.mxu0 %v6376
    %6388 = vmatpush.bf16.msra.mxu0 %v6375
    %6389 = vmatpush.bf16.msra.mxu0 %v6374
    %6390 = vmatpush.bf16.msra.mxu0 %v6373
    %6391 = vmatpush.bf16.msra.mxu0 %v6372
    %6392 = vmatpush.bf16.msra.mxu0 %v6371
    %6393 = vmatpush.bf16.msra.mxu0 %v6370
    %6394 = vmatmul.bf16.gmra.mxu0 %v6317
    %v6395 = vpop.f32.mrf.mxu0
    %v6396 = vadd.f32 %v6336, %v6395
    %v6397 = vpop.f32.mrf.mxu0
    %6398 = vdwg.mxu0
    %6399 = vst [vmem:[#allocation19] sm:$0x3] %v6396
    // Predicated region
    $region70: #{mnist_classifier_forward.1} parent=1 // pred_check
      _
    $region71: #{mnist_classifier_forward.1} parent=1 // pred_check_branch
      %6401 = sbr.rel (0) target = $region73
    $region72: #{mnist_classifier_forward.1} parent=1 // pred_region
      %6403 = vsyncadd [#allocation7], 0
      %s6405 = sshll.u32 [#allocation19], 4
      %s6406 = int_to_ptr.vmem [resolvable:$true] %s6405
      %s6407 = sshll.u32 %s9, 4
      %s6408 = int_to_ptr.hbm [resolvable:$true] %s6407
      %6410 = dma.vmem_to_hbm [thread:$0]  %s6406, 32, %s6408, [#allocation7]
    $region73: #{mnist_classifier_forward.1} parent=1 // pred_fallthru
      _
    // Predicated region
    $region74: #{mnist_classifier_forward.1} parent=1 // pred_check
      _
    $region75: #{mnist_classifier_forward.1} parent=1 // pred_check_branch
      %6412 = sbr.rel (0) target = $region77
    $region76: #{mnist_classifier_forward.1} parent=1 // pred_region
      %6414 = dma.done [#allocation7], 32
    $region77: #{mnist_classifier_forward.1} parent=1 // pred_fallthru
      _
    %6415 = vsyncpa [#allocation6], 1
    %6416 = vsyncpa [#allocation9], 1
    %6417 = vsyncpa [#allocation12], 1
    %6418 = vsyncpa [#allocation15], 1
    %6419 = vsyncpa [#allocation18], 1
    %6420 = vsyncpa [#allocation7], 1

</llo_original>
